<compile_context>
chip_gen: v6e
topology: v6e:2x2x1
jax: 0.10.0
libtpu: 0.0.40
codegen_flags: <defaults>
</compile_context>

<pallas_src>
import functools

import jax
import jax.numpy as jnp
from jax.experimental import pallas as pl
from jax.experimental.pallas import tpu as pltpu


def _round_up(x, m):
    return (x + m - 1) // m * m


# ----------------------------------------------------------------------------- kernel


def _conv_mm_kernel(x_ref, w_ref, b_ref, o_ref, acc_ref, *, apply_sigmoid):
    """One (TM, TK) x (TK, Coutp) MXU step with K-accumulation + fused epilogue.

    x_ref: (TM, TK) bf16 patch tile  | w_ref: (TK, Coutp) bf16 weight tile
    b_ref: (1, Coutp) f32 bias row   | o_ref: (TM, Coutp) bf16/f32 output tile
    acc_ref: (TM, Coutp) f32 VMEM accumulator (persists across the K grid axis)
    """
    k = pl.program_id(1)

    @pl.when(k == 0)
    def _init():
        acc_ref[...] = jnp.zeros_like(acc_ref)

    acc_ref[...] += jnp.dot(x_ref[...], w_ref[...], preferred_element_type=jnp.float32)

    @pl.when(k == pl.num_programs(1) - 1)
    def _finalize():
        acc = acc_ref[...] + b_ref[...]
        acc = jnp.where(acc >= 0.0, acc, 0.2 * acc)        # LeakyReLU(negative_slope=0.2)
        if apply_sigmoid:
            acc = jax.nn.sigmoid(acc)                      # nn.Sigmoid() (last layer only)
        o_ref[...] = acc.astype(o_ref.dtype)


# ----------------------------------------------------------------------------- tiling


def _vmem_limits():
    """(vmem_limit_bytes, tiling_budget_bytes), generation aware.  Conservative fallback."""
    cap = None
    try:
        info = pltpu.get_tpu_info()
        cap = int(getattr(info, "vmem_capacity_bytes", 0)) or None
    except Exception:
        cap = None
    if cap is None or cap <= 64 * 1024 * 1024:
        # v7x-class (64 MiB / TensorCore) or unknown: stay well under the ceiling.
        return 48 * 1024 * 1024, 36 * 1024 * 1024
    # v5e / v6e: 128 MiB physical VMEM.
    return 112 * 1024 * 1024, 96 * 1024 * 1024


def _choose_tk(kp, coutp, cap_bytes):
    """Largest multiple-of-128 divisor of kp whose double-buffered weight tile fits cap."""
    n128 = kp // 128
    best = 1
    for d in range(1, n128 + 1):
        if n128 % d == 0 and 2 * (128 * d) * coutp * 2 <= cap_bytes:
            best = d
    return 128 * best


def _choose_tm(m, tk, coutp, out_bytes, budget):
    """Largest aligned M-tile whose working set fits the budget; keeps >=2 M-steps when big."""
    fixed = 2 * tk * coutp * 2 + 2 * 8 * coutp * 4            # weight (x2, bf16) + bias (x2, f32, 8-row pad)
    per_row = 2 * tk * 2 + 2 * coutp * out_bytes + coutp * 4  # x (x2, bf16) + out (x2) + f32 acc scratch
    avail = max(budget - fixed, per_row * 16)
    tm = avail // per_row
    tm = min(tm, 1024, _round_up(m, 16))
    if m >= 512:                                              # keep >=2 grid steps for megacore
        tm = min(tm, max(256, _round_up(pl.cdiv(m, 2), 16)))
    if tm >= 256:
        tm = (tm // 256) * 256                                # dense systolic passes on v6e/v7x
    elif tm >= 128:
        tm = 128
    else:
        tm = max(16, (tm // 16) * 16)                         # bf16 (16,128) tile rule
    return int(tm)


# ----------------------------------------------------------------------------- layer


def conv_lrelu_pallas(x_nhwc, w_oihw, b, *, stride, pad, apply_sigmoid=False):
    """One Conv2d(k=4, padding=1) + LeakyReLU(0.2) [+ Sigmoid]; matmul + epilogue in Pallas."""
    cout, cin, kh, kw = w_oihw.shape
    n, h, w_sp, _ = x_nhwc.shape
    ho = (h + 2 * pad - kh) // stride + 1
    wo = (w_sp + 2 * pad - kw) // stride + 1
    m = n * ho * wo
    out_dtype = jnp.float32 if apply_sigmoid else jnp.bfloat16
    out_bytes = jnp.dtype(out_dtype).itemsize

    # --- K alignment via cheap channel pad on the small pre-im2col activation (not the slab).
    cin_p = _round_up(cin, 8)                   # kh*kw = 16  =>  K = cin_p*16 is a multiple of 128
    x_b = x_nhwc.astype(jnp.bfloat16)
    if cin_p != cin:
        x_b = jnp.pad(x_b, ((0, 0), (0, 0), (0, 0), (0, cin_p - cin)))
    kp = cin_p * kh * kw

    # im2col as a single fused XLA op, in bf16.  Feature order is (c_in, kh, kw).
    # TODO(synk): fold this into the Pallas kernel with a halo'd pl.ANY + make_async_copy DMA.
    patches = jax.lax.conv_general_dilated_patches(
        x_b,
        filter_shape=(kh, kw),
        window_strides=(stride, stride),
        padding=((pad, pad), (pad, pad)),
        dimension_numbers=("NHWC", "HWIO", "NHWC"),
    ).reshape(m, kp)

    # OIHW -> pad cin -> (ci, kh, kw, co) -> (K, Cout) to match the patch feature flattening,
    # then pad Cout to a multiple of 128 for lane-dense output stores.
    coutp = _round_up(cout, 128)
    w_p = w_oihw.astype(jnp.bfloat16)
    if cin_p != cin:
        w_p = jnp.pad(w_p, ((0, 0), (0, cin_p - cin), (0, 0), (0, 0)))
    w_flat = jnp.transpose(w_p, (1, 2, 3, 0)).reshape(kp, cout)
    if coutp != cout:
        w_flat = jnp.pad(w_flat, ((0, 0), (0, coutp - cout)))
    b_row = b.reshape(1, cout).astype(jnp.float32)
    if coutp != cout:
        b_row = jnp.pad(b_row, ((0, 0), (0, coutp - cout)))

    if m < 16:
        # Tail layers (M = N*2*2 or N*1*1): a pallas_call is pure launch/DMA overhead here.
        acc = jnp.dot(patches, w_flat, preferred_element_type=jnp.float32) + b_row
        acc = jnp.where(acc >= 0.0, acc, 0.2 * acc)
        if apply_sigmoid:
            acc = jax.nn.sigmoid(acc)
        return acc[:, :cout].reshape(n, ho, wo, cout)

    vmem_limit, budget = _vmem_limits()
    tk = _choose_tk(kp, coutp, budget // 3)     # weight tile (x2 bufs) <= ~1/3 of the budget
    tm = _choose_tm(m, tk, coutp, out_bytes, budget)
    m_tiles = pl.cdiv(m, tm)
    k_tiles = kp // tk

    cost = pl.CostEstimate(
        flops=2 * m * kp * coutp,
        transcendentals=(m * coutp) if apply_sigmoid else 0,
        bytes_accessed=(2 * m * kp                                        # patch slab read
                        + 2 * kp * coutp * (m_tiles if k_tiles > 1 else 1)  # weight (re)stream
                        + 4 * coutp                                        # bias
                        + out_bytes * m * coutp),                          # output writeback
    )

    out = pl.pallas_call(
        functools.partial(_conv_mm_kernel, apply_sigmoid=apply_sigmoid),
        out_shape=jax.ShapeDtypeStruct((m, coutp), out_dtype),
        grid=(m_tiles, k_tiles),
        in_specs=[
            pl.BlockSpec((tm, tk), lambda i, k: (i, k)),      # patch tile, streamed over M and K
            pl.BlockSpec((tk, coutp), lambda i, k: (k, 0)),   # weight tile (resident if k_tiles==1)
            pl.BlockSpec((1, coutp), lambda i, k: (0, 0)),    # bias row, resident
        ],
        out_specs=pl.BlockSpec((tm, coutp), lambda i, k: (i, 0)),
        scratch_shapes=[pltpu.VMEM((tm, coutp), jnp.float32)],
        compiler_params=pltpu.CompilerParams(
            dimension_semantics=("parallel", "arbitrary"),    # M across TCs; K is the reduction
            vmem_limit_bytes=vmem_limit,
        ),
        cost_estimate=cost,
    )(patches, w_flat, b_row)

    if coutp != cout:
        out = out[:, :cout]
    return out.reshape(n, ho, wo, cout)


# ----------------------------------------------------------------------------- model


def init_params(key, num_classes, ndf):
    """Deterministic init, same shapes as the PyTorch module (Kaiming-uniform-like)."""
    chans = [num_classes * 3, ndf, ndf * 2, ndf * 4, ndf * 8, ndf * 16, 1]
    params = []
    for i in range(6):
        cin, cout = chans[i], chans[i + 1]
        key, kw, kb = jax.random.split(key, 3)
        bound = 1.0 / float(cin * 4 * 4) ** 0.5
        w = jax.random.uniform(kw, (cout, cin, 4, 4), jnp.float32, -bound, bound)
        bb = jax.random.uniform(kb, (cout,), jnp.float32, -bound, bound)
        params.append((w, bb))
    return params


def discriminator2_patchs_forward(x_nchw, params):
    """Matches Discriminator2_patchs.forward; input/output in NCHW."""
    x = jnp.transpose(x_nchw, (0, 2, 3, 1))                # NCHW -> NHWC
    strides = (1, 2, 2, 2, 2, 1)                           # conv1..conv6
    for i, ((w, b), s) in enumerate(zip(params, strides)):
        x = conv_lrelu_pallas(x, w, b, stride=s, pad=1, apply_sigmoid=(i == 5))
    return jnp.transpose(x, (0, 3, 1, 2))                  # NHWC -> NCHW


def _reference_forward(x_nchw, params):
    """Plain XLA reference (f32 conv) for a sanity check."""
    x = x_nchw
    strides = (1, 2, 2, 2, 2, 1)
    for i, ((w, b), s) in enumerate(zip(params, strides)):
        x = jax.lax.conv_general_dilated(
            x, w, window_strides=(s, s), padding=((1, 1), (1, 1)),
            dimension_numbers=("NCHW", "OIHW", "NCHW"))
        x = x + b[None, :, None, None]
        x = jnp.where(x >= 0.0, x, 0.2 * x)
        if i == 5:
            x = jax.nn.sigmoid(x)
    return x


if __name__ == "__main__":
    num_classes = 2          # -> 6 input channels (num_classes * 3)
    ndf = 8                  # scaled-down ndf for a small synthetic run
    batch, h, w = 2, 33, 33  # 33 -> 32 -> 16 -> 8 -> 4 -> 2 -> 1 through the conv stack

    key = jax.random.PRNGKey(0)
    key, kx = jax.random.split(key)
    x = jax.random.normal(kx, (batch, num_classes * 3, h, w), dtype=jnp.float32)

    params = init_params(jax.random.PRNGKey(1), num_classes, ndf)

    out = jax.jit(discriminator2_patchs_forward)(x, params)
    out = jax.block_until_ready(out)
    assert out.shape == (batch, 1, 1, 1), out.shape
    assert bool(jnp.all((out > 0.0) & (out < 1.0)))        # sigmoid range sanity check

    # Loose-tolerance check vs an f32 XLA reference (bf16 operands in the Pallas path —
    # this is a deliberate numerics contract, fine for a GAN discriminator).
    ref = jax.block_until_ready(_reference_forward(x, params))
    assert bool(jnp.allclose(out.astype(jnp.float32), ref, atol=5e-2)), (out, ref)

    print("KERNEL_OK")
</pallas_src>

<mosaic_0001>
module attributes {stable_mosaic.version = 11 : i64} {
  func.func @_conv_mm_kernel(%arg0: i32, %arg1: i32, %arg2: memref<1024x128xbf16, #tpu.memory_space<vmem>>, %arg3: memref<128x128xbf16, #tpu.memory_space<vmem>>, %arg4: memref<1x128xf32, #tpu.memory_space<vmem>>, %arg5: memref<1024x128xbf16, #tpu.memory_space<vmem>>, %arg6: memref<1024x128xf32, #tpu.memory_space<vmem>>) attributes {dimension_semantics = [#tpu.dimension_semantics<parallel>, #tpu.dimension_semantics<arbitrary>], iteration_bounds = array<i64: 2, 1>, scalar_prefetch = 0 : i64, scratch_operands = 1 : i64, tpu.core_type = #tpu.core_type<tc>, window_params = [{transform_indices = @transform_0, window_bounds = array<i64: 1024, 128>}, {transform_indices = @transform_1, window_bounds = array<i64: 128, 128>}, {pipeline_mode = #tpu.pipeline_mode<synchronous>, transform_indices = @transform_2, window_bounds = array<i64: 1, 128>}, {transform_indices = @transform_3, window_bounds = array<i64: 1024, 128>}]} {
    %c0_i32 = arith.constant 0 : i32
    %0 = arith.cmpi eq, %arg1, %c0_i32 : i32
    %1 = arith.extui %0 : i1 to i32
    %c0_i32_0 = arith.constant 0 : i32
    %2 = arith.cmpi ne, %1, %c0_i32_0 : i32
    scf.if %2 {
      %cst_10 = arith.constant 0.000000e+00 : f32
      %12 = vector.broadcast %cst_10 : f32 to vector<1024x128xf32>
      %c0_11 = arith.constant 0 : index
      %c0_12 = arith.constant 0 : index
      %13 = vector.load %arg6[%c0_11, %c0_12] : memref<1024x128xf32, #tpu.memory_space<vmem>>, vector<1024x128xf32>
      tpu.vector_store %arg6[%c0_11, %c0_12], %12 {strides = array<i32>} : memref<1024x128xf32, #tpu.memory_space<vmem>>, vector<1024x128xf32>,
    } else {
    }
    %c0 = arith.constant 0 : index
    %c0_1 = arith.constant 0 : index
    %3 = vector.load %arg6[%c0, %c0_1] : memref<1024x128xf32, #tpu.memory_space<vmem>>, vector<1024x128xf32>
    %c0_2 = arith.constant 0 : index
    %c0_3 = arith.constant 0 : index
    %4 = vector.load %arg2[%c0_2, %c0_3] : memref<1024x128xbf16, #tpu.memory_space<vmem>>, vector<1024x128xbf16>
    %c0_4 = arith.constant 0 : index
    %c0_5 = arith.constant 0 : index
    %5 = vector.load %arg3[%c0_4, %c0_5] : memref<128x128xbf16, #tpu.memory_space<vmem>>, vector<128x128xbf16>
    %cst = arith.constant dense<0.000000e+00> : vector<1024x128xf32>
    %6 = tpu.matmul %4, %5, %cst {dimension_numbers = #tpu.dot_dimension_numbers<[1], [0], [0], [1], [0, 0, 1, 1], [], []>} : vector<1024x128xbf16>, vector<128x128xbf16>, vector<1024x128xf32> -> vector<1024x128xf32>
    %7 = arith.addf %3, %6 : vector<1024x128xf32>
    %c0_6 = arith.constant 0 : index
    %c0_7 = arith.constant 0 : index
    %8 = vector.load %arg6[%c0_6, %c0_7] : memref<1024x128xf32, #tpu.memory_space<vmem>>, vector<1024x128xf32>
    tpu.vector_store %arg6[%c0_6, %c0_7], %7 {strides = array<i32>} : memref<1024x128xf32, #tpu.memory_space<vmem>>, vector<1024x128xf32>,
    %c0_i32_8 = arith.constant 0 : i32
    %9 = arith.cmpi eq, %arg1, %c0_i32_8 : i32
    %10 = arith.extui %9 : i1 to i32
    %c0_i32_9 = arith.constant 0 : i32
    %11 = arith.cmpi ne, %10, %c0_i32_9 : i32
    scf.if %11 {
      %c0_10 = arith.constant 0 : index
      %c0_11 = arith.constant 0 : index
      %12 = vector.load %arg6[%c0_10, %c0_11] : memref<1024x128xf32, #tpu.memory_space<vmem>>, vector<1024x128xf32>
      %c0_12 = arith.constant 0 : index
      %c0_13 = arith.constant 0 : index
      %13 = vector.load %arg4[%c0_12, %c0_13] : memref<1x128xf32, #tpu.memory_space<vmem>>, vector<1x128xf32>
      %14 = vector.broadcast %13 : vector<1x128xf32> to vector<1024x128xf32>
      %15 = arith.addf %12, %14 : vector<1024x128xf32>
      %cst_14 = arith.constant 0.000000e+00 : f32
      %16 = vector.broadcast %cst_14 : f32 to vector<1024x128xf32>
      %17 = arith.cmpf oge, %15, %16 : vector<1024x128xf32>
      %cst_15 = arith.constant 2.000000e-01 : f32
      %18 = vector.broadcast %cst_15 : f32 to vector<1024x128xf32>
      %19 = arith.mulf %18, %15 : vector<1024x128xf32>
      %20 = arith.select %17, %15, %19 : vector<1024x128xi1>, vector<1024x128xf32>
      %21 = arith.truncf %20 : vector<1024x128xf32> to vector<1024x128xbf16>
      %c0_16 = arith.constant 0 : index
      %c0_17 = arith.constant 0 : index
      %22 = vector.load %arg5[%c0_16, %c0_17] : memref<1024x128xbf16, #tpu.memory_space<vmem>>, vector<1024x128xbf16>
      tpu.vector_store %arg5[%c0_16, %c0_17], %21 {strides = array<i32>} : memref<1024x128xbf16, #tpu.memory_space<vmem>>, vector<1024x128xbf16>,
    } else {
    }
    return
  }
  func.func @transform_0(%arg0: i32, %arg1: i32) -> (i32, i32) {
    %c0_i32 = arith.constant 0 : i32
    return %arg0, %arg1 : i32, i32
  }
  func.func @transform_1(%arg0: i32, %arg1: i32) -> (i32, i32) {
    %c0_i32 = arith.constant 0 : i32
    %c0_i32_0 = arith.constant 0 : i32
    return %arg1, %c0_i32 : i32, i32
  }
  func.func @transform_2(%arg0: i32, %arg1: i32) -> (i32, i32) {
    %c0_i32 = arith.constant 0 : i32
    %c0_i32_0 = arith.constant 0 : i32
    %c0_i32_1 = arith.constant 0 : i32
    return %c0_i32, %c0_i32_0 : i32, i32
  }
  func.func @transform_3(%arg0: i32, %arg1: i32) -> (i32, i32) {
    %c0_i32 = arith.constant 0 : i32
    %c0_i32_0 = arith.constant 0 : i32
    return %arg0, %c0_i32 : i32, i32
  }
}

module attributes {stable_mosaic.version = 11 : i64} {
  func.func @_conv_mm_kernel(%arg0: i32, %arg1: i32, %arg2: memref<256x128xbf16, #tpu.memory_space<vmem>>, %arg3: memref<128x128xbf16, #tpu.memory_space<vmem>>, %arg4: memref<1x128xf32, #tpu.memory_space<vmem>>, %arg5: memref<256x128xbf16, #tpu.memory_space<vmem>>, %arg6: memref<256x128xf32, #tpu.memory_space<vmem>>) attributes {dimension_semantics = [#tpu.dimension_semantics<parallel>, #tpu.dimension_semantics<arbitrary>], iteration_bounds = array<i64: 2, 1>, scalar_prefetch = 0 : i64, scratch_operands = 1 : i64, tpu.core_type = #tpu.core_type<tc>, window_params = [{transform_indices = @transform_0, window_bounds = array<i64: 256, 128>}, {transform_indices = @transform_1, window_bounds = array<i64: 128, 128>}, {pipeline_mode = #tpu.pipeline_mode<synchronous>, transform_indices = @transform_2, window_bounds = array<i64: 1, 128>}, {transform_indices = @transform_3, window_bounds = array<i64: 256, 128>}]} {
    %c0_i32 = arith.constant 0 : i32
    %0 = arith.cmpi eq, %arg1, %c0_i32 : i32
    %1 = arith.extui %0 : i1 to i32
    %c0_i32_0 = arith.constant 0 : i32
    %2 = arith.cmpi ne, %1, %c0_i32_0 : i32
    scf.if %2 {
      %cst_10 = arith.constant 0.000000e+00 : f32
      %12 = vector.broadcast %cst_10 : f32 to vector<256x128xf32>
      %c0_11 = arith.constant 0 : index
      %c0_12 = arith.constant 0 : index
      %13 = vector.load %arg6[%c0_11, %c0_12] : memref<256x128xf32, #tpu.memory_space<vmem>>, vector<256x128xf32>
      tpu.vector_store %arg6[%c0_11, %c0_12], %12 {strides = array<i32>} : memref<256x128xf32, #tpu.memory_space<vmem>>, vector<256x128xf32>,
    } else {
    }
    %c0 = arith.constant 0 : index
    %c0_1 = arith.constant 0 : index
    %3 = vector.load %arg6[%c0, %c0_1] : memref<256x128xf32, #tpu.memory_space<vmem>>, vector<256x128xf32>
    %c0_2 = arith.constant 0 : index
    %c0_3 = arith.constant 0 : index
    %4 = vector.load %arg2[%c0_2, %c0_3] : memref<256x128xbf16, #tpu.memory_space<vmem>>, vector<256x128xbf16>
    %c0_4 = arith.constant 0 : index
    %c0_5 = arith.constant 0 : index
    %5 = vector.load %arg3[%c0_4, %c0_5] : memref<128x128xbf16, #tpu.memory_space<vmem>>, vector<128x128xbf16>
    %cst = arith.constant dense<0.000000e+00> : vector<256x128xf32>
    %6 = tpu.matmul %4, %5, %cst {dimension_numbers = #tpu.dot_dimension_numbers<[1], [0], [0], [1], [0, 0, 1, 1], [], []>} : vector<256x128xbf16>, vector<128x128xbf16>, vector<256x128xf32> -> vector<256x128xf32>
    %7 = arith.addf %3, %6 : vector<256x128xf32>
    %c0_6 = arith.constant 0 : index
    %c0_7 = arith.constant 0 : index
    %8 = vector.load %arg6[%c0_6, %c0_7] : memref<256x128xf32, #tpu.memory_space<vmem>>, vector<256x128xf32>
    tpu.vector_store %arg6[%c0_6, %c0_7], %7 {strides = array<i32>} : memref<256x128xf32, #tpu.memory_space<vmem>>, vector<256x128xf32>,
    %c0_i32_8 = arith.constant 0 : i32
    %9 = arith.cmpi eq, %arg1, %c0_i32_8 : i32
    %10 = arith.extui %9 : i1 to i32
    %c0_i32_9 = arith.constant 0 : i32
    %11 = arith.cmpi ne, %10, %c0_i32_9 : i32
    scf.if %11 {
      %c0_10 = arith.constant 0 : index
      %c0_11 = arith.constant 0 : index
      %12 = vector.load %arg6[%c0_10, %c0_11] : memref<256x128xf32, #tpu.memory_space<vmem>>, vector<256x128xf32>
      %c0_12 = arith.constant 0 : index
      %c0_13 = arith.constant 0 : index
      %13 = vector.load %arg4[%c0_12, %c0_13] : memref<1x128xf32, #tpu.memory_space<vmem>>, vector<1x128xf32>
      %14 = vector.broadcast %13 : vector<1x128xf32> to vector<256x128xf32>
      %15 = arith.addf %12, %14 : vector<256x128xf32>
      %cst_14 = arith.constant 0.000000e+00 : f32
      %16 = vector.broadcast %cst_14 : f32 to vector<256x128xf32>
      %17 = arith.cmpf oge, %15, %16 : vector<256x128xf32>
      %cst_15 = arith.constant 2.000000e-01 : f32
      %18 = vector.broadcast %cst_15 : f32 to vector<256x128xf32>
      %19 = arith.mulf %18, %15 : vector<256x128xf32>
      %20 = arith.select %17, %15, %19 : vector<256x128xi1>, vector<256x128xf32>
      %21 = arith.truncf %20 : vector<256x128xf32> to vector<256x128xbf16>
      %c0_16 = arith.constant 0 : index
      %c0_17 = arith.constant 0 : index
      %22 = vector.load %arg5[%c0_16, %c0_17] : memref<256x128xbf16, #tpu.memory_space<vmem>>, vector<256x128xbf16>
      tpu.vector_store %arg5[%c0_16, %c0_17], %21 {strides = array<i32>} : memref<256x128xbf16, #tpu.memory_space<vmem>>, vector<256x128xbf16>,
    } else {
    }
    return
  }
  func.func @transform_0(%arg0: i32, %arg1: i32) -> (i32, i32) {
    %c0_i32 = arith.constant 0 : i32
    return %arg0, %arg1 : i32, i32
  }
  func.func @transform_1(%arg0: i32, %arg1: i32) -> (i32, i32) {
    %c0_i32 = arith.constant 0 : i32
    %c0_i32_0 = arith.constant 0 : i32
    return %arg1, %c0_i32 : i32, i32
  }
  func.func @transform_2(%arg0: i32, %arg1: i32) -> (i32, i32) {
    %c0_i32 = arith.constant 0 : i32
    %c0_i32_0 = arith.constant 0 : i32
    %c0_i32_1 = arith.constant 0 : i32
    return %c0_i32, %c0_i32_0 : i32, i32
  }
  func.func @transform_3(%arg0: i32, %arg1: i32) -> (i32, i32) {
    %c0_i32 = arith.constant 0 : i32
    %c0_i32_0 = arith.constant 0 : i32
    return %arg0, %c0_i32 : i32, i32
  }
}

module attributes {stable_mosaic.version = 11 : i64} {
  func.func @_conv_mm_kernel(%arg0: i32, %arg1: i32, %arg2: memref<128x256xbf16, #tpu.memory_space<vmem>>, %arg3: memref<256x128xbf16, #tpu.memory_space<vmem>>, %arg4: memref<1x128xf32, #tpu.memory_space<vmem>>, %arg5: memref<128x128xbf16, #tpu.memory_space<vmem>>, %arg6: memref<128x128xf32, #tpu.memory_space<vmem>>) attributes {dimension_semantics = [#tpu.dimension_semantics<parallel>, #tpu.dimension_semantics<arbitrary>], iteration_bounds = array<i64: 1, 1>, scalar_prefetch = 0 : i64, scratch_operands = 1 : i64, tpu.core_type = #tpu.core_type<tc>, window_params = [{transform_indices = @transform_0, window_bounds = array<i64: 128, 256>}, {transform_indices = @transform_1, window_bounds = array<i64: 256, 128>}, {pipeline_mode = #tpu.pipeline_mode<synchronous>, transform_indices = @transform_2, window_bounds = array<i64: 1, 128>}, {transform_indices = @transform_3, window_bounds = array<i64: 128, 128>}]} {
    %c0_i32 = arith.constant 0 : i32
    %0 = arith.cmpi eq, %arg1, %c0_i32 : i32
    %1 = arith.extui %0 : i1 to i32
    %c0_i32_0 = arith.constant 0 : i32
    %2 = arith.cmpi ne, %1, %c0_i32_0 : i32
    scf.if %2 {
      %cst_10 = arith.constant 0.000000e+00 : f32
      %12 = vector.broadcast %cst_10 : f32 to vector<128x128xf32>
      %c0_11 = arith.constant 0 : index
      %c0_12 = arith.constant 0 : index
      %13 = vector.load %arg6[%c0_11, %c0_12] : memref<128x128xf32, #tpu.memory_space<vmem>>, vector<128x128xf32>
      tpu.vector_store %arg6[%c0_11, %c0_12], %12 {strides = array<i32>} : memref<128x128xf32, #tpu.memory_space<vmem>>, vector<128x128xf32>,
    } else {
    }
    %c0 = arith.constant 0 : index
    %c0_1 = arith.constant 0 : index
    %3 = vector.load %arg6[%c0, %c0_1] : memref<128x128xf32, #tpu.memory_space<vmem>>, vector<128x128xf32>
    %c0_2 = arith.constant 0 : index
    %c0_3 = arith.constant 0 : index
    %4 = vector.load %arg2[%c0_2, %c0_3] : memref<128x256xbf16, #tpu.memory_space<vmem>>, vector<128x256xbf16>
    %c0_4 = arith.constant 0 : index
    %c0_5 = arith.constant 0 : index
    %5 = vector.load %arg3[%c0_4, %c0_5] : memref<256x128xbf16, #tpu.memory_space<vmem>>, vector<256x128xbf16>
    %cst = arith.constant dense<0.000000e+00> : vector<128x128xf32>
    %6 = tpu.matmul %4, %5, %cst {dimension_numbers = #tpu.dot_dimension_numbers<[1], [0], [0], [1], [0, 0, 1, 1], [], []>} : vector<128x256xbf16>, vector<256x128xbf16>, vector<128x128xf32> -> vector<128x128xf32>
    %7 = arith.addf %3, %6 : vector<128x128xf32>
    %c0_6 = arith.constant 0 : index
    %c0_7 = arith.constant 0 : index
    %8 = vector.load %arg6[%c0_6, %c0_7] : memref<128x128xf32, #tpu.memory_space<vmem>>, vector<128x128xf32>
    tpu.vector_store %arg6[%c0_6, %c0_7], %7 {strides = array<i32>} : memref<128x128xf32, #tpu.memory_space<vmem>>, vector<128x128xf32>,
    %c0_i32_8 = arith.constant 0 : i32
    %9 = arith.cmpi eq, %arg1, %c0_i32_8 : i32
    %10 = arith.extui %9 : i1 to i32
    %c0_i32_9 = arith.constant 0 : i32
    %11 = arith.cmpi ne, %10, %c0_i32_9 : i32
    scf.if %11 {
      %c0_10 = arith.constant 0 : index
      %c0_11 = arith.constant 0 : index
      %12 = vector.load %arg6[%c0_10, %c0_11] : memref<128x128xf32, #tpu.memory_space<vmem>>, vector<128x128xf32>
      %c0_12 = arith.constant 0 : index
      %c0_13 = arith.constant 0 : index
      %13 = vector.load %arg4[%c0_12, %c0_13] : memref<1x128xf32, #tpu.memory_space<vmem>>, vector<1x128xf32>
      %14 = vector.broadcast %13 : vector<1x128xf32> to vector<128x128xf32>
      %15 = arith.addf %12, %14 : vector<128x128xf32>
      %cst_14 = arith.constant 0.000000e+00 : f32
      %16 = vector.broadcast %cst_14 : f32 to vector<128x128xf32>
      %17 = arith.cmpf oge, %15, %16 : vector<128x128xf32>
      %cst_15 = arith.constant 2.000000e-01 : f32
      %18 = vector.broadcast %cst_15 : f32 to vector<128x128xf32>
      %19 = arith.mulf %18, %15 : vector<128x128xf32>
      %20 = arith.select %17, %15, %19 : vector<128x128xi1>, vector<128x128xf32>
      %21 = arith.truncf %20 : vector<128x128xf32> to vector<128x128xbf16>
      %c0_16 = arith.constant 0 : index
      %c0_17 = arith.constant 0 : index
      %22 = vector.load %arg5[%c0_16, %c0_17] : memref<128x128xbf16, #tpu.memory_space<vmem>>, vector<128x128xbf16>
      tpu.vector_store %arg5[%c0_16, %c0_17], %21 {strides = array<i32>} : memref<128x128xbf16, #tpu.memory_space<vmem>>, vector<128x128xbf16>,
    } else {
    }
    return
  }
  func.func @transform_0(%arg0: i32, %arg1: i32) -> (i32, i32) {
    %c0_i32 = arith.constant 0 : i32
    return %arg0, %arg1 : i32, i32
  }
  func.func @transform_1(%arg0: i32, %arg1: i32) -> (i32, i32) {
    %c0_i32 = arith.constant 0 : i32
    %c0_i32_0 = arith.constant 0 : i32
    return %arg1, %c0_i32 : i32, i32
  }
  func.func @transform_2(%arg0: i32, %arg1: i32) -> (i32, i32) {
    %c0_i32 = arith.constant 0 : i32
    %c0_i32_0 = arith.constant 0 : i32
    %c0_i32_1 = arith.constant 0 : i32
    return %c0_i32, %c0_i32_0 : i32, i32
  }
  func.func @transform_3(%arg0: i32, %arg1: i32) -> (i32, i32) {
    %c0_i32 = arith.constant 0 : i32
    %c0_i32_0 = arith.constant 0 : i32
    return %arg0, %c0_i32 : i32, i32
  }
}

module attributes {stable_mosaic.version = 11 : i64} {
  func.func @_conv_mm_kernel(%arg0: i32, %arg1: i32, %arg2: memref<32x512xbf16, #tpu.memory_space<vmem>>, %arg3: memref<512x128xbf16, #tpu.memory_space<vmem>>, %arg4: memref<1x128xf32, #tpu.memory_space<vmem>>, %arg5: memref<32x128xbf16, #tpu.memory_space<vmem>>, %arg6: memref<32x128xf32, #tpu.memory_space<vmem>>) attributes {dimension_semantics = [#tpu.dimension_semantics<parallel>, #tpu.dimension_semantics<arbitrary>], iteration_bounds = array<i64: 1, 1>, scalar_prefetch = 0 : i64, scratch_operands = 1 : i64, tpu.core_type = #tpu.core_type<tc>, window_params = [{transform_indices = @transform_0, window_bounds = array<i64: 32, 512>}, {transform_indices = @transform_1, window_bounds = array<i64: 512, 128>}, {pipeline_mode = #tpu.pipeline_mode<synchronous>, transform_indices = @transform_2, window_bounds = array<i64: 1, 128>}, {transform_indices = @transform_3, window_bounds = array<i64: 32, 128>}]} {
    %c0_i32 = arith.constant 0 : i32
    %0 = arith.cmpi eq, %arg1, %c0_i32 : i32
    %1 = arith.extui %0 : i1 to i32
    %c0_i32_0 = arith.constant 0 : i32
    %2 = arith.cmpi ne, %1, %c0_i32_0 : i32
    scf.if %2 {
      %cst_10 = arith.constant 0.000000e+00 : f32
      %12 = vector.broadcast %cst_10 : f32 to vector<32x128xf32>
      %c0_11 = arith.constant 0 : index
      %c0_12 = arith.constant 0 : index
      %13 = vector.load %arg6[%c0_11, %c0_12] : memref<32x128xf32, #tpu.memory_space<vmem>>, vector<32x128xf32>
      tpu.vector_store %arg6[%c0_11, %c0_12], %12 {strides = array<i32>} : memref<32x128xf32, #tpu.memory_space<vmem>>, vector<32x128xf32>,
    } else {
    }
    %c0 = arith.constant 0 : index
    %c0_1 = arith.constant 0 : index
    %3 = vector.load %arg6[%c0, %c0_1] : memref<32x128xf32, #tpu.memory_space<vmem>>, vector<32x128xf32>
    %c0_2 = arith.constant 0 : index
    %c0_3 = arith.constant 0 : index
    %4 = vector.load %arg2[%c0_2, %c0_3] : memref<32x512xbf16, #tpu.memory_space<vmem>>, vector<32x512xbf16>
    %c0_4 = arith.constant 0 : index
    %c0_5 = arith.constant 0 : index
    %5 = vector.load %arg3[%c0_4, %c0_5] : memref<512x128xbf16, #tpu.memory_space<vmem>>, vector<512x128xbf16>
    %cst = arith.constant dense<0.000000e+00> : vector<32x128xf32>
    %6 = tpu.matmul %4, %5, %cst {dimension_numbers = #tpu.dot_dimension_numbers<[1], [0], [0], [1], [0, 0, 1, 1], [], []>} : vector<32x512xbf16>, vector<512x128xbf16>, vector<32x128xf32> -> vector<32x128xf32>
    %7 = arith.addf %3, %6 : vector<32x128xf32>
    %c0_6 = arith.constant 0 : index
    %c0_7 = arith.constant 0 : index
    %8 = vector.load %arg6[%c0_6, %c0_7] : memref<32x128xf32, #tpu.memory_space<vmem>>, vector<32x128xf32>
    tpu.vector_store %arg6[%c0_6, %c0_7], %7 {strides = array<i32>} : memref<32x128xf32, #tpu.memory_space<vmem>>, vector<32x128xf32>,
    %c0_i32_8 = arith.constant 0 : i32
    %9 = arith.cmpi eq, %arg1, %c0_i32_8 : i32
    %10 = arith.extui %9 : i1 to i32
    %c0_i32_9 = arith.constant 0 : i32
    %11 = arith.cmpi ne, %10, %c0_i32_9 : i32
    scf.if %11 {
      %c0_10 = arith.constant 0 : index
      %c0_11 = arith.constant 0 : index
      %12 = vector.load %arg6[%c0_10, %c0_11] : memref<32x128xf32, #tpu.memory_space<vmem>>, vector<32x128xf32>
      %c0_12 = arith.constant 0 : index
      %c0_13 = arith.constant 0 : index
      %13 = vector.load %arg4[%c0_12, %c0_13] : memref<1x128xf32, #tpu.memory_space<vmem>>, vector<1x128xf32>
      %14 = vector.broadcast %13 : vector<1x128xf32> to vector<32x128xf32>
      %15 = arith.addf %12, %14 : vector<32x128xf32>
      %cst_14 = arith.constant 0.000000e+00 : f32
      %16 = vector.broadcast %cst_14 : f32 to vector<32x128xf32>
      %17 = arith.cmpf oge, %15, %16 : vector<32x128xf32>
      %cst_15 = arith.constant 2.000000e-01 : f32
      %18 = vector.broadcast %cst_15 : f32 to vector<32x128xf32>
      %19 = arith.mulf %18, %15 : vector<32x128xf32>
      %20 = arith.select %17, %15, %19 : vector<32x128xi1>, vector<32x128xf32>
      %21 = arith.truncf %20 : vector<32x128xf32> to vector<32x128xbf16>
      %c0_16 = arith.constant 0 : index
      %c0_17 = arith.constant 0 : index
      %22 = vector.load %arg5[%c0_16, %c0_17] : memref<32x128xbf16, #tpu.memory_space<vmem>>, vector<32x128xbf16>
      tpu.vector_store %arg5[%c0_16, %c0_17], %21 {strides = array<i32>} : memref<32x128xbf16, #tpu.memory_space<vmem>>, vector<32x128xbf16>,
    } else {
    }
    return
  }
  func.func @transform_0(%arg0: i32, %arg1: i32) -> (i32, i32) {
    %c0_i32 = arith.constant 0 : i32
    return %arg0, %arg1 : i32, i32
  }
  func.func @transform_1(%arg0: i32, %arg1: i32) -> (i32, i32) {
    %c0_i32 = arith.constant 0 : i32
    %c0_i32_0 = arith.constant 0 : i32
    return %arg1, %c0_i32 : i32, i32
  }
  func.func @transform_2(%arg0: i32, %arg1: i32) -> (i32, i32) {
    %c0_i32 = arith.constant 0 : i32
    %c0_i32_0 = arith.constant 0 : i32
    %c0_i32_1 = arith.constant 0 : i32
    return %c0_i32, %c0_i32_0 : i32, i32
  }
  func.func @transform_3(%arg0: i32, %arg1: i32) -> (i32, i32) {
    %c0_i32 = arith.constant 0 : i32
    %c0_i32_0 = arith.constant 0 : i32
    return %arg0, %c0_i32 : i32, i32
  }
}

</mosaic_0001>

<llo_original>
// kernel: discriminator2_patchs_forward.5
$region0: #{discriminator2_patchs_forward.5}
  #allocation0 [shape = 'u32[]', space=smem, size = 0x4, offset = 0x4, fixed_abs, tag = 'smem constant byte address 0x4 - core index']
  #allocation1 [shape = 'u32[144,128]{1,0:T(1,128)}', space=vmem, size = 0x12000, scoped, tag = 'internal scratch']
  #allocation2 [shape = 'f32[256,128]{1,0:T(8,128)}', space=vmem, size = 0x20000, scoped, tag = 'scratch operand']
  %s0 = inlined_call_operand.vmem [shape: bf16[512,128], index: 0, kind: input, shape index: {}]
  %s1 = inlined_call_operand.vmem [shape: bf16[128,128], index: 1, kind: input, shape index: {}]
  %s2 = inlined_call_operand.vmem [shape: f32[1,128], index: 2, kind: input, shape index: {}]
  %s3 = inlined_call_operand.vmem [shape: bf16[512,128], index: 3, kind: output, shape index: {}]
  %s4 = sld [smem:[#allocation0]]
  $region53: #{discriminator2_patchs_forward.5} parent=0
    _
  %s6 = ssub.s32 1, %s4
  %s7 = scalar_select 0, %s6, %s4
  loop: start=0, step=1, limit=4
  $region2: #{discriminator2_patchs_forward.5} parent=0 // loop_pre_header
    _
  $region3: #{discriminator2_patchs_forward.5} parent=0 // loop_header
    %s9 = sphi 0, %s13
    %p10 = scmp.ge.s32.totalorder %s9, 4
    %s16 = sphi 0, %s28
    %s17 = sphi 0, %s24
    %s18 = sphi 0, %s16
    %s19 = sphi 0, %s17
    %s20 = sphi 0, %s18
    %s21 = sphi 0, %s19
    %s33 = sphi 0, %s35
    %s36 = sphi 0, %s33
    %s37 = sphi 0, %s36
    %s53 = sphi 0, %s37
    %s59 = sphi 0, %s61
    %s62 = sphi 0, %s59
    %s63 = sphi 0, %s62
    %s79 = sphi 0, %s63
    %s83 = sphi 0, %s83
    %s85 = sphi 0, %s83
    %s86 = sphi 0, %s85
    %s100 = sphi 0, %s86
    %s106 = sphi 0, %s108
    %s109 = sphi 0, %s106
    %s110 = sphi 0, %s109
    %s126 = sphi 0, %s110
  $region4: #{discriminator2_patchs_forward.5} parent=0 // loop_header_branch
    %12 = sbr.rel (%p10) target = $region8
  $region5: #{discriminator2_patchs_forward.5} parent=0 // loop_body
    %s14 = ssub.s32 %s9, 1
    %s15 = ssub.s32 %s9, 2
    %s22 = sadd.s32 1, %s17
    %p23 = scmp.ge.s32.totalorder %s22, 1
    %s24 = scalar_select %p23, 0, %s22
    %s25 = sadd.s32 1, %s16
    %s26 = scalar_select %p23, %s25, %s16
    %p27 = scmp.ge.s32.totalorder %s26, 2
    %s28 = scalar_select %p27, 0, %s26
    %s29 = ssub.s32 %s16, %s28
    %s30 = ssub.s32 %s17, %s24
    %s31 = sor.u32 %s29, %s30
    %p32 = scmp.eq.s32.totalorder %s31, 0
    %s34 = sadd.s32 %s33, 1
    %s35 = scalar_select %p32, %s33, %s34
    %p38 = pneg %p32
    %p39 = scmp.eq.s32.totalorder %s9, 1
    %p40 = por %p38, %p39
    %p41 = scmp.ne.s32.totalorder %s33, %s36
    %p42 = scmp.eq.s32.totalorder %s9, 0
    %p43 = por %p41, %p42
    %p44 = scmp.ne.s32.totalorder %s33, %s36
    %p45 = scmp.eq.s32.totalorder %s14, 1
    %p46 = por %p44, %p45
    %p47 = scmp.ne.s32.totalorder %s36, %s37
    %p48 = scmp.eq.s32.totalorder %s14, 0
    %p49 = por %p47, %p48
    %p50 = scmp.ne.s32.totalorder %s36, %s37
    %p51 = scmp.eq.s32.totalorder %s15, 1
    %p52 = por %p50, %p51
    %p54 = scmp.ne.s32.totalorder %s37, %s53
    %p55 = scmp.eq.s32.totalorder %s15, 0
    %p56 = por %p54, %p55
    %s57 = ssub.s32 %s17, %s24
    %p58 = scmp.eq.s32.totalorder %s57, 0
    %s60 = sadd.s32 %s59, 1
    %s61 = scalar_select %p58, %s59, %s60
    %p64 = pneg %p58
    %p65 = scmp.eq.s32.totalorder %s9, 1
    %p66 = por %p64, %p65
    %p67 = scmp.ne.s32.totalorder %s59, %s62
    %p68 = scmp.eq.s32.totalorder %s9, 0
    %p69 = por %p67, %p68
    %p70 = scmp.ne.s32.totalorder %s59, %s62
    %p71 = scmp.eq.s32.totalorder %s14, 1
    %p72 = por %p70, %p71
    %p73 = scmp.ne.s32.totalorder %s62, %s63
    %p74 = scmp.eq.s32.totalorder %s14, 0
    %p75 = por %p73, %p74
    %p76 = scmp.ne.s32.totalorder %s62, %s63
    %p77 = scmp.eq.s32.totalorder %s15, 1
    %p78 = por %p76, %p77
    %p80 = scmp.ne.s32.totalorder %s63, %s79
    %p81 = scmp.eq.s32.totalorder %s15, 0
    %p82 = por %p80, %p81
    %s84 = sadd.s32 %s83, 1
    %p87 = scmp.eq.s32.totalorder %s9, 1
    %p88 = scmp.ne.s32.totalorder %s83, %s85
    %p89 = scmp.eq.s32.totalorder %s9, 0
    %p90 = por %p88, %p89
    %p91 = scmp.ne.s32.totalorder %s83, %s85
    %p92 = scmp.eq.s32.totalorder %s14, 1
    %p93 = por %p91, %p92
    %p94 = scmp.ne.s32.totalorder %s85, %s86
    %p95 = scmp.eq.s32.totalorder %s14, 0
    %p96 = por %p94, %p95
    %p97 = scmp.ne.s32.totalorder %s85, %s86
    %p98 = scmp.eq.s32.totalorder %s15, 1
    %p99 = por %p97, %p98
    %p101 = scmp.ne.s32.totalorder %s86, %s100
    %p102 = scmp.eq.s32.totalorder %s15, 0
    %p103 = por %p101, %p102
    %s104 = ssub.s32 %s16, %s28
    %p105 = scmp.eq.s32.totalorder %s104, 0
    %s107 = sadd.s32 %s106, 1
    %s108 = scalar_select %p105, %s106, %s107
    %p111 = pneg %p105
    %p112 = scmp.eq.s32.totalorder %s9, 1
    %p113 = por %p111, %p112
    %p114 = scmp.ne.s32.totalorder %s106, %s109
    %p115 = scmp.eq.s32.totalorder %s9, 0
    %p116 = por %p114, %p115
    %p117 = scmp.ne.s32.totalorder %s106, %s109
    %p118 = scmp.eq.s32.totalorder %s14, 1
    %p119 = por %p117, %p118
    %p120 = scmp.ne.s32.totalorder %s109, %s110
    %p121 = scmp.eq.s32.totalorder %s14, 0
    %p122 = por %p120, %p121
    %p123 = scmp.ne.s32.totalorder %s109, %s110
    %p124 = scmp.eq.s32.totalorder %s15, 1
    %p125 = por %p123, %p124
    %p127 = scmp.ne.s32.totalorder %s110, %s126
    %p128 = scmp.eq.s32.totalorder %s15, 0
    %p129 = por %p127, %p128
    %p130 = scmp.le.s32.totalorder 1, %s9
    %p131 = scmp.lt.s32.totalorder %s9, 3
    %p132 = pnand %p130, %p131
    %p133 = pneg %p132
    // Predicated region
    $region9: #{discriminator2_patchs_forward.5} parent=5 // pred_check
      _
    $region10: #{discriminator2_patchs_forward.5} parent=5 // pred_check_branch
      %135 = sbr.rel (%p132) target = $region12
    $region11: #{discriminator2_patchs_forward.5} parent=5 // pred_region
      %s136 = ssub.s32 %s9, 1
      // Predicated region
      $region13: #{discriminator2_patchs_forward.5} parent=11 // pred_check
        %p137 = pneg %p75
      $region14: #{discriminator2_patchs_forward.5} parent=11 // pred_check_branch
        %139 = sbr.rel (%p137) target = $region16
      $region15: #{discriminator2_patchs_forward.5} parent=11 // pred_region
        %s140 = smul.u32 16, %s19
        %p141 = scmp.lt.s32.totalorder %s140, 15
        %s142 = scalar_select %p141, %s140, 15
        %s143 = smul.addr %s142, 4
        %s144 = scalar_lea.vmem %s1, %s143
        %s145 = smul.u32 16, %s19
      $region16: #{discriminator2_patchs_forward.5} parent=11 // pred_fallthru
        _
      // Predicated region
      $region17: #{discriminator2_patchs_forward.5} parent=11 // pred_check
        %p146 = pneg %p96
      $region18: #{discriminator2_patchs_forward.5} parent=11 // pred_check_branch
        %148 = sbr.rel (%p146) target = $region20
      $region19: #{discriminator2_patchs_forward.5} parent=11 // pred_region
        _
      $region20: #{discriminator2_patchs_forward.5} parent=11 // pred_fallthru
        _
    $region12: #{discriminator2_patchs_forward.5} parent=5 // pred_fallthru
      _
    %p149 = scmp.lt.s32.totalorder %s9, 2
    // Predicated region
    $region21: #{discriminator2_patchs_forward.5} parent=5 // pred_check
      %p150 = pneg %p149
    $region22: #{discriminator2_patchs_forward.5} parent=5 // pred_check_branch
      %152 = sbr.rel (%p150) target = $region24
    $region23: #{discriminator2_patchs_forward.5} parent=5 // pred_region
      // Predicated region
      $region25: #{discriminator2_patchs_forward.5} parent=23 // pred_check
        %p153 = pneg %p43
      $region26: #{discriminator2_patchs_forward.5} parent=23 // pred_check_branch
        %155 = sbr.rel (%p153) target = $region28
      $region27: #{discriminator2_patchs_forward.5} parent=23 // pred_region
        %s156 = smul.u32 32, %s16
        %p157 = scmp.lt.s32.totalorder %s156, 63
        %s158 = scalar_select %p157, %s156, 63
        %p159 = scmp.lt.s32.totalorder %s17, 0
        %s160 = scalar_select %p159, %s17, 0
        %s161 = sadd.s32 %s160, %s158
        %s162 = smul.addr %s161, 4
        %s163 = scalar_lea.vmem %s0, %s162
        %s164 = smul.u32 32, %s16
      $region28: #{discriminator2_patchs_forward.5} parent=23 // pred_fallthru
        _
    $region24: #{discriminator2_patchs_forward.5} parent=5 // pred_fallthru
      _
    %p165 = scmp.le.s32.totalorder 1, %s9
    %p166 = scmp.lt.s32.totalorder %s9, 3
    %p167 = pnand %p165, %p166
    %p168 = pneg %p167
    // Predicated region
    $region29: #{discriminator2_patchs_forward.5} parent=5 // pred_check
      _
    $region30: #{discriminator2_patchs_forward.5} parent=5 // pred_check_branch
      %170 = sbr.rel (%p167) target = $region32
    $region31: #{discriminator2_patchs_forward.5} parent=5 // pred_region
      %s171 = ssub.s32 %s9, 1
      %s172 = smul.u32 32, %s18
      %p173 = scmp.lt.s32.totalorder %s172, 63
      %s174 = scalar_select %p173, %s172, 63
      %p175 = scmp.lt.s32.totalorder %s19, 0
      %s176 = scalar_select %p175, %s19, 0
      %s177 = sadd.s32 %s176, %s174
      %s178 = smul.addr %s177, 4
      %s179 = scalar_lea.vmem %s0, %s178
      %p180 = pneg %p49
      %p181 = pneg %p46
      %s182 = smul.u32 16, %s19
      %p183 = scmp.lt.s32.totalorder %s182, 15
      %s184 = scalar_select %p183, %s182, 15
      %s185 = smul.addr %s184, 4
      %s186 = scalar_lea.vmem %s1, %s185
      %p187 = pneg %p75
      %p188 = pneg %p72
      %p189 = pneg %p96
      %p190 = pneg %p93
      %p191 = pneg %p122
      %p192 = pneg %p119
      %s193 = smul.u32 32, %s18
      %p194 = scmp.lt.s32.totalorder %s193, 63
      %s195 = scalar_select %p194, %s193, 63
      %s196 = smul.addr %s195, 4
      %s197 = scalar_lea.vmem %s3, %s196
      %s198 = smul.u32 32, %s18
      %p199 = scmp.lt.s32.totalorder %s198, 63
      %s200 = scalar_select %p199, %s198, 63
      %p201 = scmp.lt.s32.totalorder %s19, 0
      %s202 = scalar_select %p201, %s19, 0
      %s203 = sadd.s32 %s202, %s200
      %s204 = smul.addr %s203, 4
      %s205 = scalar_lea.vmem %s0, %s204
      %s206 = smul.u32 32, %s18
      %s207 = smul.u32 16, %s19
      %p208 = scmp.lt.s32.totalorder %s207, 15
      %s209 = scalar_select %p208, %s207, 15
      %s210 = smul.addr %s209, 4
      %s211 = scalar_lea.vmem %s1, %s210
      %s212 = smul.u32 16, %s19
      %s213 = smul.u32 32, %s18
      %p214 = scmp.lt.s32.totalorder %s213, 63
      %s215 = scalar_select %p214, %s213, 63
      %s216 = smul.addr %s215, 4
      %s217 = scalar_lea.vmem %s3, %s216
      %s218 = smul.u32 32, %s18
      %p220 = scmp.eq.s32.totalorder %s19, 0
      // Predicated region
      $region33: #{discriminator2_patchs_forward.5} parent=31 // pred_check
        %p221 = pneg %p220
      $region34: #{discriminator2_patchs_forward.5} parent=31 // pred_check_branch
        %223 = sbr.rel (%p221) target = $region36
      $region35: #{discriminator2_patchs_forward.5} parent=31 // pred_region
        %224 = vst [vmem:[#allocation2] sm:$0xff] 0.0
        %225 = vst [vmem:[#allocation2 + $0x8] sm:$0xff] 0.0
        %226 = vst [vmem:[#allocation2 + $0x10] sm:$0xff] 0.0
        %227 = vst [vmem:[#allocation2 + $0x18] sm:$0xff] 0.0
        %228 = vst [vmem:[#allocation2 + $0x20] sm:$0xff] 0.0
        %229 = vst [vmem:[#allocation2 + $0x28] sm:$0xff] 0.0
        %230 = vst [vmem:[#allocation2 + $0x30] sm:$0xff] 0.0
        %231 = vst [vmem:[#allocation2 + $0x38] sm:$0xff] 0.0
        %232 = vst [vmem:[#allocation2 + $0x40] sm:$0xff] 0.0
        %233 = vst [vmem:[#allocation2 + $0x48] sm:$0xff] 0.0
        %234 = vst [vmem:[#allocation2 + $0x50] sm:$0xff] 0.0
        %235 = vst [vmem:[#allocation2 + $0x58] sm:$0xff] 0.0
        %236 = vst [vmem:[#allocation2 + $0x60] sm:$0xff] 0.0
        %237 = vst [vmem:[#allocation2 + $0x68] sm:$0xff] 0.0
        %238 = vst [vmem:[#allocation2 + $0x70] sm:$0xff] 0.0
        %239 = vst [vmem:[#allocation2 + $0x78] sm:$0xff] 0.0
        %240 = vst [vmem:[#allocation2 + $0x80] sm:$0xff] 0.0
        %241 = vst [vmem:[#allocation2 + $0x88] sm:$0xff] 0.0
        %242 = vst [vmem:[#allocation2 + $0x90] sm:$0xff] 0.0
        %243 = vst [vmem:[#allocation2 + $0x98] sm:$0xff] 0.0
        %244 = vst [vmem:[#allocation2 + $0xa0] sm:$0xff] 0.0
        %245 = vst [vmem:[#allocation2 + $0xa8] sm:$0xff] 0.0
        %246 = vst [vmem:[#allocation2 + $0xb0] sm:$0xff] 0.0
        %247 = vst [vmem:[#allocation2 + $0xb8] sm:$0xff] 0.0
        %248 = vst [vmem:[#allocation2 + $0xc0] sm:$0xff] 0.0
        %249 = vst [vmem:[#allocation2 + $0xc8] sm:$0xff] 0.0
        %250 = vst [vmem:[#allocation2 + $0xd0] sm:$0xff] 0.0
        %251 = vst [vmem:[#allocation2 + $0xd8] sm:$0xff] 0.0
        %252 = vst [vmem:[#allocation2 + $0xe0] sm:$0xff] 0.0
        %253 = vst [vmem:[#allocation2 + $0xe8] sm:$0xff] 0.0
        %254 = vst [vmem:[#allocation2 + $0xf0] sm:$0xff] 0.0
        %255 = vst [vmem:[#allocation2 + $0xf8] sm:$0xff] 0.0
      $region36: #{discriminator2_patchs_forward.5} parent=31 // pred_fallthru
        _
      %v256 = vld [vmem:[#allocation2] sm:$0xff]
      %v257 = vld [vmem:[#allocation2 + $0x8] sm:$0xff]
      %v258 = vld [vmem:[#allocation2 + $0x10] sm:$0xff]
      %v259 = vld [vmem:[#allocation2 + $0x18] sm:$0xff]
      %v260 = vld [vmem:[#allocation2 + $0x20] sm:$0xff]
      %v261 = vld [vmem:[#allocation2 + $0x28] sm:$0xff]
      %v262 = vld [vmem:[#allocation2 + $0x30] sm:$0xff]
      %v263 = vld [vmem:[#allocation2 + $0x38] sm:$0xff]
      %v264 = vld [vmem:[#allocation2 + $0x40] sm:$0xff]
      %v265 = vld [vmem:[#allocation2 + $0x48] sm:$0xff]
      %v266 = vld [vmem:[#allocation2 + $0x50] sm:$0xff]
      %v267 = vld [vmem:[#allocation2 + $0x58] sm:$0xff]
      %v268 = vld [vmem:[#allocation2 + $0x60] sm:$0xff]
      %v269 = vld [vmem:[#allocation2 + $0x68] sm:$0xff]
      %v270 = vld [vmem:[#allocation2 + $0x70] sm:$0xff]
      %v271 = vld [vmem:[#allocation2 + $0x78] sm:$0xff]
      %v272 = vld [vmem:[#allocation2 + $0x80] sm:$0xff]
      %v273 = vld [vmem:[#allocation2 + $0x88] sm:$0xff]
      %v274 = vld [vmem:[#allocation2 + $0x90] sm:$0xff]
      %v275 = vld [vmem:[#allocation2 + $0x98] sm:$0xff]
      %v276 = vld [vmem:[#allocation2 + $0xa0] sm:$0xff]
      %v277 = vld [vmem:[#allocation2 + $0xa8] sm:$0xff]
      %v278 = vld [vmem:[#allocation2 + $0xb0] sm:$0xff]
      %v279 = vld [vmem:[#allocation2 + $0xb8] sm:$0xff]
      %v280 = vld [vmem:[#allocation2 + $0xc0] sm:$0xff]
      %v281 = vld [vmem:[#allocation2 + $0xc8] sm:$0xff]
      %v282 = vld [vmem:[#allocation2 + $0xd0] sm:$0xff]
      %v283 = vld [vmem:[#allocation2 + $0xd8] sm:$0xff]
      %v284 = vld [vmem:[#allocation2 + $0xe0] sm:$0xff]
      %v285 = vld [vmem:[#allocation2 + $0xe8] sm:$0xff]
      %v286 = vld [vmem:[#allocation2 + $0xf0] sm:$0xff]
      %v287 = vld [vmem:[#allocation2 + $0xf8] sm:$0xff]
      %v288 = vld [vmem:[%s205] sm:$0xf]
      %v289 = vld [vmem:[%s205 + $0x4] sm:$0xf]
      %v290 = vld [vmem:[%s205 + $0x8] sm:$0xf]
      %v291 = vld [vmem:[%s205 + $0xc] sm:$0xf]
      %v292 = vld [vmem:[%s205 + $0x10] sm:$0xf]
      %v293 = vld [vmem:[%s205 + $0x14] sm:$0xf]
      %v294 = vld [vmem:[%s205 + $0x18] sm:$0xf]
      %v295 = vld [vmem:[%s205 + $0x1c] sm:$0xf]
      %v296 = vld [vmem:[%s205 + $0x20] sm:$0xf]
      %v297 = vld [vmem:[%s205 + $0x24] sm:$0xf]
      %v298 = vld [vmem:[%s205 + $0x28] sm:$0xf]
      %v299 = vld [vmem:[%s205 + $0x2c] sm:$0xf]
      %v300 = vld [vmem:[%s205 + $0x30] sm:$0xf]
      %v301 = vld [vmem:[%s205 + $0x34] sm:$0xf]
      %v302 = vld [vmem:[%s205 + $0x38] sm:$0xf]
      %v303 = vld [vmem:[%s205 + $0x3c] sm:$0xf]
      %v304 = vld [vmem:[%s205 + $0x40] sm:$0xf]
      %v305 = vld [vmem:[%s205 + $0x44] sm:$0xf]
      %v306 = vld [vmem:[%s205 + $0x48] sm:$0xf]
      %v307 = vld [vmem:[%s205 + $0x4c] sm:$0xf]
      %v308 = vld [vmem:[%s205 + $0x50] sm:$0xf]
      %v309 = vld [vmem:[%s205 + $0x54] sm:$0xf]
      %v310 = vld [vmem:[%s205 + $0x58] sm:$0xf]
      %v311 = vld [vmem:[%s205 + $0x5c] sm:$0xf]
      %v312 = vld [vmem:[%s205 + $0x60] sm:$0xf]
      %v313 = vld [vmem:[%s205 + $0x64] sm:$0xf]
      %v314 = vld [vmem:[%s205 + $0x68] sm:$0xf]
      %v315 = vld [vmem:[%s205 + $0x6c] sm:$0xf]
      %v316 = vld [vmem:[%s205 + $0x70] sm:$0xf]
      %v317 = vld [vmem:[%s205 + $0x74] sm:$0xf]
      %v318 = vld [vmem:[%s205 + $0x78] sm:$0xf]
      %v319 = vld [vmem:[%s205 + $0x7c] sm:$0xf]
      %v320 = vld [vmem:[%s211] sm:$0xf]
      %v321 = vld [vmem:[%s211 + $0x4] sm:$0xf]
      %v322 = vld [vmem:[%s211 + $0x8] sm:$0xf]
      %v323 = vld [vmem:[%s211 + $0xc] sm:$0xf]
      %v324 = vld [vmem:[%s211 + $0x10] sm:$0xf]
      %v325 = vld [vmem:[%s211 + $0x14] sm:$0xf]
      %v326 = vld [vmem:[%s211 + $0x18] sm:$0xf]
      %v327 = vld [vmem:[%s211 + $0x1c] sm:$0xf]
      %v328 = vld [vmem:[%s211 + $0x20] sm:$0xf]
      %v329 = vld [vmem:[%s211 + $0x24] sm:$0xf]
      %v330 = vld [vmem:[%s211 + $0x28] sm:$0xf]
      %v331 = vld [vmem:[%s211 + $0x2c] sm:$0xf]
      %v332 = vld [vmem:[%s211 + $0x30] sm:$0xf]
      %v333 = vld [vmem:[%s211 + $0x34] sm:$0xf]
      %v334 = vld [vmem:[%s211 + $0x38] sm:$0xf]
      %v335 = vld [vmem:[%s211 + $0x3c] sm:$0xf]
      %v368 = vunpack.c.l.b16 %v288
      %v369 = vunpack.c.l.b16 %v289
      %v370 = vunpack.c.l.b16 %v290
      %v371 = vunpack.c.l.b16 %v291
      %v372 = vunpack.c.l.b16 %v292
      %v373 = vunpack.c.l.b16 %v293
      %v374 = vunpack.c.l.b16 %v294
      %v375 = vunpack.c.l.b16 %v295
      %v376 = vunpack.c.l.b16 %v296
      %v377 = vunpack.c.l.b16 %v297
      %v378 = vunpack.c.l.b16 %v298
      %v379 = vunpack.c.l.b16 %v299
      %v380 = vunpack.c.l.b16 %v300
      %v381 = vunpack.c.l.b16 %v301
      %v382 = vunpack.c.l.b16 %v302
      %v383 = vunpack.c.l.b16 %v303
      %v384 = vunpack.c.l.b16 %v304
      %v385 = vunpack.c.l.b16 %v305
      %v386 = vunpack.c.l.b16 %v306
      %v387 = vunpack.c.l.b16 %v307
      %v388 = vunpack.c.l.b16 %v308
      %v389 = vunpack.c.l.b16 %v309
      %v390 = vunpack.c.l.b16 %v310
      %v391 = vunpack.c.l.b16 %v311
      %v392 = vunpack.c.l.b16 %v312
      %v393 = vunpack.c.l.b16 %v313
      %v394 = vunpack.c.l.b16 %v314
      %v395 = vunpack.c.l.b16 %v315
      %v396 = vunpack.c.l.b16 %v316
      %v397 = vunpack.c.l.b16 %v317
      %v398 = vunpack.c.l.b16 %v318
      %v399 = vunpack.c.l.b16 %v319
      %v400 = vpack.c.b16 %v369, %v368
      %v401 = vpack.c.b16 %v371, %v370
      %v402 = vpack.c.b16 %v373, %v372
      %v403 = vpack.c.b16 %v375, %v374
      %v404 = vpack.c.b16 %v377, %v376
      %v405 = vpack.c.b16 %v379, %v378
      %v406 = vpack.c.b16 %v381, %v380
      %v407 = vpack.c.b16 %v383, %v382
      %v408 = vpack.c.b16 %v385, %v384
      %v409 = vpack.c.b16 %v387, %v386
      %v410 = vpack.c.b16 %v389, %v388
      %v411 = vpack.c.b16 %v391, %v390
      %v412 = vpack.c.b16 %v393, %v392
      %v413 = vpack.c.b16 %v395, %v394
      %v414 = vpack.c.b16 %v397, %v396
      %v415 = vpack.c.b16 %v399, %v398
      %v448 = vunpack.c.l.b16 %v320
      %v449 = vunpack.c.l.b16 %v321
      %v450 = vunpack.c.l.b16 %v322
      %v451 = vunpack.c.l.b16 %v323
      %v452 = vunpack.c.l.b16 %v324
      %v453 = vunpack.c.l.b16 %v325
      %v454 = vunpack.c.l.b16 %v326
      %v455 = vunpack.c.l.b16 %v327
      %v456 = vunpack.c.l.b16 %v328
      %v457 = vunpack.c.l.b16 %v329
      %v458 = vunpack.c.l.b16 %v330
      %v459 = vunpack.c.l.b16 %v331
      %v460 = vunpack.c.l.b16 %v332
      %v461 = vunpack.c.l.b16 %v333
      %v462 = vunpack.c.l.b16 %v334
      %v463 = vunpack.c.l.b16 %v335
      %v464 = vpack.c.b16 %v449, %v448
      %v465 = vpack.c.b16 %v451, %v450
      %v466 = vpack.c.b16 %v453, %v452
      %v467 = vpack.c.b16 %v455, %v454
      %v468 = vpack.c.b16 %v457, %v456
      %v469 = vpack.c.b16 %v459, %v458
      %v470 = vpack.c.b16 %v461, %v460
      %v471 = vpack.c.b16 %v463, %v462
      %480 = vmatprep.subr.bf16.mxu0 0
      %481 = vmatpush1.bf16.msra.mxu0 %v471
      %482 = vmatprep.subr.bf16.mxu0 0
      %483 = vmatpush1.bf16.msra.mxu0 %v470
      %484 = vmatprep.subr.bf16.mxu0 0
      %485 = vmatpush1.bf16.msra.mxu0 %v469
      %486 = vmatprep.subr.bf16.mxu0 0
      %487 = vmatpush1.bf16.msra.mxu0 %v468
      %488 = vmatprep.subr.bf16.mxu0 0
      %489 = vmatpush1.bf16.msra.mxu0 %v467
      %490 = vmatprep.subr.bf16.mxu0 0
      %491 = vmatpush1.bf16.msra.mxu0 %v466
      %492 = vmatprep.subr.bf16.mxu0 0
      %493 = vmatpush1.bf16.msra.mxu0 %v465
      %494 = vmatprep.subr.bf16.mxu0 0
      %495 = vmatpush1.bf16.msra.mxu0 %v464
      %496 = vmatprep.subr.bf16.mxu0 0
      %497 = vmatpush2.bf16.msra.mxu0 0
      %498 = vmatprep.subr.bf16.mxu0 0
      %499 = vmatpush2.bf16.msra.mxu0 0
      %500 = vmatprep.subr.bf16.mxu0 0
      %501 = vmatpush2.bf16.msra.mxu0 0
      %502 = vmatprep.subr.bf16.mxu0 0
      %503 = vmatpush2.bf16.msra.mxu0 0
      %504 = vmatprep.subr.bf16.mxu0 0
      %505 = vmatpush2.bf16.msra.mxu0 0
      %506 = vmatprep.subr.bf16.mxu0 0
      %507 = vmatpush2.bf16.msra.mxu0 0
      %508 = vmatprep.subr.bf16.mxu0 0
      %509 = vmatpush2.bf16.msra.mxu0 0
      %510 = vmatprep.subr.bf16.mxu0 0
      %511 = vmatpush2.bf16.msra.mxu0 0
      %512 = vmatprep.mubr.bf16.mxu0 0
      %513 = vmatmul.mubr.bf16.gmra.mxu0 %v400
      %v514 = vpop.f32.mrf.mxu0
      %v515 = vadd.f32 0.0, %v514
      %v516 = vpop.f32.mrf.mxu0
      %v517 = vpop.f32.mrf.mxu0
      %v518 = vadd.f32 0.0, %v517
      %v519 = vpop.f32.mrf.mxu0
      %520 = vmatprep.mubr.bf16.mxu0 0
      %521 = vmatmul.mubr.bf16.gmra.mxu0 %v401
      %v522 = vpop.f32.mrf.mxu0
      %v523 = vadd.f32 0.0, %v522
      %v524 = vpop.f32.mrf.mxu0
      %v525 = vpop.f32.mrf.mxu0
      %v526 = vadd.f32 0.0, %v525
      %v527 = vpop.f32.mrf.mxu0
      %528 = vmatprep.mubr.bf16.mxu0 0
      %529 = vmatmul.mubr.bf16.gmra.mxu0 %v402
      %v530 = vpop.f32.mrf.mxu0
      %v531 = vadd.f32 0.0, %v530
      %v532 = vpop.f32.mrf.mxu0
      %v533 = vpop.f32.mrf.mxu0
      %v534 = vadd.f32 0.0, %v533
      %v535 = vpop.f32.mrf.mxu0
      %536 = vmatprep.mubr.bf16.mxu0 0
      %537 = vmatmul.mubr.bf16.gmra.mxu0 %v403
      %v538 = vpop.f32.mrf.mxu0
      %v539 = vadd.f32 0.0, %v538
      %v540 = vpop.f32.mrf.mxu0
      %v541 = vpop.f32.mrf.mxu0
      %v542 = vadd.f32 0.0, %v541
      %v543 = vpop.f32.mrf.mxu0
      %544 = vmatprep.mubr.bf16.mxu0 0
      %545 = vmatmul.mubr.bf16.gmra.mxu0 %v404
      %v546 = vpop.f32.mrf.mxu0
      %v547 = vadd.f32 0.0, %v546
      %v548 = vpop.f32.mrf.mxu0
      %v549 = vpop.f32.mrf.mxu0
      %v550 = vadd.f32 0.0, %v549
      %v551 = vpop.f32.mrf.mxu0
      %552 = vmatprep.mubr.bf16.mxu0 0
      %553 = vmatmul.mubr.bf16.gmra.mxu0 %v405
      %v554 = vpop.f32.mrf.mxu0
      %v555 = vadd.f32 0.0, %v554
      %v556 = vpop.f32.mrf.mxu0
      %v557 = vpop.f32.mrf.mxu0
      %v558 = vadd.f32 0.0, %v557
      %v559 = vpop.f32.mrf.mxu0
      %560 = vmatprep.mubr.bf16.mxu0 0
      %561 = vmatmul.mubr.bf16.gmra.mxu0 %v406
      %v562 = vpop.f32.mrf.mxu0
      %v563 = vadd.f32 0.0, %v562
      %v564 = vpop.f32.mrf.mxu0
      %v565 = vpop.f32.mrf.mxu0
      %v566 = vadd.f32 0.0, %v565
      %v567 = vpop.f32.mrf.mxu0
      %568 = vmatprep.mubr.bf16.mxu0 0
      %569 = vmatmul.mubr.bf16.gmra.mxu0 %v407
      %v570 = vpop.f32.mrf.mxu0
      %v571 = vadd.f32 0.0, %v570
      %v572 = vpop.f32.mrf.mxu0
      %v573 = vpop.f32.mrf.mxu0
      %v574 = vadd.f32 0.0, %v573
      %v575 = vpop.f32.mrf.mxu0
      %576 = vmatprep.mubr.bf16.mxu0 0
      %577 = vmatmul.mubr.bf16.gmra.mxu0 %v408
      %v578 = vpop.f32.mrf.mxu0
      %v579 = vadd.f32 0.0, %v578
      %v580 = vpop.f32.mrf.mxu0
      %v581 = vpop.f32.mrf.mxu0
      %v582 = vadd.f32 0.0, %v581
      %v583 = vpop.f32.mrf.mxu0
      %584 = vmatprep.mubr.bf16.mxu0 0
      %585 = vmatmul.mubr.bf16.gmra.mxu0 %v409
      %v586 = vpop.f32.mrf.mxu0
      %v587 = vadd.f32 0.0, %v586
      %v588 = vpop.f32.mrf.mxu0
      %v589 = vpop.f32.mrf.mxu0
      %v590 = vadd.f32 0.0, %v589
      %v591 = vpop.f32.mrf.mxu0
      %592 = vmatprep.mubr.bf16.mxu0 0
      %593 = vmatmul.mubr.bf16.gmra.mxu0 %v410
      %v594 = vpop.f32.mrf.mxu0
      %v595 = vadd.f32 0.0, %v594
      %v596 = vpop.f32.mrf.mxu0
      %v597 = vpop.f32.mrf.mxu0
      %v598 = vadd.f32 0.0, %v597
      %v599 = vpop.f32.mrf.mxu0
      %600 = vmatprep.mubr.bf16.mxu0 0
      %601 = vmatmul.mubr.bf16.gmra.mxu0 %v411
      %v602 = vpop.f32.mrf.mxu0
      %v603 = vadd.f32 0.0, %v602
      %v604 = vpop.f32.mrf.mxu0
      %v605 = vpop.f32.mrf.mxu0
      %v606 = vadd.f32 0.0, %v605
      %v607 = vpop.f32.mrf.mxu0
      %608 = vmatprep.mubr.bf16.mxu0 0
      %609 = vmatmul.mubr.bf16.gmra.mxu0 %v412
      %v610 = vpop.f32.mrf.mxu0
      %v611 = vadd.f32 0.0, %v610
      %v612 = vpop.f32.mrf.mxu0
      %v613 = vpop.f32.mrf.mxu0
      %v614 = vadd.f32 0.0, %v613
      %v615 = vpop.f32.mrf.mxu0
      %616 = vmatprep.mubr.bf16.mxu0 0
      %617 = vmatmul.mubr.bf16.gmra.mxu0 %v413
      %v618 = vpop.f32.mrf.mxu0
      %v619 = vadd.f32 0.0, %v618
      %v620 = vpop.f32.mrf.mxu0
      %v621 = vpop.f32.mrf.mxu0
      %v622 = vadd.f32 0.0, %v621
      %v623 = vpop.f32.mrf.mxu0
      %624 = vmatprep.mubr.bf16.mxu0 0
      %625 = vmatmul.mubr.bf16.gmra.mxu0 %v414
      %v626 = vpop.f32.mrf.mxu0
      %v627 = vadd.f32 0.0, %v626
      %v628 = vpop.f32.mrf.mxu0
      %v629 = vpop.f32.mrf.mxu0
      %v630 = vadd.f32 0.0, %v629
      %v631 = vpop.f32.mrf.mxu0
      %632 = vmatprep.mubr.bf16.mxu0 0
      %633 = vmatmul.mubr.bf16.gmra.mxu0 %v415
      %v634 = vpop.f32.mrf.mxu0
      %v635 = vadd.f32 0.0, %v634
      %v636 = vpop.f32.mrf.mxu0
      %v637 = vpop.f32.mrf.mxu0
      %v638 = vadd.f32 0.0, %v637
      %v639 = vpop.f32.mrf.mxu0
      %640 = vdwg.mxu0
      %v641 = vadd.f32 %v256, %v515
      %v642 = vadd.f32 %v257, %v518
      %v643 = vadd.f32 %v258, %v523
      %v644 = vadd.f32 %v259, %v526
      %v645 = vadd.f32 %v260, %v531
      %v646 = vadd.f32 %v261, %v534
      %v647 = vadd.f32 %v262, %v539
      %v648 = vadd.f32 %v263, %v542
      %v649 = vadd.f32 %v264, %v547
      %v650 = vadd.f32 %v265, %v550
      %v651 = vadd.f32 %v266, %v555
      %v652 = vadd.f32 %v267, %v558
      %v653 = vadd.f32 %v268, %v563
      %v654 = vadd.f32 %v269, %v566
      %v655 = vadd.f32 %v270, %v571
      %v656 = vadd.f32 %v271, %v574
      %v657 = vadd.f32 %v272, %v579
      %v658 = vadd.f32 %v273, %v582
      %v659 = vadd.f32 %v274, %v587
      %v660 = vadd.f32 %v275, %v590
      %v661 = vadd.f32 %v276, %v595
      %v662 = vadd.f32 %v277, %v598
      %v663 = vadd.f32 %v278, %v603
      %v664 = vadd.f32 %v279, %v606
      %v665 = vadd.f32 %v280, %v611
      %v666 = vadd.f32 %v281, %v614
      %v667 = vadd.f32 %v282, %v619
      %v668 = vadd.f32 %v283, %v622
      %v669 = vadd.f32 %v284, %v627
      %v670 = vadd.f32 %v285, %v630
      %v671 = vadd.f32 %v286, %v635
      %v672 = vadd.f32 %v287, %v638
      %673 = vst [vmem:[#allocation2] sm:$0xff] %v641
      %674 = vst [vmem:[#allocation2 + $0x8] sm:$0xff] %v642
      %675 = vst [vmem:[#allocation2 + $0x10] sm:$0xff] %v643
      %676 = vst [vmem:[#allocation2 + $0x18] sm:$0xff] %v644
      %677 = vst [vmem:[#allocation2 + $0x20] sm:$0xff] %v645
      %678 = vst [vmem:[#allocation2 + $0x28] sm:$0xff] %v646
      %679 = vst [vmem:[#allocation2 + $0x30] sm:$0xff] %v647
      %680 = vst [vmem:[#allocation2 + $0x38] sm:$0xff] %v648
      %681 = vst [vmem:[#allocation2 + $0x40] sm:$0xff] %v649
      %682 = vst [vmem:[#allocation2 + $0x48] sm:$0xff] %v650
      %683 = vst [vmem:[#allocation2 + $0x50] sm:$0xff] %v651
      %684 = vst [vmem:[#allocation2 + $0x58] sm:$0xff] %v652
      %685 = vst [vmem:[#allocation2 + $0x60] sm:$0xff] %v653
      %686 = vst [vmem:[#allocation2 + $0x68] sm:$0xff] %v654
      %687 = vst [vmem:[#allocation2 + $0x70] sm:$0xff] %v655
      %688 = vst [vmem:[#allocation2 + $0x78] sm:$0xff] %v656
      %689 = vst [vmem:[#allocation2 + $0x80] sm:$0xff] %v657
      %690 = vst [vmem:[#allocation2 + $0x88] sm:$0xff] %v658
      %691 = vst [vmem:[#allocation2 + $0x90] sm:$0xff] %v659
      %692 = vst [vmem:[#allocation2 + $0x98] sm:$0xff] %v660
      %693 = vst [vmem:[#allocation2 + $0xa0] sm:$0xff] %v661
      %694 = vst [vmem:[#allocation2 + $0xa8] sm:$0xff] %v662
      %695 = vst [vmem:[#allocation2 + $0xb0] sm:$0xff] %v663
      %696 = vst [vmem:[#allocation2 + $0xb8] sm:$0xff] %v664
      %697 = vst [vmem:[#allocation2 + $0xc0] sm:$0xff] %v665
      %698 = vst [vmem:[#allocation2 + $0xc8] sm:$0xff] %v666
      %699 = vst [vmem:[#allocation2 + $0xd0] sm:$0xff] %v667
      %700 = vst [vmem:[#allocation2 + $0xd8] sm:$0xff] %v668
      %701 = vst [vmem:[#allocation2 + $0xe0] sm:$0xff] %v669
      %702 = vst [vmem:[#allocation2 + $0xe8] sm:$0xff] %v670
      %703 = vst [vmem:[#allocation2 + $0xf0] sm:$0xff] %v671
      %704 = vst [vmem:[#allocation2 + $0xf8] sm:$0xff] %v672
      // Predicated region
      $region37: #{discriminator2_patchs_forward.5} parent=31 // pred_check
        %p705 = pneg %p220
      $region38: #{discriminator2_patchs_forward.5} parent=31 // pred_check_branch
        %707 = sbr.rel (%p705) target = $region40
      $region39: #{discriminator2_patchs_forward.5} parent=31 // pred_region
        %v708 = vld [vmem:[#allocation2] sm:$0xff]
        %v709 = vld [vmem:[#allocation2 + $0x8] sm:$0xff]
        %v710 = vld [vmem:[#allocation2 + $0x10] sm:$0xff]
        %v711 = vld [vmem:[#allocation2 + $0x18] sm:$0xff]
        %v712 = vld [vmem:[#allocation2 + $0x20] sm:$0xff]
        %v713 = vld [vmem:[#allocation2 + $0x28] sm:$0xff]
        %v714 = vld [vmem:[#allocation2 + $0x30] sm:$0xff]
        %v715 = vld [vmem:[#allocation2 + $0x38] sm:$0xff]
        %v716 = vld [vmem:[#allocation2 + $0x40] sm:$0xff]
        %v717 = vld [vmem:[#allocation2 + $0x48] sm:$0xff]
        %v718 = vld [vmem:[#allocation2 + $0x50] sm:$0xff]
        %v719 = vld [vmem:[#allocation2 + $0x58] sm:$0xff]
        %v720 = vld [vmem:[#allocation2 + $0x60] sm:$0xff]
        %v721 = vld [vmem:[#allocation2 + $0x68] sm:$0xff]
        %v722 = vld [vmem:[#allocation2 + $0x70] sm:$0xff]
        %v723 = vld [vmem:[#allocation2 + $0x78] sm:$0xff]
        %v724 = vld [vmem:[#allocation2 + $0x80] sm:$0xff]
        %v725 = vld [vmem:[#allocation2 + $0x88] sm:$0xff]
        %v726 = vld [vmem:[#allocation2 + $0x90] sm:$0xff]
        %v727 = vld [vmem:[#allocation2 + $0x98] sm:$0xff]
        %v728 = vld [vmem:[#allocation2 + $0xa0] sm:$0xff]
        %v729 = vld [vmem:[#allocation2 + $0xa8] sm:$0xff]
        %v730 = vld [vmem:[#allocation2 + $0xb0] sm:$0xff]
        %v731 = vld [vmem:[#allocation2 + $0xb8] sm:$0xff]
        %v732 = vld [vmem:[#allocation2 + $0xc0] sm:$0xff]
        %v733 = vld [vmem:[#allocation2 + $0xc8] sm:$0xff]
        %v734 = vld [vmem:[#allocation2 + $0xd0] sm:$0xff]
        %v735 = vld [vmem:[#allocation2 + $0xd8] sm:$0xff]
        %v736 = vld [vmem:[#allocation2 + $0xe0] sm:$0xff]
        %v737 = vld [vmem:[#allocation2 + $0xe8] sm:$0xff]
        %v738 = vld [vmem:[#allocation2 + $0xf0] sm:$0xff]
        %v739 = vld [vmem:[#allocation2 + $0xf8] sm:$0xff]
        %v740 = vld [vmem:[%s2] sm:$0x1]
        %v742 = vlaneseq
        %v743 = vshrl.u32 %v742, 7
        %v744 = vsub.s32 0, %v743
        %v745 = vrot.slane %v740, %v744
        %v747 = vadd.f32 %v708, %v745
        %v748 = vadd.f32 %v709, %v745
        %v749 = vadd.f32 %v710, %v745
        %v750 = vadd.f32 %v711, %v745
        %v751 = vadd.f32 %v712, %v745
        %v752 = vadd.f32 %v713, %v745
        %v753 = vadd.f32 %v714, %v745
        %v754 = vadd.f32 %v715, %v745
        %v755 = vadd.f32 %v716, %v745
        %v756 = vadd.f32 %v717, %v745
        %v757 = vadd.f32 %v718, %v745
        %v758 = vadd.f32 %v719, %v745
        %v759 = vadd.f32 %v720, %v745
        %v760 = vadd.f32 %v721, %v745
        %v761 = vadd.f32 %v722, %v745
        %v762 = vadd.f32 %v723, %v745
        %v763 = vadd.f32 %v724, %v745
        %v764 = vadd.f32 %v725, %v745
        %v765 = vadd.f32 %v726, %v745
        %v766 = vadd.f32 %v727, %v745
        %v767 = vadd.f32 %v728, %v745
        %v768 = vadd.f32 %v729, %v745
        %v769 = vadd.f32 %v730, %v745
        %v770 = vadd.f32 %v731, %v745
        %v771 = vadd.f32 %v732, %v745
        %v772 = vadd.f32 %v733, %v745
        %v773 = vadd.f32 %v734, %v745
        %v774 = vadd.f32 %v735, %v745
        %v775 = vadd.f32 %v736, %v745
        %v776 = vadd.f32 %v737, %v745
        %v777 = vadd.f32 %v738, %v745
        %v778 = vadd.f32 %v739, %v745
        %vm779 = vcmp.ge.f32.partialorder %v747, 0.0
        %vm780 = vcmp.ge.f32.partialorder %v748, 0.0
        %vm781 = vcmp.ge.f32.partialorder %v749, 0.0
        %vm782 = vcmp.ge.f32.partialorder %v750, 0.0
        %vm783 = vcmp.ge.f32.partialorder %v751, 0.0
        %vm784 = vcmp.ge.f32.partialorder %v752, 0.0
        %vm785 = vcmp.ge.f32.partialorder %v753, 0.0
        %vm786 = vcmp.ge.f32.partialorder %v754, 0.0
        %vm787 = vcmp.ge.f32.partialorder %v755, 0.0
        %vm788 = vcmp.ge.f32.partialorder %v756, 0.0
        %vm789 = vcmp.ge.f32.partialorder %v757, 0.0
        %vm790 = vcmp.ge.f32.partialorder %v758, 0.0
        %vm791 = vcmp.ge.f32.partialorder %v759, 0.0
        %vm792 = vcmp.ge.f32.partialorder %v760, 0.0
        %vm793 = vcmp.ge.f32.partialorder %v761, 0.0
        %vm794 = vcmp.ge.f32.partialorder %v762, 0.0
        %vm795 = vcmp.ge.f32.partialorder %v763, 0.0
        %vm796 = vcmp.ge.f32.partialorder %v764, 0.0
        %vm797 = vcmp.ge.f32.partialorder %v765, 0.0
        %vm798 = vcmp.ge.f32.partialorder %v766, 0.0
        %vm799 = vcmp.ge.f32.partialorder %v767, 0.0
        %vm800 = vcmp.ge.f32.partialorder %v768, 0.0
        %vm801 = vcmp.ge.f32.partialorder %v769, 0.0
        %vm802 = vcmp.ge.f32.partialorder %v770, 0.0
        %vm803 = vcmp.ge.f32.partialorder %v771, 0.0
        %vm804 = vcmp.ge.f32.partialorder %v772, 0.0
        %vm805 = vcmp.ge.f32.partialorder %v773, 0.0
        %vm806 = vcmp.ge.f32.partialorder %v774, 0.0
        %vm807 = vcmp.ge.f32.partialorder %v775, 0.0
        %vm808 = vcmp.ge.f32.partialorder %v776, 0.0
        %vm809 = vcmp.ge.f32.partialorder %v777, 0.0
        %vm810 = vcmp.ge.f32.partialorder %v778, 0.0
        %v811 = vmul.f32 %v747, 0.2
        %v812 = vmul.f32 %v748, 0.2
        %v813 = vmul.f32 %v749, 0.2
        %v814 = vmul.f32 %v750, 0.2
        %v815 = vmul.f32 %v751, 0.2
        %v816 = vmul.f32 %v752, 0.2
        %v817 = vmul.f32 %v753, 0.2
        %v818 = vmul.f32 %v754, 0.2
        %v819 = vmul.f32 %v755, 0.2
        %v820 = vmul.f32 %v756, 0.2
        %v821 = vmul.f32 %v757, 0.2
        %v822 = vmul.f32 %v758, 0.2
        %v823 = vmul.f32 %v759, 0.2
        %v824 = vmul.f32 %v760, 0.2
        %v825 = vmul.f32 %v761, 0.2
        %v826 = vmul.f32 %v762, 0.2
        %v827 = vmul.f32 %v763, 0.2
        %v828 = vmul.f32 %v764, 0.2
        %v829 = vmul.f32 %v765, 0.2
        %v830 = vmul.f32 %v766, 0.2
        %v831 = vmul.f32 %v767, 0.2
        %v832 = vmul.f32 %v768, 0.2
        %v833 = vmul.f32 %v769, 0.2
        %v834 = vmul.f32 %v770, 0.2
        %v835 = vmul.f32 %v771, 0.2
        %v836 = vmul.f32 %v772, 0.2
        %v837 = vmul.f32 %v773, 0.2
        %v838 = vmul.f32 %v774, 0.2
        %v839 = vmul.f32 %v775, 0.2
        %v840 = vmul.f32 %v776, 0.2
        %v841 = vmul.f32 %v777, 0.2
        %v842 = vmul.f32 %v778, 0.2
        %v843 = vsel %vm779, %v747, %v811
        %v844 = vsel %vm780, %v748, %v812
        %v845 = vsel %vm781, %v749, %v813
        %v846 = vsel %vm782, %v750, %v814
        %v847 = vsel %vm783, %v751, %v815
        %v848 = vsel %vm784, %v752, %v816
        %v849 = vsel %vm785, %v753, %v817
        %v850 = vsel %vm786, %v754, %v818
        %v851 = vsel %vm787, %v755, %v819
        %v852 = vsel %vm788, %v756, %v820
        %v853 = vsel %vm789, %v757, %v821
        %v854 = vsel %vm790, %v758, %v822
        %v855 = vsel %vm791, %v759, %v823
        %v856 = vsel %vm792, %v760, %v824
        %v857 = vsel %vm793, %v761, %v825
        %v858 = vsel %vm794, %v762, %v826
        %v859 = vsel %vm795, %v763, %v827
        %v860 = vsel %vm796, %v764, %v828
        %v861 = vsel %vm797, %v765, %v829
        %v862 = vsel %vm798, %v766, %v830
        %v863 = vsel %vm799, %v767, %v831
        %v864 = vsel %vm800, %v768, %v832
        %v865 = vsel %vm801, %v769, %v833
        %v866 = vsel %vm802, %v770, %v834
        %v867 = vsel %vm803, %v771, %v835
        %v868 = vsel %vm804, %v772, %v836
        %v869 = vsel %vm805, %v773, %v837
        %v870 = vsel %vm806, %v774, %v838
        %v871 = vsel %vm807, %v775, %v839
        %v872 = vsel %vm808, %v776, %v840
        %v873 = vsel %vm809, %v777, %v841
        %v874 = vsel %vm810, %v778, %v842
        %v875 = vpack.c.bf16 %v844, %v843
        %v876 = vpack.c.bf16 %v846, %v845
        %v877 = vpack.c.bf16 %v848, %v847
        %v878 = vpack.c.bf16 %v850, %v849
        %v879 = vpack.c.bf16 %v852, %v851
        %v880 = vpack.c.bf16 %v854, %v853
        %v881 = vpack.c.bf16 %v856, %v855
        %v882 = vpack.c.bf16 %v858, %v857
        %v883 = vpack.c.bf16 %v860, %v859
        %v884 = vpack.c.bf16 %v862, %v861
        %v885 = vpack.c.bf16 %v864, %v863
        %v886 = vpack.c.bf16 %v866, %v865
        %v887 = vpack.c.bf16 %v868, %v867
        %v888 = vpack.c.bf16 %v870, %v869
        %v889 = vpack.c.bf16 %v872, %v871
        %v890 = vpack.c.bf16 %v874, %v873
        %v907 = vunpack.c.l.b16 %v875
        %v908 = vunpack.c.h.b16 %v875
        %v909 = vunpack.c.l.b16 %v876
        %v910 = vunpack.c.h.b16 %v876
        %v911 = vunpack.c.l.b16 %v877
        %v912 = vunpack.c.h.b16 %v877
        %v913 = vunpack.c.l.b16 %v878
        %v914 = vunpack.c.h.b16 %v878
        %v915 = vunpack.c.l.b16 %v879
        %v916 = vunpack.c.h.b16 %v879
        %v917 = vunpack.c.l.b16 %v880
        %v918 = vunpack.c.h.b16 %v880
        %v919 = vunpack.c.l.b16 %v881
        %v920 = vunpack.c.h.b16 %v881
        %v921 = vunpack.c.l.b16 %v882
        %v922 = vunpack.c.h.b16 %v882
        %v923 = vunpack.c.l.b16 %v883
        %v924 = vunpack.c.h.b16 %v883
        %v925 = vunpack.c.l.b16 %v884
        %v926 = vunpack.c.h.b16 %v884
        %v927 = vunpack.c.l.b16 %v885
        %v928 = vunpack.c.h.b16 %v885
        %v929 = vunpack.c.l.b16 %v886
        %v930 = vunpack.c.h.b16 %v886
        %v931 = vunpack.c.l.b16 %v887
        %v932 = vunpack.c.h.b16 %v887
        %v933 = vunpack.c.l.b16 %v888
        %v934 = vunpack.c.h.b16 %v888
        %v935 = vunpack.c.l.b16 %v889
        %v936 = vunpack.c.h.b16 %v889
        %v937 = vunpack.c.l.b16 %v890
        %v938 = vunpack.c.h.b16 %v890
        %v939 = vpack.c.b16 %v907, %v907
        %v940 = vpack.c.b16 %v908, %v908
        %v941 = vpack.c.b16 %v909, %v909
        %v942 = vpack.c.b16 %v910, %v910
        %v943 = vpack.c.b16 %v911, %v911
        %v944 = vpack.c.b16 %v912, %v912
        %v945 = vpack.c.b16 %v913, %v913
        %v946 = vpack.c.b16 %v914, %v914
        %v947 = vpack.c.b16 %v915, %v915
        %v948 = vpack.c.b16 %v916, %v916
        %v949 = vpack.c.b16 %v917, %v917
        %v950 = vpack.c.b16 %v918, %v918
        %v951 = vpack.c.b16 %v919, %v919
        %v952 = vpack.c.b16 %v920, %v920
        %v953 = vpack.c.b16 %v921, %v921
        %v954 = vpack.c.b16 %v922, %v922
        %v955 = vpack.c.b16 %v923, %v923
        %v956 = vpack.c.b16 %v924, %v924
        %v957 = vpack.c.b16 %v925, %v925
        %v958 = vpack.c.b16 %v926, %v926
        %v959 = vpack.c.b16 %v927, %v927
        %v960 = vpack.c.b16 %v928, %v928
        %v961 = vpack.c.b16 %v929, %v929
        %v962 = vpack.c.b16 %v930, %v930
        %v963 = vpack.c.b16 %v931, %v931
        %v964 = vpack.c.b16 %v932, %v932
        %v965 = vpack.c.b16 %v933, %v933
        %v966 = vpack.c.b16 %v934, %v934
        %v967 = vpack.c.b16 %v935, %v935
        %v968 = vpack.c.b16 %v936, %v936
        %v969 = vpack.c.b16 %v937, %v937
        %v970 = vpack.c.b16 %v938, %v938
        %1003 = vst [vmem:[%s217] sm:$0xf] %v939
        %1004 = vst [vmem:[%s217 + $0x4] sm:$0xf] %v940
        %1005 = vst [vmem:[%s217 + $0x8] sm:$0xf] %v941
        %1006 = vst [vmem:[%s217 + $0xc] sm:$0xf] %v942
        %1007 = vst [vmem:[%s217 + $0x10] sm:$0xf] %v943
        %1008 = vst [vmem:[%s217 + $0x14] sm:$0xf] %v944
        %1009 = vst [vmem:[%s217 + $0x18] sm:$0xf] %v945
        %1010 = vst [vmem:[%s217 + $0x1c] sm:$0xf] %v946
        %1011 = vst [vmem:[%s217 + $0x20] sm:$0xf] %v947
        %1012 = vst [vmem:[%s217 + $0x24] sm:$0xf] %v948
        %1013 = vst [vmem:[%s217 + $0x28] sm:$0xf] %v949
        %1014 = vst [vmem:[%s217 + $0x2c] sm:$0xf] %v950
        %1015 = vst [vmem:[%s217 + $0x30] sm:$0xf] %v951
        %1016 = vst [vmem:[%s217 + $0x34] sm:$0xf] %v952
        %1017 = vst [vmem:[%s217 + $0x38] sm:$0xf] %v953
        %1018 = vst [vmem:[%s217 + $0x3c] sm:$0xf] %v954
        %1019 = vst [vmem:[%s217 + $0x40] sm:$0xf] %v955
        %1020 = vst [vmem:[%s217 + $0x44] sm:$0xf] %v956
        %1021 = vst [vmem:[%s217 + $0x48] sm:$0xf] %v957
        %1022 = vst [vmem:[%s217 + $0x4c] sm:$0xf] %v958
        %1023 = vst [vmem:[%s217 + $0x50] sm:$0xf] %v959
        %1024 = vst [vmem:[%s217 + $0x54] sm:$0xf] %v960
        %1025 = vst [vmem:[%s217 + $0x58] sm:$0xf] %v961
        %1026 = vst [vmem:[%s217 + $0x5c] sm:$0xf] %v962
        %1027 = vst [vmem:[%s217 + $0x60] sm:$0xf] %v963
        %1028 = vst [vmem:[%s217 + $0x64] sm:$0xf] %v964
        %1029 = vst [vmem:[%s217 + $0x68] sm:$0xf] %v965
        %1030 = vst [vmem:[%s217 + $0x6c] sm:$0xf] %v966
        %1031 = vst [vmem:[%s217 + $0x70] sm:$0xf] %v967
        %1032 = vst [vmem:[%s217 + $0x74] sm:$0xf] %v968
        %1033 = vst [vmem:[%s217 + $0x78] sm:$0xf] %v969
        %1034 = vst [vmem:[%s217 + $0x7c] sm:$0xf] %v970
      $region40: #{discriminator2_patchs_forward.5} parent=31 // pred_fallthru
        _
      %s1035 = smul.u32 32, %s18
      %p1036 = scmp.lt.s32.totalorder %s1035, 63
      %s1037 = scalar_select %p1036, %s1035, 63
      %s1038 = smul.addr %s1037, 4
      %s1039 = scalar_lea.vmem %s3, %s1038
      // Predicated region
      $region41: #{discriminator2_patchs_forward.5} parent=31 // pred_check
        %p1040 = pneg %p119
      $region42: #{discriminator2_patchs_forward.5} parent=31 // pred_check_branch
        %1042 = sbr.rel (%p1040) target = $region44
      $region43: #{discriminator2_patchs_forward.5} parent=31 // pred_region
        %s1043 = smul.u32 32, %s18
      $region44: #{discriminator2_patchs_forward.5} parent=31 // pred_fallthru
        _
    $region32: #{discriminator2_patchs_forward.5} parent=5 // pred_fallthru
      _
    %p1044 = scmp.le.s32.totalorder 2, %s9
    // Predicated region
    $region45: #{discriminator2_patchs_forward.5} parent=5 // pred_check
      %p1045 = pneg %p1044
    $region46: #{discriminator2_patchs_forward.5} parent=5 // pred_check_branch
      %1047 = sbr.rel (%p1045) target = $region48
    $region47: #{discriminator2_patchs_forward.5} parent=5 // pred_region
      %s1048 = ssub.s32 %s9, 2
      // Predicated region
      $region49: #{discriminator2_patchs_forward.5} parent=47 // pred_check
        %p1049 = pneg %p125
      $region50: #{discriminator2_patchs_forward.5} parent=47 // pred_check_branch
        %1051 = sbr.rel (%p1049) target = $region52
      $region51: #{discriminator2_patchs_forward.5} parent=47 // pred_region
        %s1052 = smul.u32 32, %s20
        %p1053 = scmp.lt.s32.totalorder %s1052, 63
        %s1054 = scalar_select %p1053, %s1052, 63
        %s1055 = smul.addr %s1054, 4
        %s1056 = scalar_lea.vmem %s3, %s1055
      $region52: #{discriminator2_patchs_forward.5} parent=47 // pred_fallthru
        _
    $region48: #{discriminator2_patchs_forward.5} parent=5 // pred_fallthru
      _
  $region6: #{discriminator2_patchs_forward.5} parent=0 // loop_footer
    %s13 = sadd.s32 1, %s9
  $region7: #{discriminator2_patchs_forward.5} parent=0 // loop_footer_branch
    %8 = sbr.rel target = $region3
  $region8: #{discriminator2_patchs_forward.5} parent=0 // loop_exit
    _

// kernel: discriminator2_patchs_forward.4
$region0: #{discriminator2_patchs_forward.4}
  #allocation0 [shape = 'u32[]', space=smem, size = 0x4, offset = 0x4, fixed_abs, tag = 'smem constant byte address 0x4 - core index']
  #allocation1 [shape = 'u32[144,128]{1,0:T(1,128)}', space=vmem, size = 0x12000, scoped, tag = 'internal scratch']
  #allocation2 [shape = 'f32[1024,128]{1,0:T(8,128)}', space=vmem, size = 0x80000, scoped, tag = 'scratch operand']
  %s0 = inlined_call_operand.vmem [shape: bf16[2048,128], index: 0, kind: input, shape index: {}]
  %s1 = inlined_call_operand.vmem [shape: bf16[128,128], index: 1, kind: input, shape index: {}]
  %s2 = inlined_call_operand.vmem [shape: f32[1,128], index: 2, kind: input, shape index: {}]
  %s3 = inlined_call_operand.vmem [shape: bf16[2048,128], index: 3, kind: output, shape index: {}]
  %s4 = sld [smem:[#allocation0]]
  $region53: #{discriminator2_patchs_forward.4} parent=0
    _
  %s6 = ssub.s32 1, %s4
  %s7 = scalar_select 0, %s6, %s4
  loop: start=0, step=1, limit=4
  $region2: #{discriminator2_patchs_forward.4} parent=0 // loop_pre_header
    _
  $region3: #{discriminator2_patchs_forward.4} parent=0 // loop_header
    %s9 = sphi 0, %s13
    %p10 = scmp.ge.s32.totalorder %s9, 4
    %s16 = sphi 0, %s28
    %s17 = sphi 0, %s24
    %s18 = sphi 0, %s16
    %s19 = sphi 0, %s17
    %s20 = sphi 0, %s18
    %s21 = sphi 0, %s19
    %s33 = sphi 0, %s35
    %s36 = sphi 0, %s33
    %s37 = sphi 0, %s36
    %s53 = sphi 0, %s37
    %s59 = sphi 0, %s61
    %s62 = sphi 0, %s59
    %s63 = sphi 0, %s62
    %s79 = sphi 0, %s63
    %s83 = sphi 0, %s83
    %s85 = sphi 0, %s83
    %s86 = sphi 0, %s85
    %s100 = sphi 0, %s86
    %s106 = sphi 0, %s108
    %s109 = sphi 0, %s106
    %s110 = sphi 0, %s109
    %s126 = sphi 0, %s110
  $region4: #{discriminator2_patchs_forward.4} parent=0 // loop_header_branch
    %12 = sbr.rel (%p10) target = $region8
  $region5: #{discriminator2_patchs_forward.4} parent=0 // loop_body
    %s14 = ssub.s32 %s9, 1
    %s15 = ssub.s32 %s9, 2
    %s22 = sadd.s32 1, %s17
    %p23 = scmp.ge.s32.totalorder %s22, 1
    %s24 = scalar_select %p23, 0, %s22
    %s25 = sadd.s32 1, %s16
    %s26 = scalar_select %p23, %s25, %s16
    %p27 = scmp.ge.s32.totalorder %s26, 2
    %s28 = scalar_select %p27, 0, %s26
    %s29 = ssub.s32 %s16, %s28
    %s30 = ssub.s32 %s17, %s24
    %s31 = sor.u32 %s29, %s30
    %p32 = scmp.eq.s32.totalorder %s31, 0
    %s34 = sadd.s32 %s33, 1
    %s35 = scalar_select %p32, %s33, %s34
    %p38 = pneg %p32
    %p39 = scmp.eq.s32.totalorder %s9, 1
    %p40 = por %p38, %p39
    %p41 = scmp.ne.s32.totalorder %s33, %s36
    %p42 = scmp.eq.s32.totalorder %s9, 0
    %p43 = por %p41, %p42
    %p44 = scmp.ne.s32.totalorder %s33, %s36
    %p45 = scmp.eq.s32.totalorder %s14, 1
    %p46 = por %p44, %p45
    %p47 = scmp.ne.s32.totalorder %s36, %s37
    %p48 = scmp.eq.s32.totalorder %s14, 0
    %p49 = por %p47, %p48
    %p50 = scmp.ne.s32.totalorder %s36, %s37
    %p51 = scmp.eq.s32.totalorder %s15, 1
    %p52 = por %p50, %p51
    %p54 = scmp.ne.s32.totalorder %s37, %s53
    %p55 = scmp.eq.s32.totalorder %s15, 0
    %p56 = por %p54, %p55
    %s57 = ssub.s32 %s17, %s24
    %p58 = scmp.eq.s32.totalorder %s57, 0
    %s60 = sadd.s32 %s59, 1
    %s61 = scalar_select %p58, %s59, %s60
    %p64 = pneg %p58
    %p65 = scmp.eq.s32.totalorder %s9, 1
    %p66 = por %p64, %p65
    %p67 = scmp.ne.s32.totalorder %s59, %s62
    %p68 = scmp.eq.s32.totalorder %s9, 0
    %p69 = por %p67, %p68
    %p70 = scmp.ne.s32.totalorder %s59, %s62
    %p71 = scmp.eq.s32.totalorder %s14, 1
    %p72 = por %p70, %p71
    %p73 = scmp.ne.s32.totalorder %s62, %s63
    %p74 = scmp.eq.s32.totalorder %s14, 0
    %p75 = por %p73, %p74
    %p76 = scmp.ne.s32.totalorder %s62, %s63
    %p77 = scmp.eq.s32.totalorder %s15, 1
    %p78 = por %p76, %p77
    %p80 = scmp.ne.s32.totalorder %s63, %s79
    %p81 = scmp.eq.s32.totalorder %s15, 0
    %p82 = por %p80, %p81
    %s84 = sadd.s32 %s83, 1
    %p87 = scmp.eq.s32.totalorder %s9, 1
    %p88 = scmp.ne.s32.totalorder %s83, %s85
    %p89 = scmp.eq.s32.totalorder %s9, 0
    %p90 = por %p88, %p89
    %p91 = scmp.ne.s32.totalorder %s83, %s85
    %p92 = scmp.eq.s32.totalorder %s14, 1
    %p93 = por %p91, %p92
    %p94 = scmp.ne.s32.totalorder %s85, %s86
    %p95 = scmp.eq.s32.totalorder %s14, 0
    %p96 = por %p94, %p95
    %p97 = scmp.ne.s32.totalorder %s85, %s86
    %p98 = scmp.eq.s32.totalorder %s15, 1
    %p99 = por %p97, %p98
    %p101 = scmp.ne.s32.totalorder %s86, %s100
    %p102 = scmp.eq.s32.totalorder %s15, 0
    %p103 = por %p101, %p102
    %s104 = ssub.s32 %s16, %s28
    %p105 = scmp.eq.s32.totalorder %s104, 0
    %s107 = sadd.s32 %s106, 1
    %s108 = scalar_select %p105, %s106, %s107
    %p111 = pneg %p105
    %p112 = scmp.eq.s32.totalorder %s9, 1
    %p113 = por %p111, %p112
    %p114 = scmp.ne.s32.totalorder %s106, %s109
    %p115 = scmp.eq.s32.totalorder %s9, 0
    %p116 = por %p114, %p115
    %p117 = scmp.ne.s32.totalorder %s106, %s109
    %p118 = scmp.eq.s32.totalorder %s14, 1
    %p119 = por %p117, %p118
    %p120 = scmp.ne.s32.totalorder %s109, %s110
    %p121 = scmp.eq.s32.totalorder %s14, 0
    %p122 = por %p120, %p121
    %p123 = scmp.ne.s32.totalorder %s109, %s110
    %p124 = scmp.eq.s32.totalorder %s15, 1
    %p125 = por %p123, %p124
    %p127 = scmp.ne.s32.totalorder %s110, %s126
    %p128 = scmp.eq.s32.totalorder %s15, 0
    %p129 = por %p127, %p128
    %p130 = scmp.le.s32.totalorder 1, %s9
    %p131 = scmp.lt.s32.totalorder %s9, 3
    %p132 = pnand %p130, %p131
    %p133 = pneg %p132
    // Predicated region
    $region9: #{discriminator2_patchs_forward.4} parent=5 // pred_check
      _
    $region10: #{discriminator2_patchs_forward.4} parent=5 // pred_check_branch
      %135 = sbr.rel (%p132) target = $region12
    $region11: #{discriminator2_patchs_forward.4} parent=5 // pred_region
      %s136 = ssub.s32 %s9, 1
      // Predicated region
      $region13: #{discriminator2_patchs_forward.4} parent=11 // pred_check
        %p137 = pneg %p75
      $region14: #{discriminator2_patchs_forward.4} parent=11 // pred_check_branch
        %139 = sbr.rel (%p137) target = $region16
      $region15: #{discriminator2_patchs_forward.4} parent=11 // pred_region
        %s140 = smul.u32 16, %s19
        %p141 = scmp.lt.s32.totalorder %s140, 15
        %s142 = scalar_select %p141, %s140, 15
        %s143 = smul.addr %s142, 4
        %s144 = scalar_lea.vmem %s1, %s143
        %s145 = smul.u32 16, %s19
      $region16: #{discriminator2_patchs_forward.4} parent=11 // pred_fallthru
        _
      // Predicated region
      $region17: #{discriminator2_patchs_forward.4} parent=11 // pred_check
        %p146 = pneg %p96
      $region18: #{discriminator2_patchs_forward.4} parent=11 // pred_check_branch
        %148 = sbr.rel (%p146) target = $region20
      $region19: #{discriminator2_patchs_forward.4} parent=11 // pred_region
        _
      $region20: #{discriminator2_patchs_forward.4} parent=11 // pred_fallthru
        _
    $region12: #{discriminator2_patchs_forward.4} parent=5 // pred_fallthru
      _
    %p149 = scmp.lt.s32.totalorder %s9, 2
    // Predicated region
    $region21: #{discriminator2_patchs_forward.4} parent=5 // pred_check
      %p150 = pneg %p149
    $region22: #{discriminator2_patchs_forward.4} parent=5 // pred_check_branch
      %152 = sbr.rel (%p150) target = $region24
    $region23: #{discriminator2_patchs_forward.4} parent=5 // pred_region
      // Predicated region
      $region25: #{discriminator2_patchs_forward.4} parent=23 // pred_check
        %p153 = pneg %p43
      $region26: #{discriminator2_patchs_forward.4} parent=23 // pred_check_branch
        %155 = sbr.rel (%p153) target = $region28
      $region27: #{discriminator2_patchs_forward.4} parent=23 // pred_region
        %s156 = smul.u32 128, %s16
        %p157 = scmp.lt.s32.totalorder %s156, 255
        %s158 = scalar_select %p157, %s156, 255
        %p159 = scmp.lt.s32.totalorder %s17, 0
        %s160 = scalar_select %p159, %s17, 0
        %s161 = sadd.s32 %s160, %s158
        %s162 = smul.addr %s161, 4
        %s163 = scalar_lea.vmem %s0, %s162
        %s164 = smul.u32 128, %s16
      $region28: #{discriminator2_patchs_forward.4} parent=23 // pred_fallthru
        _
    $region24: #{discriminator2_patchs_forward.4} parent=5 // pred_fallthru
      _
    %p165 = scmp.le.s32.totalorder 1, %s9
    %p166 = scmp.lt.s32.totalorder %s9, 3
    %p167 = pnand %p165, %p166
    %p168 = pneg %p167
    // Predicated region
    $region29: #{discriminator2_patchs_forward.4} parent=5 // pred_check
      _
    $region30: #{discriminator2_patchs_forward.4} parent=5 // pred_check_branch
      %170 = sbr.rel (%p167) target = $region32
    $region31: #{discriminator2_patchs_forward.4} parent=5 // pred_region
      %s171 = ssub.s32 %s9, 1
      %s172 = smul.u32 128, %s18
      %p173 = scmp.lt.s32.totalorder %s172, 255
      %s174 = scalar_select %p173, %s172, 255
      %p175 = scmp.lt.s32.totalorder %s19, 0
      %s176 = scalar_select %p175, %s19, 0
      %s177 = sadd.s32 %s176, %s174
      %s178 = smul.addr %s177, 4
      %s179 = scalar_lea.vmem %s0, %s178
      %p180 = pneg %p49
      %p181 = pneg %p46
      %s182 = smul.u32 16, %s19
      %p183 = scmp.lt.s32.totalorder %s182, 15
      %s184 = scalar_select %p183, %s182, 15
      %s185 = smul.addr %s184, 4
      %s186 = scalar_lea.vmem %s1, %s185
      %p187 = pneg %p75
      %p188 = pneg %p72
      %p189 = pneg %p96
      %p190 = pneg %p93
      %p191 = pneg %p122
      %p192 = pneg %p119
      %s193 = smul.u32 128, %s18
      %p194 = scmp.lt.s32.totalorder %s193, 255
      %s195 = scalar_select %p194, %s193, 255
      %s196 = smul.addr %s195, 4
      %s197 = scalar_lea.vmem %s3, %s196
      %s198 = smul.u32 128, %s18
      %p199 = scmp.lt.s32.totalorder %s198, 255
      %s200 = scalar_select %p199, %s198, 255
      %p201 = scmp.lt.s32.totalorder %s19, 0
      %s202 = scalar_select %p201, %s19, 0
      %s203 = sadd.s32 %s202, %s200
      %s204 = smul.addr %s203, 4
      %s205 = scalar_lea.vmem %s0, %s204
      %s206 = smul.u32 128, %s18
      %s207 = smul.u32 16, %s19
      %p208 = scmp.lt.s32.totalorder %s207, 15
      %s209 = scalar_select %p208, %s207, 15
      %s210 = smul.addr %s209, 4
      %s211 = scalar_lea.vmem %s1, %s210
      %s212 = smul.u32 16, %s19
      %s213 = smul.u32 128, %s18
      %p214 = scmp.lt.s32.totalorder %s213, 255
      %s215 = scalar_select %p214, %s213, 255
      %s216 = smul.addr %s215, 4
      %s217 = scalar_lea.vmem %s3, %s216
      %s218 = smul.u32 128, %s18
      %p220 = scmp.eq.s32.totalorder %s19, 0
      // Predicated region
      $region33: #{discriminator2_patchs_forward.4} parent=31 // pred_check
        %p221 = pneg %p220
      $region34: #{discriminator2_patchs_forward.4} parent=31 // pred_check_branch
        %223 = sbr.rel (%p221) target = $region36
      $region35: #{discriminator2_patchs_forward.4} parent=31 // pred_region
        %224 = vst [vmem:[#allocation2] sm:$0xff] 0.0
        %225 = vst [vmem:[#allocation2 + $0x8] sm:$0xff] 0.0
        %226 = vst [vmem:[#allocation2 + $0x10] sm:$0xff] 0.0
        %227 = vst [vmem:[#allocation2 + $0x18] sm:$0xff] 0.0
        %228 = vst [vmem:[#allocation2 + $0x20] sm:$0xff] 0.0
        %229 = vst [vmem:[#allocation2 + $0x28] sm:$0xff] 0.0
        %230 = vst [vmem:[#allocation2 + $0x30] sm:$0xff] 0.0
        %231 = vst [vmem:[#allocation2 + $0x38] sm:$0xff] 0.0
        %232 = vst [vmem:[#allocation2 + $0x40] sm:$0xff] 0.0
        %233 = vst [vmem:[#allocation2 + $0x48] sm:$0xff] 0.0
        %234 = vst [vmem:[#allocation2 + $0x50] sm:$0xff] 0.0
        %235 = vst [vmem:[#allocation2 + $0x58] sm:$0xff] 0.0
        %236 = vst [vmem:[#allocation2 + $0x60] sm:$0xff] 0.0
        %237 = vst [vmem:[#allocation2 + $0x68] sm:$0xff] 0.0
        %238 = vst [vmem:[#allocation2 + $0x70] sm:$0xff] 0.0
        %239 = vst [vmem:[#allocation2 + $0x78] sm:$0xff] 0.0
        %240 = vst [vmem:[#allocation2 + $0x80] sm:$0xff] 0.0
        %241 = vst [vmem:[#allocation2 + $0x88] sm:$0xff] 0.0
        %242 = vst [vmem:[#allocation2 + $0x90] sm:$0xff] 0.0
        %243 = vst [vmem:[#allocation2 + $0x98] sm:$0xff] 0.0
        %244 = vst [vmem:[#allocation2 + $0xa0] sm:$0xff] 0.0
        %245 = vst [vmem:[#allocation2 + $0xa8] sm:$0xff] 0.0
        %246 = vst [vmem:[#allocation2 + $0xb0] sm:$0xff] 0.0
        %247 = vst [vmem:[#allocation2 + $0xb8] sm:$0xff] 0.0
        %248 = vst [vmem:[#allocation2 + $0xc0] sm:$0xff] 0.0
        %249 = vst [vmem:[#allocation2 + $0xc8] sm:$0xff] 0.0
        %250 = vst [vmem:[#allocation2 + $0xd0] sm:$0xff] 0.0
        %251 = vst [vmem:[#allocation2 + $0xd8] sm:$0xff] 0.0
        %252 = vst [vmem:[#allocation2 + $0xe0] sm:$0xff] 0.0
        %253 = vst [vmem:[#allocation2 + $0xe8] sm:$0xff] 0.0
        %254 = vst [vmem:[#allocation2 + $0xf0] sm:$0xff] 0.0
        %255 = vst [vmem:[#allocation2 + $0xf8] sm:$0xff] 0.0
        %256 = vst [vmem:[#allocation2 + $0x100] sm:$0xff] 0.0
        %257 = vst [vmem:[#allocation2 + $0x108] sm:$0xff] 0.0
        %258 = vst [vmem:[#allocation2 + $0x110] sm:$0xff] 0.0
        %259 = vst [vmem:[#allocation2 + $0x118] sm:$0xff] 0.0
        %260 = vst [vmem:[#allocation2 + $0x120] sm:$0xff] 0.0
        %261 = vst [vmem:[#allocation2 + $0x128] sm:$0xff] 0.0
        %262 = vst [vmem:[#allocation2 + $0x130] sm:$0xff] 0.0
        %263 = vst [vmem:[#allocation2 + $0x138] sm:$0xff] 0.0
        %264 = vst [vmem:[#allocation2 + $0x140] sm:$0xff] 0.0
        %265 = vst [vmem:[#allocation2 + $0x148] sm:$0xff] 0.0
        %266 = vst [vmem:[#allocation2 + $0x150] sm:$0xff] 0.0
        %267 = vst [vmem:[#allocation2 + $0x158] sm:$0xff] 0.0
        %268 = vst [vmem:[#allocation2 + $0x160] sm:$0xff] 0.0
        %269 = vst [vmem:[#allocation2 + $0x168] sm:$0xff] 0.0
        %270 = vst [vmem:[#allocation2 + $0x170] sm:$0xff] 0.0
        %271 = vst [vmem:[#allocation2 + $0x178] sm:$0xff] 0.0
        %272 = vst [vmem:[#allocation2 + $0x180] sm:$0xff] 0.0
        %273 = vst [vmem:[#allocation2 + $0x188] sm:$0xff] 0.0
        %274 = vst [vmem:[#allocation2 + $0x190] sm:$0xff] 0.0
        %275 = vst [vmem:[#allocation2 + $0x198] sm:$0xff] 0.0
        %276 = vst [vmem:[#allocation2 + $0x1a0] sm:$0xff] 0.0
        %277 = vst [vmem:[#allocation2 + $0x1a8] sm:$0xff] 0.0
        %278 = vst [vmem:[#allocation2 + $0x1b0] sm:$0xff] 0.0
        %279 = vst [vmem:[#allocation2 + $0x1b8] sm:$0xff] 0.0
        %280 = vst [vmem:[#allocation2 + $0x1c0] sm:$0xff] 0.0
        %281 = vst [vmem:[#allocation2 + $0x1c8] sm:$0xff] 0.0
        %282 = vst [vmem:[#allocation2 + $0x1d0] sm:$0xff] 0.0
        %283 = vst [vmem:[#allocation2 + $0x1d8] sm:$0xff] 0.0
        %284 = vst [vmem:[#allocation2 + $0x1e0] sm:$0xff] 0.0
        %285 = vst [vmem:[#allocation2 + $0x1e8] sm:$0xff] 0.0
        %286 = vst [vmem:[#allocation2 + $0x1f0] sm:$0xff] 0.0
        %287 = vst [vmem:[#allocation2 + $0x1f8] sm:$0xff] 0.0
        %288 = vst [vmem:[#allocation2 + $0x200] sm:$0xff] 0.0
        %289 = vst [vmem:[#allocation2 + $0x208] sm:$0xff] 0.0
        %290 = vst [vmem:[#allocation2 + $0x210] sm:$0xff] 0.0
        %291 = vst [vmem:[#allocation2 + $0x218] sm:$0xff] 0.0
        %292 = vst [vmem:[#allocation2 + $0x220] sm:$0xff] 0.0
        %293 = vst [vmem:[#allocation2 + $0x228] sm:$0xff] 0.0
        %294 = vst [vmem:[#allocation2 + $0x230] sm:$0xff] 0.0
        %295 = vst [vmem:[#allocation2 + $0x238] sm:$0xff] 0.0
        %296 = vst [vmem:[#allocation2 + $0x240] sm:$0xff] 0.0
        %297 = vst [vmem:[#allocation2 + $0x248] sm:$0xff] 0.0
        %298 = vst [vmem:[#allocation2 + $0x250] sm:$0xff] 0.0
        %299 = vst [vmem:[#allocation2 + $0x258] sm:$0xff] 0.0
        %300 = vst [vmem:[#allocation2 + $0x260] sm:$0xff] 0.0
        %301 = vst [vmem:[#allocation2 + $0x268] sm:$0xff] 0.0
        %302 = vst [vmem:[#allocation2 + $0x270] sm:$0xff] 0.0
        %303 = vst [vmem:[#allocation2 + $0x278] sm:$0xff] 0.0
        %304 = vst [vmem:[#allocation2 + $0x280] sm:$0xff] 0.0
        %305 = vst [vmem:[#allocation2 + $0x288] sm:$0xff] 0.0
        %306 = vst [vmem:[#allocation2 + $0x290] sm:$0xff] 0.0
        %307 = vst [vmem:[#allocation2 + $0x298] sm:$0xff] 0.0
        %308 = vst [vmem:[#allocation2 + $0x2a0] sm:$0xff] 0.0
        %309 = vst [vmem:[#allocation2 + $0x2a8] sm:$0xff] 0.0
        %310 = vst [vmem:[#allocation2 + $0x2b0] sm:$0xff] 0.0
        %311 = vst [vmem:[#allocation2 + $0x2b8] sm:$0xff] 0.0
        %312 = vst [vmem:[#allocation2 + $0x2c0] sm:$0xff] 0.0
        %313 = vst [vmem:[#allocation2 + $0x2c8] sm:$0xff] 0.0
        %314 = vst [vmem:[#allocation2 + $0x2d0] sm:$0xff] 0.0
        %315 = vst [vmem:[#allocation2 + $0x2d8] sm:$0xff] 0.0
        %316 = vst [vmem:[#allocation2 + $0x2e0] sm:$0xff] 0.0
        %317 = vst [vmem:[#allocation2 + $0x2e8] sm:$0xff] 0.0
        %318 = vst [vmem:[#allocation2 + $0x2f0] sm:$0xff] 0.0
        %319 = vst [vmem:[#allocation2 + $0x2f8] sm:$0xff] 0.0
        %320 = vst [vmem:[#allocation2 + $0x300] sm:$0xff] 0.0
        %321 = vst [vmem:[#allocation2 + $0x308] sm:$0xff] 0.0
        %322 = vst [vmem:[#allocation2 + $0x310] sm:$0xff] 0.0
        %323 = vst [vmem:[#allocation2 + $0x318] sm:$0xff] 0.0
        %324 = vst [vmem:[#allocation2 + $0x320] sm:$0xff] 0.0
        %325 = vst [vmem:[#allocation2 + $0x328] sm:$0xff] 0.0
        %326 = vst [vmem:[#allocation2 + $0x330] sm:$0xff] 0.0
        %327 = vst [vmem:[#allocation2 + $0x338] sm:$0xff] 0.0
        %328 = vst [vmem:[#allocation2 + $0x340] sm:$0xff] 0.0
        %329 = vst [vmem:[#allocation2 + $0x348] sm:$0xff] 0.0
        %330 = vst [vmem:[#allocation2 + $0x350] sm:$0xff] 0.0
        %331 = vst [vmem:[#allocation2 + $0x358] sm:$0xff] 0.0
        %332 = vst [vmem:[#allocation2 + $0x360] sm:$0xff] 0.0
        %333 = vst [vmem:[#allocation2 + $0x368] sm:$0xff] 0.0
        %334 = vst [vmem:[#allocation2 + $0x370] sm:$0xff] 0.0
        %335 = vst [vmem:[#allocation2 + $0x378] sm:$0xff] 0.0
        %336 = vst [vmem:[#allocation2 + $0x380] sm:$0xff] 0.0
        %337 = vst [vmem:[#allocation2 + $0x388] sm:$0xff] 0.0
        %338 = vst [vmem:[#allocation2 + $0x390] sm:$0xff] 0.0
        %339 = vst [vmem:[#allocation2 + $0x398] sm:$0xff] 0.0
        %340 = vst [vmem:[#allocation2 + $0x3a0] sm:$0xff] 0.0
        %341 = vst [vmem:[#allocation2 + $0x3a8] sm:$0xff] 0.0
        %342 = vst [vmem:[#allocation2 + $0x3b0] sm:$0xff] 0.0
        %343 = vst [vmem:[#allocation2 + $0x3b8] sm:$0xff] 0.0
        %344 = vst [vmem:[#allocation2 + $0x3c0] sm:$0xff] 0.0
        %345 = vst [vmem:[#allocation2 + $0x3c8] sm:$0xff] 0.0
        %346 = vst [vmem:[#allocation2 + $0x3d0] sm:$0xff] 0.0
        %347 = vst [vmem:[#allocation2 + $0x3d8] sm:$0xff] 0.0
        %348 = vst [vmem:[#allocation2 + $0x3e0] sm:$0xff] 0.0
        %349 = vst [vmem:[#allocation2 + $0x3e8] sm:$0xff] 0.0
        %350 = vst [vmem:[#allocation2 + $0x3f0] sm:$0xff] 0.0
        %351 = vst [vmem:[#allocation2 + $0x3f8] sm:$0xff] 0.0
      $region36: #{discriminator2_patchs_forward.4} parent=31 // pred_fallthru
        _
      %v352 = vld [vmem:[#allocation2] sm:$0xff]
      %v353 = vld [vmem:[#allocation2 + $0x8] sm:$0xff]
      %v354 = vld [vmem:[#allocation2 + $0x10] sm:$0xff]
      %v355 = vld [vmem:[#allocation2 + $0x18] sm:$0xff]
      %v356 = vld [vmem:[#allocation2 + $0x20] sm:$0xff]
      %v357 = vld [vmem:[#allocation2 + $0x28] sm:$0xff]
      %v358 = vld [vmem:[#allocation2 + $0x30] sm:$0xff]
      %v359 = vld [vmem:[#allocation2 + $0x38] sm:$0xff]
      %v360 = vld [vmem:[#allocation2 + $0x40] sm:$0xff]
      %v361 = vld [vmem:[#allocation2 + $0x48] sm:$0xff]
      %v362 = vld [vmem:[#allocation2 + $0x50] sm:$0xff]
      %v363 = vld [vmem:[#allocation2 + $0x58] sm:$0xff]
      %v364 = vld [vmem:[#allocation2 + $0x60] sm:$0xff]
      %v365 = vld [vmem:[#allocation2 + $0x68] sm:$0xff]
      %v366 = vld [vmem:[#allocation2 + $0x70] sm:$0xff]
      %v367 = vld [vmem:[#allocation2 + $0x78] sm:$0xff]
      %v368 = vld [vmem:[#allocation2 + $0x80] sm:$0xff]
      %v369 = vld [vmem:[#allocation2 + $0x88] sm:$0xff]
      %v370 = vld [vmem:[#allocation2 + $0x90] sm:$0xff]
      %v371 = vld [vmem:[#allocation2 + $0x98] sm:$0xff]
      %v372 = vld [vmem:[#allocation2 + $0xa0] sm:$0xff]
      %v373 = vld [vmem:[#allocation2 + $0xa8] sm:$0xff]
      %v374 = vld [vmem:[#allocation2 + $0xb0] sm:$0xff]
      %v375 = vld [vmem:[#allocation2 + $0xb8] sm:$0xff]
      %v376 = vld [vmem:[#allocation2 + $0xc0] sm:$0xff]
      %v377 = vld [vmem:[#allocation2 + $0xc8] sm:$0xff]
      %v378 = vld [vmem:[#allocation2 + $0xd0] sm:$0xff]
      %v379 = vld [vmem:[#allocation2 + $0xd8] sm:$0xff]
      %v380 = vld [vmem:[#allocation2 + $0xe0] sm:$0xff]
      %v381 = vld [vmem:[#allocation2 + $0xe8] sm:$0xff]
      %v382 = vld [vmem:[#allocation2 + $0xf0] sm:$0xff]
      %v383 = vld [vmem:[#allocation2 + $0xf8] sm:$0xff]
      %v384 = vld [vmem:[#allocation2 + $0x100] sm:$0xff]
      %v385 = vld [vmem:[#allocation2 + $0x108] sm:$0xff]
      %v386 = vld [vmem:[#allocation2 + $0x110] sm:$0xff]
      %v387 = vld [vmem:[#allocation2 + $0x118] sm:$0xff]
      %v388 = vld [vmem:[#allocation2 + $0x120] sm:$0xff]
      %v389 = vld [vmem:[#allocation2 + $0x128] sm:$0xff]
      %v390 = vld [vmem:[#allocation2 + $0x130] sm:$0xff]
      %v391 = vld [vmem:[#allocation2 + $0x138] sm:$0xff]
      %v392 = vld [vmem:[#allocation2 + $0x140] sm:$0xff]
      %v393 = vld [vmem:[#allocation2 + $0x148] sm:$0xff]
      %v394 = vld [vmem:[#allocation2 + $0x150] sm:$0xff]
      %v395 = vld [vmem:[#allocation2 + $0x158] sm:$0xff]
      %v396 = vld [vmem:[#allocation2 + $0x160] sm:$0xff]
      %v397 = vld [vmem:[#allocation2 + $0x168] sm:$0xff]
      %v398 = vld [vmem:[#allocation2 + $0x170] sm:$0xff]
      %v399 = vld [vmem:[#allocation2 + $0x178] sm:$0xff]
      %v400 = vld [vmem:[#allocation2 + $0x180] sm:$0xff]
      %v401 = vld [vmem:[#allocation2 + $0x188] sm:$0xff]
      %v402 = vld [vmem:[#allocation2 + $0x190] sm:$0xff]
      %v403 = vld [vmem:[#allocation2 + $0x198] sm:$0xff]
      %v404 = vld [vmem:[#allocation2 + $0x1a0] sm:$0xff]
      %v405 = vld [vmem:[#allocation2 + $0x1a8] sm:$0xff]
      %v406 = vld [vmem:[#allocation2 + $0x1b0] sm:$0xff]
      %v407 = vld [vmem:[#allocation2 + $0x1b8] sm:$0xff]
      %v408 = vld [vmem:[#allocation2 + $0x1c0] sm:$0xff]
      %v409 = vld [vmem:[#allocation2 + $0x1c8] sm:$0xff]
      %v410 = vld [vmem:[#allocation2 + $0x1d0] sm:$0xff]
      %v411 = vld [vmem:[#allocation2 + $0x1d8] sm:$0xff]
      %v412 = vld [vmem:[#allocation2 + $0x1e0] sm:$0xff]
      %v413 = vld [vmem:[#allocation2 + $0x1e8] sm:$0xff]
      %v414 = vld [vmem:[#allocation2 + $0x1f0] sm:$0xff]
      %v415 = vld [vmem:[#allocation2 + $0x1f8] sm:$0xff]
      %v416 = vld [vmem:[#allocation2 + $0x200] sm:$0xff]
      %v417 = vld [vmem:[#allocation2 + $0x208] sm:$0xff]
      %v418 = vld [vmem:[#allocation2 + $0x210] sm:$0xff]
      %v419 = vld [vmem:[#allocation2 + $0x218] sm:$0xff]
      %v420 = vld [vmem:[#allocation2 + $0x220] sm:$0xff]
      %v421 = vld [vmem:[#allocation2 + $0x228] sm:$0xff]
      %v422 = vld [vmem:[#allocation2 + $0x230] sm:$0xff]
      %v423 = vld [vmem:[#allocation2 + $0x238] sm:$0xff]
      %v424 = vld [vmem:[#allocation2 + $0x240] sm:$0xff]
      %v425 = vld [vmem:[#allocation2 + $0x248] sm:$0xff]
      %v426 = vld [vmem:[#allocation2 + $0x250] sm:$0xff]
      %v427 = vld [vmem:[#allocation2 + $0x258] sm:$0xff]
      %v428 = vld [vmem:[#allocation2 + $0x260] sm:$0xff]
      %v429 = vld [vmem:[#allocation2 + $0x268] sm:$0xff]
      %v430 = vld [vmem:[#allocation2 + $0x270] sm:$0xff]
      %v431 = vld [vmem:[#allocation2 + $0x278] sm:$0xff]
      %v432 = vld [vmem:[#allocation2 + $0x280] sm:$0xff]
      %v433 = vld [vmem:[#allocation2 + $0x288] sm:$0xff]
      %v434 = vld [vmem:[#allocation2 + $0x290] sm:$0xff]
      %v435 = vld [vmem:[#allocation2 + $0x298] sm:$0xff]
      %v436 = vld [vmem:[#allocation2 + $0x2a0] sm:$0xff]
      %v437 = vld [vmem:[#allocation2 + $0x2a8] sm:$0xff]
      %v438 = vld [vmem:[#allocation2 + $0x2b0] sm:$0xff]
      %v439 = vld [vmem:[#allocation2 + $0x2b8] sm:$0xff]
      %v440 = vld [vmem:[#allocation2 + $0x2c0] sm:$0xff]
      %v441 = vld [vmem:[#allocation2 + $0x2c8] sm:$0xff]
      %v442 = vld [vmem:[#allocation2 + $0x2d0] sm:$0xff]
      %v443 = vld [vmem:[#allocation2 + $0x2d8] sm:$0xff]
      %v444 = vld [vmem:[#allocation2 + $0x2e0] sm:$0xff]
      %v445 = vld [vmem:[#allocation2 + $0x2e8] sm:$0xff]
      %v446 = vld [vmem:[#allocation2 + $0x2f0] sm:$0xff]
      %v447 = vld [vmem:[#allocation2 + $0x2f8] sm:$0xff]
      %v448 = vld [vmem:[#allocation2 + $0x300] sm:$0xff]
      %v449 = vld [vmem:[#allocation2 + $0x308] sm:$0xff]
      %v450 = vld [vmem:[#allocation2 + $0x310] sm:$0xff]
      %v451 = vld [vmem:[#allocation2 + $0x318] sm:$0xff]
      %v452 = vld [vmem:[#allocation2 + $0x320] sm:$0xff]
      %v453 = vld [vmem:[#allocation2 + $0x328] sm:$0xff]
      %v454 = vld [vmem:[#allocation2 + $0x330] sm:$0xff]
      %v455 = vld [vmem:[#allocation2 + $0x338] sm:$0xff]
      %v456 = vld [vmem:[#allocation2 + $0x340] sm:$0xff]
      %v457 = vld [vmem:[#allocation2 + $0x348] sm:$0xff]
      %v458 = vld [vmem:[#allocation2 + $0x350] sm:$0xff]
      %v459 = vld [vmem:[#allocation2 + $0x358] sm:$0xff]
      %v460 = vld [vmem:[#allocation2 + $0x360] sm:$0xff]
      %v461 = vld [vmem:[#allocation2 + $0x368] sm:$0xff]
      %v462 = vld [vmem:[#allocation2 + $0x370] sm:$0xff]
      %v463 = vld [vmem:[#allocation2 + $0x378] sm:$0xff]
      %v464 = vld [vmem:[#allocation2 + $0x380] sm:$0xff]
      %v465 = vld [vmem:[#allocation2 + $0x388] sm:$0xff]
      %v466 = vld [vmem:[#allocation2 + $0x390] sm:$0xff]
      %v467 = vld [vmem:[#allocation2 + $0x398] sm:$0xff]
      %v468 = vld [vmem:[#allocation2 + $0x3a0] sm:$0xff]
      %v469 = vld [vmem:[#allocation2 + $0x3a8] sm:$0xff]
      %v470 = vld [vmem:[#allocation2 + $0x3b0] sm:$0xff]
      %v471 = vld [vmem:[#allocation2 + $0x3b8] sm:$0xff]
      %v472 = vld [vmem:[#allocation2 + $0x3c0] sm:$0xff]
      %v473 = vld [vmem:[#allocation2 + $0x3c8] sm:$0xff]
      %v474 = vld [vmem:[#allocation2 + $0x3d0] sm:$0xff]
      %v475 = vld [vmem:[#allocation2 + $0x3d8] sm:$0xff]
      %v476 = vld [vmem:[#allocation2 + $0x3e0] sm:$0xff]
      %v477 = vld [vmem:[#allocation2 + $0x3e8] sm:$0xff]
      %v478 = vld [vmem:[#allocation2 + $0x3f0] sm:$0xff]
      %v479 = vld [vmem:[#allocation2 + $0x3f8] sm:$0xff]
      %v480 = vld [vmem:[%s205] sm:$0xf]
      %v481 = vld [vmem:[%s205 + $0x4] sm:$0xf]
      %v482 = vld [vmem:[%s205 + $0x8] sm:$0xf]
      %v483 = vld [vmem:[%s205 + $0xc] sm:$0xf]
      %v484 = vld [vmem:[%s205 + $0x10] sm:$0xf]
      %v485 = vld [vmem:[%s205 + $0x14] sm:$0xf]
      %v486 = vld [vmem:[%s205 + $0x18] sm:$0xf]
      %v487 = vld [vmem:[%s205 + $0x1c] sm:$0xf]
      %v488 = vld [vmem:[%s205 + $0x20] sm:$0xf]
      %v489 = vld [vmem:[%s205 + $0x24] sm:$0xf]
      %v490 = vld [vmem:[%s205 + $0x28] sm:$0xf]
      %v491 = vld [vmem:[%s205 + $0x2c] sm:$0xf]
      %v492 = vld [vmem:[%s205 + $0x30] sm:$0xf]
      %v493 = vld [vmem:[%s205 + $0x34] sm:$0xf]
      %v494 = vld [vmem:[%s205 + $0x38] sm:$0xf]
      %v495 = vld [vmem:[%s205 + $0x3c] sm:$0xf]
      %v496 = vld [vmem:[%s205 + $0x40] sm:$0xf]
      %v497 = vld [vmem:[%s205 + $0x44] sm:$0xf]
      %v498 = vld [vmem:[%s205 + $0x48] sm:$0xf]
      %v499 = vld [vmem:[%s205 + $0x4c] sm:$0xf]
      %v500 = vld [vmem:[%s205 + $0x50] sm:$0xf]
      %v501 = vld [vmem:[%s205 + $0x54] sm:$0xf]
      %v502 = vld [vmem:[%s205 + $0x58] sm:$0xf]
      %v503 = vld [vmem:[%s205 + $0x5c] sm:$0xf]
      %v504 = vld [vmem:[%s205 + $0x60] sm:$0xf]
      %v505 = vld [vmem:[%s205 + $0x64] sm:$0xf]
      %v506 = vld [vmem:[%s205 + $0x68] sm:$0xf]
      %v507 = vld [vmem:[%s205 + $0x6c] sm:$0xf]
      %v508 = vld [vmem:[%s205 + $0x70] sm:$0xf]
      %v509 = vld [vmem:[%s205 + $0x74] sm:$0xf]
      %v510 = vld [vmem:[%s205 + $0x78] sm:$0xf]
      %v511 = vld [vmem:[%s205 + $0x7c] sm:$0xf]
      %v512 = vld [vmem:[%s205 + $0x80] sm:$0xf]
      %v513 = vld [vmem:[%s205 + $0x84] sm:$0xf]
      %v514 = vld [vmem:[%s205 + $0x88] sm:$0xf]
      %v515 = vld [vmem:[%s205 + $0x8c] sm:$0xf]
      %v516 = vld [vmem:[%s205 + $0x90] sm:$0xf]
      %v517 = vld [vmem:[%s205 + $0x94] sm:$0xf]
      %v518 = vld [vmem:[%s205 + $0x98] sm:$0xf]
      %v519 = vld [vmem:[%s205 + $0x9c] sm:$0xf]
      %v520 = vld [vmem:[%s205 + $0xa0] sm:$0xf]
      %v521 = vld [vmem:[%s205 + $0xa4] sm:$0xf]
      %v522 = vld [vmem:[%s205 + $0xa8] sm:$0xf]
      %v523 = vld [vmem:[%s205 + $0xac] sm:$0xf]
      %v524 = vld [vmem:[%s205 + $0xb0] sm:$0xf]
      %v525 = vld [vmem:[%s205 + $0xb4] sm:$0xf]
      %v526 = vld [vmem:[%s205 + $0xb8] sm:$0xf]
      %v527 = vld [vmem:[%s205 + $0xbc] sm:$0xf]
      %v528 = vld [vmem:[%s205 + $0xc0] sm:$0xf]
      %v529 = vld [vmem:[%s205 + $0xc4] sm:$0xf]
      %v530 = vld [vmem:[%s205 + $0xc8] sm:$0xf]
      %v531 = vld [vmem:[%s205 + $0xcc] sm:$0xf]
      %v532 = vld [vmem:[%s205 + $0xd0] sm:$0xf]
      %v533 = vld [vmem:[%s205 + $0xd4] sm:$0xf]
      %v534 = vld [vmem:[%s205 + $0xd8] sm:$0xf]
      %v535 = vld [vmem:[%s205 + $0xdc] sm:$0xf]
      %v536 = vld [vmem:[%s205 + $0xe0] sm:$0xf]
      %v537 = vld [vmem:[%s205 + $0xe4] sm:$0xf]
      %v538 = vld [vmem:[%s205 + $0xe8] sm:$0xf]
      %v539 = vld [vmem:[%s205 + $0xec] sm:$0xf]
      %v540 = vld [vmem:[%s205 + $0xf0] sm:$0xf]
      %v541 = vld [vmem:[%s205 + $0xf4] sm:$0xf]
      %v542 = vld [vmem:[%s205 + $0xf8] sm:$0xf]
      %v543 = vld [vmem:[%s205 + $0xfc] sm:$0xf]
      %v544 = vld [vmem:[%s205 + $0x100] sm:$0xf]
      %v545 = vld [vmem:[%s205 + $0x104] sm:$0xf]
      %v546 = vld [vmem:[%s205 + $0x108] sm:$0xf]
      %v547 = vld [vmem:[%s205 + $0x10c] sm:$0xf]
      %v548 = vld [vmem:[%s205 + $0x110] sm:$0xf]
      %v549 = vld [vmem:[%s205 + $0x114] sm:$0xf]
      %v550 = vld [vmem:[%s205 + $0x118] sm:$0xf]
      %v551 = vld [vmem:[%s205 + $0x11c] sm:$0xf]
      %v552 = vld [vmem:[%s205 + $0x120] sm:$0xf]
      %v553 = vld [vmem:[%s205 + $0x124] sm:$0xf]
      %v554 = vld [vmem:[%s205 + $0x128] sm:$0xf]
      %v555 = vld [vmem:[%s205 + $0x12c] sm:$0xf]
      %v556 = vld [vmem:[%s205 + $0x130] sm:$0xf]
      %v557 = vld [vmem:[%s205 + $0x134] sm:$0xf]
      %v558 = vld [vmem:[%s205 + $0x138] sm:$0xf]
      %v559 = vld [vmem:[%s205 + $0x13c] sm:$0xf]
      %v560 = vld [vmem:[%s205 + $0x140] sm:$0xf]
      %v561 = vld [vmem:[%s205 + $0x144] sm:$0xf]
      %v562 = vld [vmem:[%s205 + $0x148] sm:$0xf]
      %v563 = vld [vmem:[%s205 + $0x14c] sm:$0xf]
      %v564 = vld [vmem:[%s205 + $0x150] sm:$0xf]
      %v565 = vld [vmem:[%s205 + $0x154] sm:$0xf]
      %v566 = vld [vmem:[%s205 + $0x158] sm:$0xf]
      %v567 = vld [vmem:[%s205 + $0x15c] sm:$0xf]
      %v568 = vld [vmem:[%s205 + $0x160] sm:$0xf]
      %v569 = vld [vmem:[%s205 + $0x164] sm:$0xf]
      %v570 = vld [vmem:[%s205 + $0x168] sm:$0xf]
      %v571 = vld [vmem:[%s205 + $0x16c] sm:$0xf]
      %v572 = vld [vmem:[%s205 + $0x170] sm:$0xf]
      %v573 = vld [vmem:[%s205 + $0x174] sm:$0xf]
      %v574 = vld [vmem:[%s205 + $0x178] sm:$0xf]
      %v575 = vld [vmem:[%s205 + $0x17c] sm:$0xf]
      %v576 = vld [vmem:[%s205 + $0x180] sm:$0xf]
      %v577 = vld [vmem:[%s205 + $0x184] sm:$0xf]
      %v578 = vld [vmem:[%s205 + $0x188] sm:$0xf]
      %v579 = vld [vmem:[%s205 + $0x18c] sm:$0xf]
      %v580 = vld [vmem:[%s205 + $0x190] sm:$0xf]
      %v581 = vld [vmem:[%s205 + $0x194] sm:$0xf]
      %v582 = vld [vmem:[%s205 + $0x198] sm:$0xf]
      %v583 = vld [vmem:[%s205 + $0x19c] sm:$0xf]
      %v584 = vld [vmem:[%s205 + $0x1a0] sm:$0xf]
      %v585 = vld [vmem:[%s205 + $0x1a4] sm:$0xf]
      %v586 = vld [vmem:[%s205 + $0x1a8] sm:$0xf]
      %v587 = vld [vmem:[%s205 + $0x1ac] sm:$0xf]
      %v588 = vld [vmem:[%s205 + $0x1b0] sm:$0xf]
      %v589 = vld [vmem:[%s205 + $0x1b4] sm:$0xf]
      %v590 = vld [vmem:[%s205 + $0x1b8] sm:$0xf]
      %v591 = vld [vmem:[%s205 + $0x1bc] sm:$0xf]
      %v592 = vld [vmem:[%s205 + $0x1c0] sm:$0xf]
      %v593 = vld [vmem:[%s205 + $0x1c4] sm:$0xf]
      %v594 = vld [vmem:[%s205 + $0x1c8] sm:$0xf]
      %v595 = vld [vmem:[%s205 + $0x1cc] sm:$0xf]
      %v596 = vld [vmem:[%s205 + $0x1d0] sm:$0xf]
      %v597 = vld [vmem:[%s205 + $0x1d4] sm:$0xf]
      %v598 = vld [vmem:[%s205 + $0x1d8] sm:$0xf]
      %v599 = vld [vmem:[%s205 + $0x1dc] sm:$0xf]
      %v600 = vld [vmem:[%s205 + $0x1e0] sm:$0xf]
      %v601 = vld [vmem:[%s205 + $0x1e4] sm:$0xf]
      %v602 = vld [vmem:[%s205 + $0x1e8] sm:$0xf]
      %v603 = vld [vmem:[%s205 + $0x1ec] sm:$0xf]
      %v604 = vld [vmem:[%s205 + $0x1f0] sm:$0xf]
      %v605 = vld [vmem:[%s205 + $0x1f4] sm:$0xf]
      %v606 = vld [vmem:[%s205 + $0x1f8] sm:$0xf]
      %v607 = vld [vmem:[%s205 + $0x1fc] sm:$0xf]
      %v608 = vld [vmem:[%s211] sm:$0xf]
      %v609 = vld [vmem:[%s211 + $0x4] sm:$0xf]
      %v610 = vld [vmem:[%s211 + $0x8] sm:$0xf]
      %v611 = vld [vmem:[%s211 + $0xc] sm:$0xf]
      %v612 = vld [vmem:[%s211 + $0x10] sm:$0xf]
      %v613 = vld [vmem:[%s211 + $0x14] sm:$0xf]
      %v614 = vld [vmem:[%s211 + $0x18] sm:$0xf]
      %v615 = vld [vmem:[%s211 + $0x1c] sm:$0xf]
      %v616 = vld [vmem:[%s211 + $0x20] sm:$0xf]
      %v617 = vld [vmem:[%s211 + $0x24] sm:$0xf]
      %v618 = vld [vmem:[%s211 + $0x28] sm:$0xf]
      %v619 = vld [vmem:[%s211 + $0x2c] sm:$0xf]
      %v620 = vld [vmem:[%s211 + $0x30] sm:$0xf]
      %v621 = vld [vmem:[%s211 + $0x34] sm:$0xf]
      %v622 = vld [vmem:[%s211 + $0x38] sm:$0xf]
      %v623 = vld [vmem:[%s211 + $0x3c] sm:$0xf]
      %v752 = vunpack.c.l.b16 %v480
      %v753 = vunpack.c.l.b16 %v481
      %v754 = vunpack.c.l.b16 %v482
      %v755 = vunpack.c.l.b16 %v483
      %v756 = vunpack.c.l.b16 %v484
      %v757 = vunpack.c.l.b16 %v485
      %v758 = vunpack.c.l.b16 %v486
      %v759 = vunpack.c.l.b16 %v487
      %v760 = vunpack.c.l.b16 %v488
      %v761 = vunpack.c.l.b16 %v489
      %v762 = vunpack.c.l.b16 %v490
      %v763 = vunpack.c.l.b16 %v491
      %v764 = vunpack.c.l.b16 %v492
      %v765 = vunpack.c.l.b16 %v493
      %v766 = vunpack.c.l.b16 %v494
      %v767 = vunpack.c.l.b16 %v495
      %v768 = vunpack.c.l.b16 %v496
      %v769 = vunpack.c.l.b16 %v497
      %v770 = vunpack.c.l.b16 %v498
      %v771 = vunpack.c.l.b16 %v499
      %v772 = vunpack.c.l.b16 %v500
      %v773 = vunpack.c.l.b16 %v501
      %v774 = vunpack.c.l.b16 %v502
      %v775 = vunpack.c.l.b16 %v503
      %v776 = vunpack.c.l.b16 %v504
      %v777 = vunpack.c.l.b16 %v505
      %v778 = vunpack.c.l.b16 %v506
      %v779 = vunpack.c.l.b16 %v507
      %v780 = vunpack.c.l.b16 %v508
      %v781 = vunpack.c.l.b16 %v509
      %v782 = vunpack.c.l.b16 %v510
      %v783 = vunpack.c.l.b16 %v511
      %v784 = vunpack.c.l.b16 %v512
      %v785 = vunpack.c.l.b16 %v513
      %v786 = vunpack.c.l.b16 %v514
      %v787 = vunpack.c.l.b16 %v515
      %v788 = vunpack.c.l.b16 %v516
      %v789 = vunpack.c.l.b16 %v517
      %v790 = vunpack.c.l.b16 %v518
      %v791 = vunpack.c.l.b16 %v519
      %v792 = vunpack.c.l.b16 %v520
      %v793 = vunpack.c.l.b16 %v521
      %v794 = vunpack.c.l.b16 %v522
      %v795 = vunpack.c.l.b16 %v523
      %v796 = vunpack.c.l.b16 %v524
      %v797 = vunpack.c.l.b16 %v525
      %v798 = vunpack.c.l.b16 %v526
      %v799 = vunpack.c.l.b16 %v527
      %v800 = vunpack.c.l.b16 %v528
      %v801 = vunpack.c.l.b16 %v529
      %v802 = vunpack.c.l.b16 %v530
      %v803 = vunpack.c.l.b16 %v531
      %v804 = vunpack.c.l.b16 %v532
      %v805 = vunpack.c.l.b16 %v533
      %v806 = vunpack.c.l.b16 %v534
      %v807 = vunpack.c.l.b16 %v535
      %v808 = vunpack.c.l.b16 %v536
      %v809 = vunpack.c.l.b16 %v537
      %v810 = vunpack.c.l.b16 %v538
      %v811 = vunpack.c.l.b16 %v539
      %v812 = vunpack.c.l.b16 %v540
      %v813 = vunpack.c.l.b16 %v541
      %v814 = vunpack.c.l.b16 %v542
      %v815 = vunpack.c.l.b16 %v543
      %v816 = vunpack.c.l.b16 %v544
      %v817 = vunpack.c.l.b16 %v545
      %v818 = vunpack.c.l.b16 %v546
      %v819 = vunpack.c.l.b16 %v547
      %v820 = vunpack.c.l.b16 %v548
      %v821 = vunpack.c.l.b16 %v549
      %v822 = vunpack.c.l.b16 %v550
      %v823 = vunpack.c.l.b16 %v551
      %v824 = vunpack.c.l.b16 %v552
      %v825 = vunpack.c.l.b16 %v553
      %v826 = vunpack.c.l.b16 %v554
      %v827 = vunpack.c.l.b16 %v555
      %v828 = vunpack.c.l.b16 %v556
      %v829 = vunpack.c.l.b16 %v557
      %v830 = vunpack.c.l.b16 %v558
      %v831 = vunpack.c.l.b16 %v559
      %v832 = vunpack.c.l.b16 %v560
      %v833 = vunpack.c.l.b16 %v561
      %v834 = vunpack.c.l.b16 %v562
      %v835 = vunpack.c.l.b16 %v563
      %v836 = vunpack.c.l.b16 %v564
      %v837 = vunpack.c.l.b16 %v565
      %v838 = vunpack.c.l.b16 %v566
      %v839 = vunpack.c.l.b16 %v567
      %v840 = vunpack.c.l.b16 %v568
      %v841 = vunpack.c.l.b16 %v569
      %v842 = vunpack.c.l.b16 %v570
      %v843 = vunpack.c.l.b16 %v571
      %v844 = vunpack.c.l.b16 %v572
      %v845 = vunpack.c.l.b16 %v573
      %v846 = vunpack.c.l.b16 %v574
      %v847 = vunpack.c.l.b16 %v575
      %v848 = vunpack.c.l.b16 %v576
      %v849 = vunpack.c.l.b16 %v577
      %v850 = vunpack.c.l.b16 %v578
      %v851 = vunpack.c.l.b16 %v579
      %v852 = vunpack.c.l.b16 %v580
      %v853 = vunpack.c.l.b16 %v581
      %v854 = vunpack.c.l.b16 %v582
      %v855 = vunpack.c.l.b16 %v583
      %v856 = vunpack.c.l.b16 %v584
      %v857 = vunpack.c.l.b16 %v585
      %v858 = vunpack.c.l.b16 %v586
      %v859 = vunpack.c.l.b16 %v587
      %v860 = vunpack.c.l.b16 %v588
      %v861 = vunpack.c.l.b16 %v589
      %v862 = vunpack.c.l.b16 %v590
      %v863 = vunpack.c.l.b16 %v591
      %v864 = vunpack.c.l.b16 %v592
      %v865 = vunpack.c.l.b16 %v593
      %v866 = vunpack.c.l.b16 %v594
      %v867 = vunpack.c.l.b16 %v595
      %v868 = vunpack.c.l.b16 %v596
      %v869 = vunpack.c.l.b16 %v597
      %v870 = vunpack.c.l.b16 %v598
      %v871 = vunpack.c.l.b16 %v599
      %v872 = vunpack.c.l.b16 %v600
      %v873 = vunpack.c.l.b16 %v601
      %v874 = vunpack.c.l.b16 %v602
      %v875 = vunpack.c.l.b16 %v603
      %v876 = vunpack.c.l.b16 %v604
      %v877 = vunpack.c.l.b16 %v605
      %v878 = vunpack.c.l.b16 %v606
      %v879 = vunpack.c.l.b16 %v607
      %v880 = vpack.c.b16 %v753, %v752
      %v881 = vpack.c.b16 %v755, %v754
      %v882 = vpack.c.b16 %v757, %v756
      %v883 = vpack.c.b16 %v759, %v758
      %v884 = vpack.c.b16 %v761, %v760
      %v885 = vpack.c.b16 %v763, %v762
      %v886 = vpack.c.b16 %v765, %v764
      %v887 = vpack.c.b16 %v767, %v766
      %v888 = vpack.c.b16 %v769, %v768
      %v889 = vpack.c.b16 %v771, %v770
      %v890 = vpack.c.b16 %v773, %v772
      %v891 = vpack.c.b16 %v775, %v774
      %v892 = vpack.c.b16 %v777, %v776
      %v893 = vpack.c.b16 %v779, %v778
      %v894 = vpack.c.b16 %v781, %v780
      %v895 = vpack.c.b16 %v783, %v782
      %v896 = vpack.c.b16 %v785, %v784
      %v897 = vpack.c.b16 %v787, %v786
      %v898 = vpack.c.b16 %v789, %v788
      %v899 = vpack.c.b16 %v791, %v790
      %v900 = vpack.c.b16 %v793, %v792
      %v901 = vpack.c.b16 %v795, %v794
      %v902 = vpack.c.b16 %v797, %v796
      %v903 = vpack.c.b16 %v799, %v798
      %v904 = vpack.c.b16 %v801, %v800
      %v905 = vpack.c.b16 %v803, %v802
      %v906 = vpack.c.b16 %v805, %v804
      %v907 = vpack.c.b16 %v807, %v806
      %v908 = vpack.c.b16 %v809, %v808
      %v909 = vpack.c.b16 %v811, %v810
      %v910 = vpack.c.b16 %v813, %v812
      %v911 = vpack.c.b16 %v815, %v814
      %v912 = vpack.c.b16 %v817, %v816
      %v913 = vpack.c.b16 %v819, %v818
      %v914 = vpack.c.b16 %v821, %v820
      %v915 = vpack.c.b16 %v823, %v822
      %v916 = vpack.c.b16 %v825, %v824
      %v917 = vpack.c.b16 %v827, %v826
      %v918 = vpack.c.b16 %v829, %v828
      %v919 = vpack.c.b16 %v831, %v830
      %v920 = vpack.c.b16 %v833, %v832
      %v921 = vpack.c.b16 %v835, %v834
      %v922 = vpack.c.b16 %v837, %v836
      %v923 = vpack.c.b16 %v839, %v838
      %v924 = vpack.c.b16 %v841, %v840
      %v925 = vpack.c.b16 %v843, %v842
      %v926 = vpack.c.b16 %v845, %v844
      %v927 = vpack.c.b16 %v847, %v846
      %v928 = vpack.c.b16 %v849, %v848
      %v929 = vpack.c.b16 %v851, %v850
      %v930 = vpack.c.b16 %v853, %v852
      %v931 = vpack.c.b16 %v855, %v854
      %v932 = vpack.c.b16 %v857, %v856
      %v933 = vpack.c.b16 %v859, %v858
      %v934 = vpack.c.b16 %v861, %v860
      %v935 = vpack.c.b16 %v863, %v862
      %v936 = vpack.c.b16 %v865, %v864
      %v937 = vpack.c.b16 %v867, %v866
      %v938 = vpack.c.b16 %v869, %v868
      %v939 = vpack.c.b16 %v871, %v870
      %v940 = vpack.c.b16 %v873, %v872
      %v941 = vpack.c.b16 %v875, %v874
      %v942 = vpack.c.b16 %v877, %v876
      %v943 = vpack.c.b16 %v879, %v878
      %v1024 = vunpack.c.l.b16 %v608
      %v1025 = vunpack.c.l.b16 %v609
      %v1026 = vunpack.c.l.b16 %v610
      %v1027 = vunpack.c.l.b16 %v611
      %v1028 = vunpack.c.l.b16 %v612
      %v1029 = vunpack.c.l.b16 %v613
      %v1030 = vunpack.c.l.b16 %v614
      %v1031 = vunpack.c.l.b16 %v615
      %v1032 = vunpack.c.l.b16 %v616
      %v1033 = vunpack.c.l.b16 %v617
      %v1034 = vunpack.c.l.b16 %v618
      %v1035 = vunpack.c.l.b16 %v619
      %v1036 = vunpack.c.l.b16 %v620
      %v1037 = vunpack.c.l.b16 %v621
      %v1038 = vunpack.c.l.b16 %v622
      %v1039 = vunpack.c.l.b16 %v623
      %v1040 = vpack.c.b16 %v1025, %v1024
      %v1041 = vpack.c.b16 %v1027, %v1026
      %v1042 = vpack.c.b16 %v1029, %v1028
      %v1043 = vpack.c.b16 %v1031, %v1030
      %v1044 = vpack.c.b16 %v1033, %v1032
      %v1045 = vpack.c.b16 %v1035, %v1034
      %v1046 = vpack.c.b16 %v1037, %v1036
      %v1047 = vpack.c.b16 %v1039, %v1038
      %1056 = vmatprep.subr.bf16.mxu0 0
      %1057 = vmatpush1.bf16.msra.mxu0 %v1047
      %1058 = vmatprep.subr.bf16.mxu0 0
      %1059 = vmatpush1.bf16.msra.mxu0 %v1046
      %1060 = vmatprep.subr.bf16.mxu0 0
      %1061 = vmatpush1.bf16.msra.mxu0 %v1045
      %1062 = vmatprep.subr.bf16.mxu0 0
      %1063 = vmatpush1.bf16.msra.mxu0 %v1044
      %1064 = vmatprep.subr.bf16.mxu0 0
      %1065 = vmatpush1.bf16.msra.mxu0 %v1043
      %1066 = vmatprep.subr.bf16.mxu0 0
      %1067 = vmatpush1.bf16.msra.mxu0 %v1042
      %1068 = vmatprep.subr.bf16.mxu0 0
      %1069 = vmatpush1.bf16.msra.mxu0 %v1041
      %1070 = vmatprep.subr.bf16.mxu0 0
      %1071 = vmatpush1.bf16.msra.mxu0 %v1040
      %1072 = vmatprep.subr.bf16.mxu0 0
      %1073 = vmatpush2.bf16.msra.mxu0 0
      %1074 = vmatprep.subr.bf16.mxu0 0
      %1075 = vmatpush2.bf16.msra.mxu0 0
      %1076 = vmatprep.subr.bf16.mxu0 0
      %1077 = vmatpush2.bf16.msra.mxu0 0
      %1078 = vmatprep.subr.bf16.mxu0 0
      %1079 = vmatpush2.bf16.msra.mxu0 0
      %1080 = vmatprep.subr.bf16.mxu0 0
      %1081 = vmatpush2.bf16.msra.mxu0 0
      %1082 = vmatprep.subr.bf16.mxu0 0
      %1083 = vmatpush2.bf16.msra.mxu0 0
      %1084 = vmatprep.subr.bf16.mxu0 0
      %1085 = vmatpush2.bf16.msra.mxu0 0
      %1086 = vmatprep.subr.bf16.mxu0 0
      %1087 = vmatpush2.bf16.msra.mxu0 0
      %1088 = vmatprep.mubr.bf16.mxu0 0
      %1089 = vmatmul.mubr.bf16.gmra.mxu0 %v880
      %v1090 = vpop.f32.mrf.mxu0
      %v1091 = vadd.f32 0.0, %v1090
      %v1092 = vpop.f32.mrf.mxu0
      %v1093 = vpop.f32.mrf.mxu0
      %v1094 = vadd.f32 0.0, %v1093
      %v1095 = vpop.f32.mrf.mxu0
      %1096 = vmatprep.mubr.bf16.mxu0 0
      %1097 = vmatmul.mubr.bf16.gmra.mxu0 %v881
      %v1098 = vpop.f32.mrf.mxu0
      %v1099 = vadd.f32 0.0, %v1098
      %v1100 = vpop.f32.mrf.mxu0
      %v1101 = vpop.f32.mrf.mxu0
      %v1102 = vadd.f32 0.0, %v1101
      %v1103 = vpop.f32.mrf.mxu0
      %1104 = vmatprep.mubr.bf16.mxu0 0
      %1105 = vmatmul.mubr.bf16.gmra.mxu0 %v882
      %v1106 = vpop.f32.mrf.mxu0
      %v1107 = vadd.f32 0.0, %v1106
      %v1108 = vpop.f32.mrf.mxu0
      %v1109 = vpop.f32.mrf.mxu0
      %v1110 = vadd.f32 0.0, %v1109
      %v1111 = vpop.f32.mrf.mxu0
      %1112 = vmatprep.mubr.bf16.mxu0 0
      %1113 = vmatmul.mubr.bf16.gmra.mxu0 %v883
      %v1114 = vpop.f32.mrf.mxu0
      %v1115 = vadd.f32 0.0, %v1114
      %v1116 = vpop.f32.mrf.mxu0
      %v1117 = vpop.f32.mrf.mxu0
      %v1118 = vadd.f32 0.0, %v1117
      %v1119 = vpop.f32.mrf.mxu0
      %1120 = vmatprep.mubr.bf16.mxu0 0
      %1121 = vmatmul.mubr.bf16.gmra.mxu0 %v884
      %v1122 = vpop.f32.mrf.mxu0
      %v1123 = vadd.f32 0.0, %v1122
      %v1124 = vpop.f32.mrf.mxu0
      %v1125 = vpop.f32.mrf.mxu0
      %v1126 = vadd.f32 0.0, %v1125
      %v1127 = vpop.f32.mrf.mxu0
      %1128 = vmatprep.mubr.bf16.mxu0 0
      %1129 = vmatmul.mubr.bf16.gmra.mxu0 %v885
      %v1130 = vpop.f32.mrf.mxu0
      %v1131 = vadd.f32 0.0, %v1130
      %v1132 = vpop.f32.mrf.mxu0
      %v1133 = vpop.f32.mrf.mxu0
      %v1134 = vadd.f32 0.0, %v1133
      %v1135 = vpop.f32.mrf.mxu0
      %1136 = vmatprep.mubr.bf16.mxu0 0
      %1137 = vmatmul.mubr.bf16.gmra.mxu0 %v886
      %v1138 = vpop.f32.mrf.mxu0
      %v1139 = vadd.f32 0.0, %v1138
      %v1140 = vpop.f32.mrf.mxu0
      %v1141 = vpop.f32.mrf.mxu0
      %v1142 = vadd.f32 0.0, %v1141
      %v1143 = vpop.f32.mrf.mxu0
      %1144 = vmatprep.mubr.bf16.mxu0 0
      %1145 = vmatmul.mubr.bf16.gmra.mxu0 %v887
      %v1146 = vpop.f32.mrf.mxu0
      %v1147 = vadd.f32 0.0, %v1146
      %v1148 = vpop.f32.mrf.mxu0
      %v1149 = vpop.f32.mrf.mxu0
      %v1150 = vadd.f32 0.0, %v1149
      %v1151 = vpop.f32.mrf.mxu0
      %1152 = vmatprep.mubr.bf16.mxu0 0
      %1153 = vmatmul.mubr.bf16.gmra.mxu0 %v888
      %v1154 = vpop.f32.mrf.mxu0
      %v1155 = vadd.f32 0.0, %v1154
      %v1156 = vpop.f32.mrf.mxu0
      %v1157 = vpop.f32.mrf.mxu0
      %v1158 = vadd.f32 0.0, %v1157
      %v1159 = vpop.f32.mrf.mxu0
      %1160 = vmatprep.mubr.bf16.mxu0 0
      %1161 = vmatmul.mubr.bf16.gmra.mxu0 %v889
      %v1162 = vpop.f32.mrf.mxu0
      %v1163 = vadd.f32 0.0, %v1162
      %v1164 = vpop.f32.mrf.mxu0
      %v1165 = vpop.f32.mrf.mxu0
      %v1166 = vadd.f32 0.0, %v1165
      %v1167 = vpop.f32.mrf.mxu0
      %1168 = vmatprep.mubr.bf16.mxu0 0
      %1169 = vmatmul.mubr.bf16.gmra.mxu0 %v890
      %v1170 = vpop.f32.mrf.mxu0
      %v1171 = vadd.f32 0.0, %v1170
      %v1172 = vpop.f32.mrf.mxu0
      %v1173 = vpop.f32.mrf.mxu0
      %v1174 = vadd.f32 0.0, %v1173
      %v1175 = vpop.f32.mrf.mxu0
      %1176 = vmatprep.mubr.bf16.mxu0 0
      %1177 = vmatmul.mubr.bf16.gmra.mxu0 %v891
      %v1178 = vpop.f32.mrf.mxu0
      %v1179 = vadd.f32 0.0, %v1178
      %v1180 = vpop.f32.mrf.mxu0
      %v1181 = vpop.f32.mrf.mxu0
      %v1182 = vadd.f32 0.0, %v1181
      %v1183 = vpop.f32.mrf.mxu0
      %1184 = vmatprep.mubr.bf16.mxu0 0
      %1185 = vmatmul.mubr.bf16.gmra.mxu0 %v892
      %v1186 = vpop.f32.mrf.mxu0
      %v1187 = vadd.f32 0.0, %v1186
      %v1188 = vpop.f32.mrf.mxu0
      %v1189 = vpop.f32.mrf.mxu0
      %v1190 = vadd.f32 0.0, %v1189
      %v1191 = vpop.f32.mrf.mxu0
      %1192 = vmatprep.mubr.bf16.mxu0 0
      %1193 = vmatmul.mubr.bf16.gmra.mxu0 %v893
      %v1194 = vpop.f32.mrf.mxu0
      %v1195 = vadd.f32 0.0, %v1194
      %v1196 = vpop.f32.mrf.mxu0
      %v1197 = vpop.f32.mrf.mxu0
      %v1198 = vadd.f32 0.0, %v1197
      %v1199 = vpop.f32.mrf.mxu0
      %1200 = vmatprep.mubr.bf16.mxu0 0
      %1201 = vmatmul.mubr.bf16.gmra.mxu0 %v894
      %v1202 = vpop.f32.mrf.mxu0
      %v1203 = vadd.f32 0.0, %v1202
      %v1204 = vpop.f32.mrf.mxu0
      %v1205 = vpop.f32.mrf.mxu0
      %v1206 = vadd.f32 0.0, %v1205
      %v1207 = vpop.f32.mrf.mxu0
      %1208 = vmatprep.mubr.bf16.mxu0 0
      %1209 = vmatmul.mubr.bf16.gmra.mxu0 %v895
      %v1210 = vpop.f32.mrf.mxu0
      %v1211 = vadd.f32 0.0, %v1210
      %v1212 = vpop.f32.mrf.mxu0
      %v1213 = vpop.f32.mrf.mxu0
      %v1214 = vadd.f32 0.0, %v1213
      %v1215 = vpop.f32.mrf.mxu0
      %1216 = vmatprep.mubr.bf16.mxu0 0
      %1217 = vmatmul.mubr.bf16.gmra.mxu0 %v896
      %v1218 = vpop.f32.mrf.mxu0
      %v1219 = vadd.f32 0.0, %v1218
      %v1220 = vpop.f32.mrf.mxu0
      %v1221 = vpop.f32.mrf.mxu0
      %v1222 = vadd.f32 0.0, %v1221
      %v1223 = vpop.f32.mrf.mxu0
      %1224 = vmatprep.mubr.bf16.mxu0 0
      %1225 = vmatmul.mubr.bf16.gmra.mxu0 %v897
      %v1226 = vpop.f32.mrf.mxu0
      %v1227 = vadd.f32 0.0, %v1226
      %v1228 = vpop.f32.mrf.mxu0
      %v1229 = vpop.f32.mrf.mxu0
      %v1230 = vadd.f32 0.0, %v1229
      %v1231 = vpop.f32.mrf.mxu0
      %1232 = vmatprep.mubr.bf16.mxu0 0
      %1233 = vmatmul.mubr.bf16.gmra.mxu0 %v898
      %v1234 = vpop.f32.mrf.mxu0
      %v1235 = vadd.f32 0.0, %v1234
      %v1236 = vpop.f32.mrf.mxu0
      %v1237 = vpop.f32.mrf.mxu0
      %v1238 = vadd.f32 0.0, %v1237
      %v1239 = vpop.f32.mrf.mxu0
      %1240 = vmatprep.mubr.bf16.mxu0 0
      %1241 = vmatmul.mubr.bf16.gmra.mxu0 %v899
      %v1242 = vpop.f32.mrf.mxu0
      %v1243 = vadd.f32 0.0, %v1242
      %v1244 = vpop.f32.mrf.mxu0
      %v1245 = vpop.f32.mrf.mxu0
      %v1246 = vadd.f32 0.0, %v1245
      %v1247 = vpop.f32.mrf.mxu0
      %1248 = vmatprep.mubr.bf16.mxu0 0
      %1249 = vmatmul.mubr.bf16.gmra.mxu0 %v900
      %v1250 = vpop.f32.mrf.mxu0
      %v1251 = vadd.f32 0.0, %v1250
      %v1252 = vpop.f32.mrf.mxu0
      %v1253 = vpop.f32.mrf.mxu0
      %v1254 = vadd.f32 0.0, %v1253
      %v1255 = vpop.f32.mrf.mxu0
      %1256 = vmatprep.mubr.bf16.mxu0 0
      %1257 = vmatmul.mubr.bf16.gmra.mxu0 %v901
      %v1258 = vpop.f32.mrf.mxu0
      %v1259 = vadd.f32 0.0, %v1258
      %v1260 = vpop.f32.mrf.mxu0
      %v1261 = vpop.f32.mrf.mxu0
      %v1262 = vadd.f32 0.0, %v1261
      %v1263 = vpop.f32.mrf.mxu0
      %1264 = vmatprep.mubr.bf16.mxu0 0
      %1265 = vmatmul.mubr.bf16.gmra.mxu0 %v902
      %v1266 = vpop.f32.mrf.mxu0
      %v1267 = vadd.f32 0.0, %v1266
      %v1268 = vpop.f32.mrf.mxu0
      %v1269 = vpop.f32.mrf.mxu0
      %v1270 = vadd.f32 0.0, %v1269
      %v1271 = vpop.f32.mrf.mxu0
      %1272 = vmatprep.mubr.bf16.mxu0 0
      %1273 = vmatmul.mubr.bf16.gmra.mxu0 %v903
      %v1274 = vpop.f32.mrf.mxu0
      %v1275 = vadd.f32 0.0, %v1274
      %v1276 = vpop.f32.mrf.mxu0
      %v1277 = vpop.f32.mrf.mxu0
      %v1278 = vadd.f32 0.0, %v1277
      %v1279 = vpop.f32.mrf.mxu0
      %1280 = vmatprep.mubr.bf16.mxu0 0
      %1281 = vmatmul.mubr.bf16.gmra.mxu0 %v904
      %v1282 = vpop.f32.mrf.mxu0
      %v1283 = vadd.f32 0.0, %v1282
      %v1284 = vpop.f32.mrf.mxu0
      %v1285 = vpop.f32.mrf.mxu0
      %v1286 = vadd.f32 0.0, %v1285
      %v1287 = vpop.f32.mrf.mxu0
      %1288 = vmatprep.mubr.bf16.mxu0 0
      %1289 = vmatmul.mubr.bf16.gmra.mxu0 %v905
      %v1290 = vpop.f32.mrf.mxu0
      %v1291 = vadd.f32 0.0, %v1290
      %v1292 = vpop.f32.mrf.mxu0
      %v1293 = vpop.f32.mrf.mxu0
      %v1294 = vadd.f32 0.0, %v1293
      %v1295 = vpop.f32.mrf.mxu0
      %1296 = vmatprep.mubr.bf16.mxu0 0
      %1297 = vmatmul.mubr.bf16.gmra.mxu0 %v906
      %v1298 = vpop.f32.mrf.mxu0
      %v1299 = vadd.f32 0.0, %v1298
      %v1300 = vpop.f32.mrf.mxu0
      %v1301 = vpop.f32.mrf.mxu0
      %v1302 = vadd.f32 0.0, %v1301
      %v1303 = vpop.f32.mrf.mxu0
      %1304 = vmatprep.mubr.bf16.mxu0 0
      %1305 = vmatmul.mubr.bf16.gmra.mxu0 %v907
      %v1306 = vpop.f32.mrf.mxu0
      %v1307 = vadd.f32 0.0, %v1306
      %v1308 = vpop.f32.mrf.mxu0
      %v1309 = vpop.f32.mrf.mxu0
      %v1310 = vadd.f32 0.0, %v1309
      %v1311 = vpop.f32.mrf.mxu0
      %1312 = vmatprep.mubr.bf16.mxu0 0
      %1313 = vmatmul.mubr.bf16.gmra.mxu0 %v908
      %v1314 = vpop.f32.mrf.mxu0
      %v1315 = vadd.f32 0.0, %v1314
      %v1316 = vpop.f32.mrf.mxu0
      %v1317 = vpop.f32.mrf.mxu0
      %v1318 = vadd.f32 0.0, %v1317
      %v1319 = vpop.f32.mrf.mxu0
      %1320 = vmatprep.mubr.bf16.mxu0 0
      %1321 = vmatmul.mubr.bf16.gmra.mxu0 %v909
      %v1322 = vpop.f32.mrf.mxu0
      %v1323 = vadd.f32 0.0, %v1322
      %v1324 = vpop.f32.mrf.mxu0
      %v1325 = vpop.f32.mrf.mxu0
      %v1326 = vadd.f32 0.0, %v1325
      %v1327 = vpop.f32.mrf.mxu0
      %1328 = vmatprep.mubr.bf16.mxu0 0
      %1329 = vmatmul.mubr.bf16.gmra.mxu0 %v910
      %v1330 = vpop.f32.mrf.mxu0
      %v1331 = vadd.f32 0.0, %v1330
      %v1332 = vpop.f32.mrf.mxu0
      %v1333 = vpop.f32.mrf.mxu0
      %v1334 = vadd.f32 0.0, %v1333
      %v1335 = vpop.f32.mrf.mxu0
      %1336 = vmatprep.mubr.bf16.mxu0 0
      %1337 = vmatmul.mubr.bf16.gmra.mxu0 %v911
      %v1338 = vpop.f32.mrf.mxu0
      %v1339 = vadd.f32 0.0, %v1338
      %v1340 = vpop.f32.mrf.mxu0
      %v1341 = vpop.f32.mrf.mxu0
      %v1342 = vadd.f32 0.0, %v1341
      %v1343 = vpop.f32.mrf.mxu0
      %1344 = vmatprep.mubr.bf16.mxu0 0
      %1345 = vmatmul.mubr.bf16.gmra.mxu0 %v912
      %v1346 = vpop.f32.mrf.mxu0
      %v1347 = vadd.f32 0.0, %v1346
      %v1348 = vpop.f32.mrf.mxu0
      %v1349 = vpop.f32.mrf.mxu0
      %v1350 = vadd.f32 0.0, %v1349
      %v1351 = vpop.f32.mrf.mxu0
      %1352 = vmatprep.mubr.bf16.mxu0 0
      %1353 = vmatmul.mubr.bf16.gmra.mxu0 %v913
      %v1354 = vpop.f32.mrf.mxu0
      %v1355 = vadd.f32 0.0, %v1354
      %v1356 = vpop.f32.mrf.mxu0
      %v1357 = vpop.f32.mrf.mxu0
      %v1358 = vadd.f32 0.0, %v1357
      %v1359 = vpop.f32.mrf.mxu0
      %1360 = vmatprep.mubr.bf16.mxu0 0
      %1361 = vmatmul.mubr.bf16.gmra.mxu0 %v914
      %v1362 = vpop.f32.mrf.mxu0
      %v1363 = vadd.f32 0.0, %v1362
      %v1364 = vpop.f32.mrf.mxu0
      %v1365 = vpop.f32.mrf.mxu0
      %v1366 = vadd.f32 0.0, %v1365
      %v1367 = vpop.f32.mrf.mxu0
      %1368 = vmatprep.mubr.bf16.mxu0 0
      %1369 = vmatmul.mubr.bf16.gmra.mxu0 %v915
      %v1370 = vpop.f32.mrf.mxu0
      %v1371 = vadd.f32 0.0, %v1370
      %v1372 = vpop.f32.mrf.mxu0
      %v1373 = vpop.f32.mrf.mxu0
      %v1374 = vadd.f32 0.0, %v1373
      %v1375 = vpop.f32.mrf.mxu0
      %1376 = vmatprep.mubr.bf16.mxu0 0
      %1377 = vmatmul.mubr.bf16.gmra.mxu0 %v916
      %v1378 = vpop.f32.mrf.mxu0
      %v1379 = vadd.f32 0.0, %v1378
      %v1380 = vpop.f32.mrf.mxu0
      %v1381 = vpop.f32.mrf.mxu0
      %v1382 = vadd.f32 0.0, %v1381
      %v1383 = vpop.f32.mrf.mxu0
      %1384 = vmatprep.mubr.bf16.mxu0 0
      %1385 = vmatmul.mubr.bf16.gmra.mxu0 %v917
      %v1386 = vpop.f32.mrf.mxu0
      %v1387 = vadd.f32 0.0, %v1386
      %v1388 = vpop.f32.mrf.mxu0
      %v1389 = vpop.f32.mrf.mxu0
      %v1390 = vadd.f32 0.0, %v1389
      %v1391 = vpop.f32.mrf.mxu0
      %1392 = vmatprep.mubr.bf16.mxu0 0
      %1393 = vmatmul.mubr.bf16.gmra.mxu0 %v918
      %v1394 = vpop.f32.mrf.mxu0
      %v1395 = vadd.f32 0.0, %v1394
      %v1396 = vpop.f32.mrf.mxu0
      %v1397 = vpop.f32.mrf.mxu0
      %v1398 = vadd.f32 0.0, %v1397
      %v1399 = vpop.f32.mrf.mxu0
      %1400 = vmatprep.mubr.bf16.mxu0 0
      %1401 = vmatmul.mubr.bf16.gmra.mxu0 %v919
      %v1402 = vpop.f32.mrf.mxu0
      %v1403 = vadd.f32 0.0, %v1402
      %v1404 = vpop.f32.mrf.mxu0
      %v1405 = vpop.f32.mrf.mxu0
      %v1406 = vadd.f32 0.0, %v1405
      %v1407 = vpop.f32.mrf.mxu0
      %1408 = vmatprep.mubr.bf16.mxu0 0
      %1409 = vmatmul.mubr.bf16.gmra.mxu0 %v920
      %v1410 = vpop.f32.mrf.mxu0
      %v1411 = vadd.f32 0.0, %v1410
      %v1412 = vpop.f32.mrf.mxu0
      %v1413 = vpop.f32.mrf.mxu0
      %v1414 = vadd.f32 0.0, %v1413
      %v1415 = vpop.f32.mrf.mxu0
      %1416 = vmatprep.mubr.bf16.mxu0 0
      %1417 = vmatmul.mubr.bf16.gmra.mxu0 %v921
      %v1418 = vpop.f32.mrf.mxu0
      %v1419 = vadd.f32 0.0, %v1418
      %v1420 = vpop.f32.mrf.mxu0
      %v1421 = vpop.f32.mrf.mxu0
      %v1422 = vadd.f32 0.0, %v1421
      %v1423 = vpop.f32.mrf.mxu0
      %1424 = vmatprep.mubr.bf16.mxu0 0
      %1425 = vmatmul.mubr.bf16.gmra.mxu0 %v922
      %v1426 = vpop.f32.mrf.mxu0
      %v1427 = vadd.f32 0.0, %v1426
      %v1428 = vpop.f32.mrf.mxu0
      %v1429 = vpop.f32.mrf.mxu0
      %v1430 = vadd.f32 0.0, %v1429
      %v1431 = vpop.f32.mrf.mxu0
      %1432 = vmatprep.mubr.bf16.mxu0 0
      %1433 = vmatmul.mubr.bf16.gmra.mxu0 %v923
      %v1434 = vpop.f32.mrf.mxu0
      %v1435 = vadd.f32 0.0, %v1434
      %v1436 = vpop.f32.mrf.mxu0
      %v1437 = vpop.f32.mrf.mxu0
      %v1438 = vadd.f32 0.0, %v1437
      %v1439 = vpop.f32.mrf.mxu0
      %1440 = vmatprep.mubr.bf16.mxu0 0
      %1441 = vmatmul.mubr.bf16.gmra.mxu0 %v924
      %v1442 = vpop.f32.mrf.mxu0
      %v1443 = vadd.f32 0.0, %v1442
      %v1444 = vpop.f32.mrf.mxu0
      %v1445 = vpop.f32.mrf.mxu0
      %v1446 = vadd.f32 0.0, %v1445
      %v1447 = vpop.f32.mrf.mxu0
      %1448 = vmatprep.mubr.bf16.mxu0 0
      %1449 = vmatmul.mubr.bf16.gmra.mxu0 %v925
      %v1450 = vpop.f32.mrf.mxu0
      %v1451 = vadd.f32 0.0, %v1450
      %v1452 = vpop.f32.mrf.mxu0
      %v1453 = vpop.f32.mrf.mxu0
      %v1454 = vadd.f32 0.0, %v1453
      %v1455 = vpop.f32.mrf.mxu0
      %1456 = vmatprep.mubr.bf16.mxu0 0
      %1457 = vmatmul.mubr.bf16.gmra.mxu0 %v926
      %v1458 = vpop.f32.mrf.mxu0
      %v1459 = vadd.f32 0.0, %v1458
      %v1460 = vpop.f32.mrf.mxu0
      %v1461 = vpop.f32.mrf.mxu0
      %v1462 = vadd.f32 0.0, %v1461
      %v1463 = vpop.f32.mrf.mxu0
      %1464 = vmatprep.mubr.bf16.mxu0 0
      %1465 = vmatmul.mubr.bf16.gmra.mxu0 %v927
      %v1466 = vpop.f32.mrf.mxu0
      %v1467 = vadd.f32 0.0, %v1466
      %v1468 = vpop.f32.mrf.mxu0
      %v1469 = vpop.f32.mrf.mxu0
      %v1470 = vadd.f32 0.0, %v1469
      %v1471 = vpop.f32.mrf.mxu0
      %1472 = vmatprep.mubr.bf16.mxu0 0
      %1473 = vmatmul.mubr.bf16.gmra.mxu0 %v928
      %v1474 = vpop.f32.mrf.mxu0
      %v1475 = vadd.f32 0.0, %v1474
      %v1476 = vpop.f32.mrf.mxu0
      %v1477 = vpop.f32.mrf.mxu0
      %v1478 = vadd.f32 0.0, %v1477
      %v1479 = vpop.f32.mrf.mxu0
      %1480 = vmatprep.mubr.bf16.mxu0 0
      %1481 = vmatmul.mubr.bf16.gmra.mxu0 %v929
      %v1482 = vpop.f32.mrf.mxu0
      %v1483 = vadd.f32 0.0, %v1482
      %v1484 = vpop.f32.mrf.mxu0
      %v1485 = vpop.f32.mrf.mxu0
      %v1486 = vadd.f32 0.0, %v1485
      %v1487 = vpop.f32.mrf.mxu0
      %1488 = vmatprep.mubr.bf16.mxu0 0
      %1489 = vmatmul.mubr.bf16.gmra.mxu0 %v930
      %v1490 = vpop.f32.mrf.mxu0
      %v1491 = vadd.f32 0.0, %v1490
      %v1492 = vpop.f32.mrf.mxu0
      %v1493 = vpop.f32.mrf.mxu0
      %v1494 = vadd.f32 0.0, %v1493
      %v1495 = vpop.f32.mrf.mxu0
      %1496 = vmatprep.mubr.bf16.mxu0 0
      %1497 = vmatmul.mubr.bf16.gmra.mxu0 %v931
      %v1498 = vpop.f32.mrf.mxu0
      %v1499 = vadd.f32 0.0, %v1498
      %v1500 = vpop.f32.mrf.mxu0
      %v1501 = vpop.f32.mrf.mxu0
      %v1502 = vadd.f32 0.0, %v1501
      %v1503 = vpop.f32.mrf.mxu0
      %1504 = vmatprep.mubr.bf16.mxu0 0
      %1505 = vmatmul.mubr.bf16.gmra.mxu0 %v932
      %v1506 = vpop.f32.mrf.mxu0
      %v1507 = vadd.f32 0.0, %v1506
      %v1508 = vpop.f32.mrf.mxu0
      %v1509 = vpop.f32.mrf.mxu0
      %v1510 = vadd.f32 0.0, %v1509
      %v1511 = vpop.f32.mrf.mxu0
      %1512 = vmatprep.mubr.bf16.mxu0 0
      %1513 = vmatmul.mubr.bf16.gmra.mxu0 %v933
      %v1514 = vpop.f32.mrf.mxu0
      %v1515 = vadd.f32 0.0, %v1514
      %v1516 = vpop.f32.mrf.mxu0
      %v1517 = vpop.f32.mrf.mxu0
      %v1518 = vadd.f32 0.0, %v1517
      %v1519 = vpop.f32.mrf.mxu0
      %1520 = vmatprep.mubr.bf16.mxu0 0
      %1521 = vmatmul.mubr.bf16.gmra.mxu0 %v934
      %v1522 = vpop.f32.mrf.mxu0
      %v1523 = vadd.f32 0.0, %v1522
      %v1524 = vpop.f32.mrf.mxu0
      %v1525 = vpop.f32.mrf.mxu0
      %v1526 = vadd.f32 0.0, %v1525
      %v1527 = vpop.f32.mrf.mxu0
      %1528 = vmatprep.mubr.bf16.mxu0 0
      %1529 = vmatmul.mubr.bf16.gmra.mxu0 %v935
      %v1530 = vpop.f32.mrf.mxu0
      %v1531 = vadd.f32 0.0, %v1530
      %v1532 = vpop.f32.mrf.mxu0
      %v1533 = vpop.f32.mrf.mxu0
      %v1534 = vadd.f32 0.0, %v1533
      %v1535 = vpop.f32.mrf.mxu0
      %1536 = vmatprep.mubr.bf16.mxu0 0
      %1537 = vmatmul.mubr.bf16.gmra.mxu0 %v936
      %v1538 = vpop.f32.mrf.mxu0
      %v1539 = vadd.f32 0.0, %v1538
      %v1540 = vpop.f32.mrf.mxu0
      %v1541 = vpop.f32.mrf.mxu0
      %v1542 = vadd.f32 0.0, %v1541
      %v1543 = vpop.f32.mrf.mxu0
      %1544 = vmatprep.mubr.bf16.mxu0 0
      %1545 = vmatmul.mubr.bf16.gmra.mxu0 %v937
      %v1546 = vpop.f32.mrf.mxu0
      %v1547 = vadd.f32 0.0, %v1546
      %v1548 = vpop.f32.mrf.mxu0
      %v1549 = vpop.f32.mrf.mxu0
      %v1550 = vadd.f32 0.0, %v1549
      %v1551 = vpop.f32.mrf.mxu0
      %1552 = vmatprep.mubr.bf16.mxu0 0
      %1553 = vmatmul.mubr.bf16.gmra.mxu0 %v938
      %v1554 = vpop.f32.mrf.mxu0
      %v1555 = vadd.f32 0.0, %v1554
      %v1556 = vpop.f32.mrf.mxu0
      %v1557 = vpop.f32.mrf.mxu0
      %v1558 = vadd.f32 0.0, %v1557
      %v1559 = vpop.f32.mrf.mxu0
      %1560 = vmatprep.mubr.bf16.mxu0 0
      %1561 = vmatmul.mubr.bf16.gmra.mxu0 %v939
      %v1562 = vpop.f32.mrf.mxu0
      %v1563 = vadd.f32 0.0, %v1562
      %v1564 = vpop.f32.mrf.mxu0
      %v1565 = vpop.f32.mrf.mxu0
      %v1566 = vadd.f32 0.0, %v1565
      %v1567 = vpop.f32.mrf.mxu0
      %1568 = vmatprep.mubr.bf16.mxu0 0
      %1569 = vmatmul.mubr.bf16.gmra.mxu0 %v940
      %v1570 = vpop.f32.mrf.mxu0
      %v1571 = vadd.f32 0.0, %v1570
      %v1572 = vpop.f32.mrf.mxu0
      %v1573 = vpop.f32.mrf.mxu0
      %v1574 = vadd.f32 0.0, %v1573
      %v1575 = vpop.f32.mrf.mxu0
      %1576 = vmatprep.mubr.bf16.mxu0 0
      %1577 = vmatmul.mubr.bf16.gmra.mxu0 %v941
      %v1578 = vpop.f32.mrf.mxu0
      %v1579 = vadd.f32 0.0, %v1578
      %v1580 = vpop.f32.mrf.mxu0
      %v1581 = vpop.f32.mrf.mxu0
      %v1582 = vadd.f32 0.0, %v1581
      %v1583 = vpop.f32.mrf.mxu0
      %1584 = vmatprep.mubr.bf16.mxu0 0
      %1585 = vmatmul.mubr.bf16.gmra.mxu0 %v942
      %v1586 = vpop.f32.mrf.mxu0
      %v1587 = vadd.f32 0.0, %v1586
      %v1588 = vpop.f32.mrf.mxu0
      %v1589 = vpop.f32.mrf.mxu0
      %v1590 = vadd.f32 0.0, %v1589
      %v1591 = vpop.f32.mrf.mxu0
      %1592 = vmatprep.mubr.bf16.mxu0 0
      %1593 = vmatmul.mubr.bf16.gmra.mxu0 %v943
      %v1594 = vpop.f32.mrf.mxu0
      %v1595 = vadd.f32 0.0, %v1594
      %v1596 = vpop.f32.mrf.mxu0
      %v1597 = vpop.f32.mrf.mxu0
      %v1598 = vadd.f32 0.0, %v1597
      %v1599 = vpop.f32.mrf.mxu0
      %1600 = vdwg.mxu0
      %v1601 = vadd.f32 %v352, %v1091
      %v1602 = vadd.f32 %v353, %v1094
      %v1603 = vadd.f32 %v354, %v1099
      %v1604 = vadd.f32 %v355, %v1102
      %v1605 = vadd.f32 %v356, %v1107
      %v1606 = vadd.f32 %v357, %v1110
      %v1607 = vadd.f32 %v358, %v1115
      %v1608 = vadd.f32 %v359, %v1118
      %v1609 = vadd.f32 %v360, %v1123
      %v1610 = vadd.f32 %v361, %v1126
      %v1611 = vadd.f32 %v362, %v1131
      %v1612 = vadd.f32 %v363, %v1134
      %v1613 = vadd.f32 %v364, %v1139
      %v1614 = vadd.f32 %v365, %v1142
      %v1615 = vadd.f32 %v366, %v1147
      %v1616 = vadd.f32 %v367, %v1150
      %v1617 = vadd.f32 %v368, %v1155
      %v1618 = vadd.f32 %v369, %v1158
      %v1619 = vadd.f32 %v370, %v1163
      %v1620 = vadd.f32 %v371, %v1166
      %v1621 = vadd.f32 %v372, %v1171
      %v1622 = vadd.f32 %v373, %v1174
      %v1623 = vadd.f32 %v374, %v1179
      %v1624 = vadd.f32 %v375, %v1182
      %v1625 = vadd.f32 %v376, %v1187
      %v1626 = vadd.f32 %v377, %v1190
      %v1627 = vadd.f32 %v378, %v1195
      %v1628 = vadd.f32 %v379, %v1198
      %v1629 = vadd.f32 %v380, %v1203
      %v1630 = vadd.f32 %v381, %v1206
      %v1631 = vadd.f32 %v382, %v1211
      %v1632 = vadd.f32 %v383, %v1214
      %v1633 = vadd.f32 %v384, %v1219
      %v1634 = vadd.f32 %v385, %v1222
      %v1635 = vadd.f32 %v386, %v1227
      %v1636 = vadd.f32 %v387, %v1230
      %v1637 = vadd.f32 %v388, %v1235
      %v1638 = vadd.f32 %v389, %v1238
      %v1639 = vadd.f32 %v390, %v1243
      %v1640 = vadd.f32 %v391, %v1246
      %v1641 = vadd.f32 %v392, %v1251
      %v1642 = vadd.f32 %v393, %v1254
      %v1643 = vadd.f32 %v394, %v1259
      %v1644 = vadd.f32 %v395, %v1262
      %v1645 = vadd.f32 %v396, %v1267
      %v1646 = vadd.f32 %v397, %v1270
      %v1647 = vadd.f32 %v398, %v1275
      %v1648 = vadd.f32 %v399, %v1278
      %v1649 = vadd.f32 %v400, %v1283
      %v1650 = vadd.f32 %v401, %v1286
      %v1651 = vadd.f32 %v402, %v1291
      %v1652 = vadd.f32 %v403, %v1294
      %v1653 = vadd.f32 %v404, %v1299
      %v1654 = vadd.f32 %v405, %v1302
      %v1655 = vadd.f32 %v406, %v1307
      %v1656 = vadd.f32 %v407, %v1310
      %v1657 = vadd.f32 %v408, %v1315
      %v1658 = vadd.f32 %v409, %v1318
      %v1659 = vadd.f32 %v410, %v1323
      %v1660 = vadd.f32 %v411, %v1326
      %v1661 = vadd.f32 %v412, %v1331
      %v1662 = vadd.f32 %v413, %v1334
      %v1663 = vadd.f32 %v414, %v1339
      %v1664 = vadd.f32 %v415, %v1342
      %v1665 = vadd.f32 %v416, %v1347
      %v1666 = vadd.f32 %v417, %v1350
      %v1667 = vadd.f32 %v418, %v1355
      %v1668 = vadd.f32 %v419, %v1358
      %v1669 = vadd.f32 %v420, %v1363
      %v1670 = vadd.f32 %v421, %v1366
      %v1671 = vadd.f32 %v422, %v1371
      %v1672 = vadd.f32 %v423, %v1374
      %v1673 = vadd.f32 %v424, %v1379
      %v1674 = vadd.f32 %v425, %v1382
      %v1675 = vadd.f32 %v426, %v1387
      %v1676 = vadd.f32 %v427, %v1390
      %v1677 = vadd.f32 %v428, %v1395
      %v1678 = vadd.f32 %v429, %v1398
      %v1679 = vadd.f32 %v430, %v1403
      %v1680 = vadd.f32 %v431, %v1406
      %v1681 = vadd.f32 %v432, %v1411
      %v1682 = vadd.f32 %v433, %v1414
      %v1683 = vadd.f32 %v434, %v1419
      %v1684 = vadd.f32 %v435, %v1422
      %v1685 = vadd.f32 %v436, %v1427
      %v1686 = vadd.f32 %v437, %v1430
      %v1687 = vadd.f32 %v438, %v1435
      %v1688 = vadd.f32 %v439, %v1438
      %v1689 = vadd.f32 %v440, %v1443
      %v1690 = vadd.f32 %v441, %v1446
      %v1691 = vadd.f32 %v442, %v1451
      %v1692 = vadd.f32 %v443, %v1454
      %v1693 = vadd.f32 %v444, %v1459
      %v1694 = vadd.f32 %v445, %v1462
      %v1695 = vadd.f32 %v446, %v1467
      %v1696 = vadd.f32 %v447, %v1470
      %v1697 = vadd.f32 %v448, %v1475
      %v1698 = vadd.f32 %v449, %v1478
      %v1699 = vadd.f32 %v450, %v1483
      %v1700 = vadd.f32 %v451, %v1486
      %v1701 = vadd.f32 %v452, %v1491
      %v1702 = vadd.f32 %v453, %v1494
      %v1703 = vadd.f32 %v454, %v1499
      %v1704 = vadd.f32 %v455, %v1502
      %v1705 = vadd.f32 %v456, %v1507
      %v1706 = vadd.f32 %v457, %v1510
      %v1707 = vadd.f32 %v458, %v1515
      %v1708 = vadd.f32 %v459, %v1518
      %v1709 = vadd.f32 %v460, %v1523
      %v1710 = vadd.f32 %v461, %v1526
      %v1711 = vadd.f32 %v462, %v1531
      %v1712 = vadd.f32 %v463, %v1534
      %v1713 = vadd.f32 %v464, %v1539
      %v1714 = vadd.f32 %v465, %v1542
      %v1715 = vadd.f32 %v466, %v1547
      %v1716 = vadd.f32 %v467, %v1550
      %v1717 = vadd.f32 %v468, %v1555
      %v1718 = vadd.f32 %v469, %v1558
      %v1719 = vadd.f32 %v470, %v1563
      %v1720 = vadd.f32 %v471, %v1566
      %v1721 = vadd.f32 %v472, %v1571
      %v1722 = vadd.f32 %v473, %v1574
      %v1723 = vadd.f32 %v474, %v1579
      %v1724 = vadd.f32 %v475, %v1582
      %v1725 = vadd.f32 %v476, %v1587
      %v1726 = vadd.f32 %v477, %v1590
      %v1727 = vadd.f32 %v478, %v1595
      %v1728 = vadd.f32 %v479, %v1598
      %1729 = vst [vmem:[#allocation2] sm:$0xff] %v1601
      %1730 = vst [vmem:[#allocation2 + $0x8] sm:$0xff] %v1602
      %1731 = vst [vmem:[#allocation2 + $0x10] sm:$0xff] %v1603
      %1732 = vst [vmem:[#allocation2 + $0x18] sm:$0xff] %v1604
      %1733 = vst [vmem:[#allocation2 + $0x20] sm:$0xff] %v1605
      %1734 = vst [vmem:[#allocation2 + $0x28] sm:$0xff] %v1606
      %1735 = vst [vmem:[#allocation2 + $0x30] sm:$0xff] %v1607
      %1736 = vst [vmem:[#allocation2 + $0x38] sm:$0xff] %v1608
      %1737 = vst [vmem:[#allocation2 + $0x40] sm:$0xff] %v1609
      %1738 = vst [vmem:[#allocation2 + $0x48] sm:$0xff] %v1610
      %1739 = vst [vmem:[#allocation2 + $0x50] sm:$0xff] %v1611
      %1740 = vst [vmem:[#allocation2 + $0x58] sm:$0xff] %v1612
      %1741 = vst [vmem:[#allocation2 + $0x60] sm:$0xff] %v1613
      %1742 = vst [vmem:[#allocation2 + $0x68] sm:$0xff] %v1614
      %1743 = vst [vmem:[#allocation2 + $0x70] sm:$0xff] %v1615
      %1744 = vst [vmem:[#allocation2 + $0x78] sm:$0xff] %v1616
      %1745 = vst [vmem:[#allocation2 + $0x80] sm:$0xff] %v1617
      %1746 = vst [vmem:[#allocation2 + $0x88] sm:$0xff] %v1618
      %1747 = vst [vmem:[#allocation2 + $0x90] sm:$0xff] %v1619
      %1748 = vst [vmem:[#allocation2 + $0x98] sm:$0xff] %v1620
      %1749 = vst [vmem:[#allocation2 + $0xa0] sm:$0xff] %v1621
      %1750 = vst [vmem:[#allocation2 + $0xa8] sm:$0xff] %v1622
      %1751 = vst [vmem:[#allocation2 + $0xb0] sm:$0xff] %v1623
      %1752 = vst [vmem:[#allocation2 + $0xb8] sm:$0xff] %v1624
      %1753 = vst [vmem:[#allocation2 + $0xc0] sm:$0xff] %v1625
      %1754 = vst [vmem:[#allocation2 + $0xc8] sm:$0xff] %v1626
      %1755 = vst [vmem:[#allocation2 + $0xd0] sm:$0xff] %v1627
      %1756 = vst [vmem:[#allocation2 + $0xd8] sm:$0xff] %v1628
      %1757 = vst [vmem:[#allocation2 + $0xe0] sm:$0xff] %v1629
      %1758 = vst [vmem:[#allocation2 + $0xe8] sm:$0xff] %v1630
      %1759 = vst [vmem:[#allocation2 + $0xf0] sm:$0xff] %v1631
      %1760 = vst [vmem:[#allocation2 + $0xf8] sm:$0xff] %v1632
      %1761 = vst [vmem:[#allocation2 + $0x100] sm:$0xff] %v1633
      %1762 = vst [vmem:[#allocation2 + $0x108] sm:$0xff] %v1634
      %1763 = vst [vmem:[#allocation2 + $0x110] sm:$0xff] %v1635
      %1764 = vst [vmem:[#allocation2 + $0x118] sm:$0xff] %v1636
      %1765 = vst [vmem:[#allocation2 + $0x120] sm:$0xff] %v1637
      %1766 = vst [vmem:[#allocation2 + $0x128] sm:$0xff] %v1638
      %1767 = vst [vmem:[#allocation2 + $0x130] sm:$0xff] %v1639
      %1768 = vst [vmem:[#allocation2 + $0x138] sm:$0xff] %v1640
      %1769 = vst [vmem:[#allocation2 + $0x140] sm:$0xff] %v1641
      %1770 = vst [vmem:[#allocation2 + $0x148] sm:$0xff] %v1642
      %1771 = vst [vmem:[#allocation2 + $0x150] sm:$0xff] %v1643
      %1772 = vst [vmem:[#allocation2 + $0x158] sm:$0xff] %v1644
      %1773 = vst [vmem:[#allocation2 + $0x160] sm:$0xff] %v1645
      %1774 = vst [vmem:[#allocation2 + $0x168] sm:$0xff] %v1646
      %1775 = vst [vmem:[#allocation2 + $0x170] sm:$0xff] %v1647
      %1776 = vst [vmem:[#allocation2 + $0x178] sm:$0xff] %v1648
      %1777 = vst [vmem:[#allocation2 + $0x180] sm:$0xff] %v1649
      %1778 = vst [vmem:[#allocation2 + $0x188] sm:$0xff] %v1650
      %1779 = vst [vmem:[#allocation2 + $0x190] sm:$0xff] %v1651
      %1780 = vst [vmem:[#allocation2 + $0x198] sm:$0xff] %v1652
      %1781 = vst [vmem:[#allocation2 + $0x1a0] sm:$0xff] %v1653
      %1782 = vst [vmem:[#allocation2 + $0x1a8] sm:$0xff] %v1654
      %1783 = vst [vmem:[#allocation2 + $0x1b0] sm:$0xff] %v1655
      %1784 = vst [vmem:[#allocation2 + $0x1b8] sm:$0xff] %v1656
      %1785 = vst [vmem:[#allocation2 + $0x1c0] sm:$0xff] %v1657
      %1786 = vst [vmem:[#allocation2 + $0x1c8] sm:$0xff] %v1658
      %1787 = vst [vmem:[#allocation2 + $0x1d0] sm:$0xff] %v1659
      %1788 = vst [vmem:[#allocation2 + $0x1d8] sm:$0xff] %v1660
      %1789 = vst [vmem:[#allocation2 + $0x1e0] sm:$0xff] %v1661
      %1790 = vst [vmem:[#allocation2 + $0x1e8] sm:$0xff] %v1662
      %1791 = vst [vmem:[#allocation2 + $0x1f0] sm:$0xff] %v1663
      %1792 = vst [vmem:[#allocation2 + $0x1f8] sm:$0xff] %v1664
      %1793 = vst [vmem:[#allocation2 + $0x200] sm:$0xff] %v1665
      %1794 = vst [vmem:[#allocation2 + $0x208] sm:$0xff] %v1666
      %1795 = vst [vmem:[#allocation2 + $0x210] sm:$0xff] %v1667
      %1796 = vst [vmem:[#allocation2 + $0x218] sm:$0xff] %v1668
      %1797 = vst [vmem:[#allocation2 + $0x220] sm:$0xff] %v1669
      %1798 = vst [vmem:[#allocation2 + $0x228] sm:$0xff] %v1670
      %1799 = vst [vmem:[#allocation2 + $0x230] sm:$0xff] %v1671
      %1800 = vst [vmem:[#allocation2 + $0x238] sm:$0xff] %v1672
      %1801 = vst [vmem:[#allocation2 + $0x240] sm:$0xff] %v1673
      %1802 = vst [vmem:[#allocation2 + $0x248] sm:$0xff] %v1674
      %1803 = vst [vmem:[#allocation2 + $0x250] sm:$0xff] %v1675
      %1804 = vst [vmem:[#allocation2 + $0x258] sm:$0xff] %v1676
      %1805 = vst [vmem:[#allocation2 + $0x260] sm:$0xff] %v1677
      %1806 = vst [vmem:[#allocation2 + $0x268] sm:$0xff] %v1678
      %1807 = vst [vmem:[#allocation2 + $0x270] sm:$0xff] %v1679
      %1808 = vst [vmem:[#allocation2 + $0x278] sm:$0xff] %v1680
      %1809 = vst [vmem:[#allocation2 + $0x280] sm:$0xff] %v1681
      %1810 = vst [vmem:[#allocation2 + $0x288] sm:$0xff] %v1682
      %1811 = vst [vmem:[#allocation2 + $0x290] sm:$0xff] %v1683
      %1812 = vst [vmem:[#allocation2 + $0x298] sm:$0xff] %v1684
      %1813 = vst [vmem:[#allocation2 + $0x2a0] sm:$0xff] %v1685
      %1814 = vst [vmem:[#allocation2 + $0x2a8] sm:$0xff] %v1686
      %1815 = vst [vmem:[#allocation2 + $0x2b0] sm:$0xff] %v1687
      %1816 = vst [vmem:[#allocation2 + $0x2b8] sm:$0xff] %v1688
      %1817 = vst [vmem:[#allocation2 + $0x2c0] sm:$0xff] %v1689
      %1818 = vst [vmem:[#allocation2 + $0x2c8] sm:$0xff] %v1690
      %1819 = vst [vmem:[#allocation2 + $0x2d0] sm:$0xff] %v1691
      %1820 = vst [vmem:[#allocation2 + $0x2d8] sm:$0xff] %v1692
      %1821 = vst [vmem:[#allocation2 + $0x2e0] sm:$0xff] %v1693
      %1822 = vst [vmem:[#allocation2 + $0x2e8] sm:$0xff] %v1694
      %1823 = vst [vmem:[#allocation2 + $0x2f0] sm:$0xff] %v1695
      %1824 = vst [vmem:[#allocation2 + $0x2f8] sm:$0xff] %v1696
      %1825 = vst [vmem:[#allocation2 + $0x300] sm:$0xff] %v1697
      %1826 = vst [vmem:[#allocation2 + $0x308] sm:$0xff] %v1698
      %1827 = vst [vmem:[#allocation2 + $0x310] sm:$0xff] %v1699
      %1828 = vst [vmem:[#allocation2 + $0x318] sm:$0xff] %v1700
      %1829 = vst [vmem:[#allocation2 + $0x320] sm:$0xff] %v1701
      %1830 = vst [vmem:[#allocation2 + $0x328] sm:$0xff] %v1702
      %1831 = vst [vmem:[#allocation2 + $0x330] sm:$0xff] %v1703
      %1832 = vst [vmem:[#allocation2 + $0x338] sm:$0xff] %v1704
      %1833 = vst [vmem:[#allocation2 + $0x340] sm:$0xff] %v1705
      %1834 = vst [vmem:[#allocation2 + $0x348] sm:$0xff] %v1706
      %1835 = vst [vmem:[#allocation2 + $0x350] sm:$0xff] %v1707
      %1836 = vst [vmem:[#allocation2 + $0x358] sm:$0xff] %v1708
      %1837 = vst [vmem:[#allocation2 + $0x360] sm:$0xff] %v1709
      %1838 = vst [vmem:[#allocation2 + $0x368] sm:$0xff] %v1710
      %1839 = vst [vmem:[#allocation2 + $0x370] sm:$0xff] %v1711
      %1840 = vst [vmem:[#allocation2 + $0x378] sm:$0xff] %v1712
      %1841 = vst [vmem:[#allocation2 + $0x380] sm:$0xff] %v1713
      %1842 = vst [vmem:[#allocation2 + $0x388] sm:$0xff] %v1714
      %1843 = vst [vmem:[#allocation2 + $0x390] sm:$0xff] %v1715
      %1844 = vst [vmem:[#allocation2 + $0x398] sm:$0xff] %v1716
      %1845 = vst [vmem:[#allocation2 + $0x3a0] sm:$0xff] %v1717
      %1846 = vst [vmem:[#allocation2 + $0x3a8] sm:$0xff] %v1718
      %1847 = vst [vmem:[#allocation2 + $0x3b0] sm:$0xff] %v1719
      %1848 = vst [vmem:[#allocation2 + $0x3b8] sm:$0xff] %v1720
      %1849 = vst [vmem:[#allocation2 + $0x3c0] sm:$0xff] %v1721
      %1850 = vst [vmem:[#allocation2 + $0x3c8] sm:$0xff] %v1722
      %1851 = vst [vmem:[#allocation2 + $0x3d0] sm:$0xff] %v1723
      %1852 = vst [vmem:[#allocation2 + $0x3d8] sm:$0xff] %v1724
      %1853 = vst [vmem:[#allocation2 + $0x3e0] sm:$0xff] %v1725
      %1854 = vst [vmem:[#allocation2 + $0x3e8] sm:$0xff] %v1726
      %1855 = vst [vmem:[#allocation2 + $0x3f0] sm:$0xff] %v1727
      %1856 = vst [vmem:[#allocation2 + $0x3f8] sm:$0xff] %v1728
      // Predicated region
      $region37: #{discriminator2_patchs_forward.4} parent=31 // pred_check
        %p1857 = pneg %p220
      $region38: #{discriminator2_patchs_forward.4} parent=31 // pred_check_branch
        %1859 = sbr.rel (%p1857) target = $region40
      $region39: #{discriminator2_patchs_forward.4} parent=31 // pred_region
        %v1860 = vld [vmem:[#allocation2] sm:$0xff]
        %v1861 = vld [vmem:[#allocation2 + $0x8] sm:$0xff]
        %v1862 = vld [vmem:[#allocation2 + $0x10] sm:$0xff]
        %v1863 = vld [vmem:[#allocation2 + $0x18] sm:$0xff]
        %v1864 = vld [vmem:[#allocation2 + $0x20] sm:$0xff]
        %v1865 = vld [vmem:[#allocation2 + $0x28] sm:$0xff]
        %v1866 = vld [vmem:[#allocation2 + $0x30] sm:$0xff]
        %v1867 = vld [vmem:[#allocation2 + $0x38] sm:$0xff]
        %v1868 = vld [vmem:[#allocation2 + $0x40] sm:$0xff]
        %v1869 = vld [vmem:[#allocation2 + $0x48] sm:$0xff]
        %v1870 = vld [vmem:[#allocation2 + $0x50] sm:$0xff]
        %v1871 = vld [vmem:[#allocation2 + $0x58] sm:$0xff]
        %v1872 = vld [vmem:[#allocation2 + $0x60] sm:$0xff]
        %v1873 = vld [vmem:[#allocation2 + $0x68] sm:$0xff]
        %v1874 = vld [vmem:[#allocation2 + $0x70] sm:$0xff]
        %v1875 = vld [vmem:[#allocation2 + $0x78] sm:$0xff]
        %v1876 = vld [vmem:[#allocation2 + $0x80] sm:$0xff]
        %v1877 = vld [vmem:[#allocation2 + $0x88] sm:$0xff]
        %v1878 = vld [vmem:[#allocation2 + $0x90] sm:$0xff]
        %v1879 = vld [vmem:[#allocation2 + $0x98] sm:$0xff]
        %v1880 = vld [vmem:[#allocation2 + $0xa0] sm:$0xff]
        %v1881 = vld [vmem:[#allocation2 + $0xa8] sm:$0xff]
        %v1882 = vld [vmem:[#allocation2 + $0xb0] sm:$0xff]
        %v1883 = vld [vmem:[#allocation2 + $0xb8] sm:$0xff]
        %v1884 = vld [vmem:[#allocation2 + $0xc0] sm:$0xff]
        %v1885 = vld [vmem:[#allocation2 + $0xc8] sm:$0xff]
        %v1886 = vld [vmem:[#allocation2 + $0xd0] sm:$0xff]
        %v1887 = vld [vmem:[#allocation2 + $0xd8] sm:$0xff]
        %v1888 = vld [vmem:[#allocation2 + $0xe0] sm:$0xff]
        %v1889 = vld [vmem:[#allocation2 + $0xe8] sm:$0xff]
        %v1890 = vld [vmem:[#allocation2 + $0xf0] sm:$0xff]
        %v1891 = vld [vmem:[#allocation2 + $0xf8] sm:$0xff]
        %v1892 = vld [vmem:[#allocation2 + $0x100] sm:$0xff]
        %v1893 = vld [vmem:[#allocation2 + $0x108] sm:$0xff]
        %v1894 = vld [vmem:[#allocation2 + $0x110] sm:$0xff]
        %v1895 = vld [vmem:[#allocation2 + $0x118] sm:$0xff]
        %v1896 = vld [vmem:[#allocation2 + $0x120] sm:$0xff]
        %v1897 = vld [vmem:[#allocation2 + $0x128] sm:$0xff]
        %v1898 = vld [vmem:[#allocation2 + $0x130] sm:$0xff]
        %v1899 = vld [vmem:[#allocation2 + $0x138] sm:$0xff]
        %v1900 = vld [vmem:[#allocation2 + $0x140] sm:$0xff]
        %v1901 = vld [vmem:[#allocation2 + $0x148] sm:$0xff]
        %v1902 = vld [vmem:[#allocation2 + $0x150] sm:$0xff]
        %v1903 = vld [vmem:[#allocation2 + $0x158] sm:$0xff]
        %v1904 = vld [vmem:[#allocation2 + $0x160] sm:$0xff]
        %v1905 = vld [vmem:[#allocation2 + $0x168] sm:$0xff]
        %v1906 = vld [vmem:[#allocation2 + $0x170] sm:$0xff]
        %v1907 = vld [vmem:[#allocation2 + $0x178] sm:$0xff]
        %v1908 = vld [vmem:[#allocation2 + $0x180] sm:$0xff]
        %v1909 = vld [vmem:[#allocation2 + $0x188] sm:$0xff]
        %v1910 = vld [vmem:[#allocation2 + $0x190] sm:$0xff]
        %v1911 = vld [vmem:[#allocation2 + $0x198] sm:$0xff]
        %v1912 = vld [vmem:[#allocation2 + $0x1a0] sm:$0xff]
        %v1913 = vld [vmem:[#allocation2 + $0x1a8] sm:$0xff]
        %v1914 = vld [vmem:[#allocation2 + $0x1b0] sm:$0xff]
        %v1915 = vld [vmem:[#allocation2 + $0x1b8] sm:$0xff]
        %v1916 = vld [vmem:[#allocation2 + $0x1c0] sm:$0xff]
        %v1917 = vld [vmem:[#allocation2 + $0x1c8] sm:$0xff]
        %v1918 = vld [vmem:[#allocation2 + $0x1d0] sm:$0xff]
        %v1919 = vld [vmem:[#allocation2 + $0x1d8] sm:$0xff]
        %v1920 = vld [vmem:[#allocation2 + $0x1e0] sm:$0xff]
        %v1921 = vld [vmem:[#allocation2 + $0x1e8] sm:$0xff]
        %v1922 = vld [vmem:[#allocation2 + $0x1f0] sm:$0xff]
        %v1923 = vld [vmem:[#allocation2 + $0x1f8] sm:$0xff]
        %v1924 = vld [vmem:[#allocation2 + $0x200] sm:$0xff]
        %v1925 = vld [vmem:[#allocation2 + $0x208] sm:$0xff]
        %v1926 = vld [vmem:[#allocation2 + $0x210] sm:$0xff]
        %v1927 = vld [vmem:[#allocation2 + $0x218] sm:$0xff]
        %v1928 = vld [vmem:[#allocation2 + $0x220] sm:$0xff]
        %v1929 = vld [vmem:[#allocation2 + $0x228] sm:$0xff]
        %v1930 = vld [vmem:[#allocation2 + $0x230] sm:$0xff]
        %v1931 = vld [vmem:[#allocation2 + $0x238] sm:$0xff]
        %v1932 = vld [vmem:[#allocation2 + $0x240] sm:$0xff]
        %v1933 = vld [vmem:[#allocation2 + $0x248] sm:$0xff]
        %v1934 = vld [vmem:[#allocation2 + $0x250] sm:$0xff]
        %v1935 = vld [vmem:[#allocation2 + $0x258] sm:$0xff]
        %v1936 = vld [vmem:[#allocation2 + $0x260] sm:$0xff]
        %v1937 = vld [vmem:[#allocation2 + $0x268] sm:$0xff]
        %v1938 = vld [vmem:[#allocation2 + $0x270] sm:$0xff]
        %v1939 = vld [vmem:[#allocation2 + $0x278] sm:$0xff]
        %v1940 = vld [vmem:[#allocation2 + $0x280] sm:$0xff]
        %v1941 = vld [vmem:[#allocation2 + $0x288] sm:$0xff]
        %v1942 = vld [vmem:[#allocation2 + $0x290] sm:$0xff]
        %v1943 = vld [vmem:[#allocation2 + $0x298] sm:$0xff]
        %v1944 = vld [vmem:[#allocation2 + $0x2a0] sm:$0xff]
        %v1945 = vld [vmem:[#allocation2 + $0x2a8] sm:$0xff]
        %v1946 = vld [vmem:[#allocation2 + $0x2b0] sm:$0xff]
        %v1947 = vld [vmem:[#allocation2 + $0x2b8] sm:$0xff]
        %v1948 = vld [vmem:[#allocation2 + $0x2c0] sm:$0xff]
        %v1949 = vld [vmem:[#allocation2 + $0x2c8] sm:$0xff]
        %v1950 = vld [vmem:[#allocation2 + $0x2d0] sm:$0xff]
        %v1951 = vld [vmem:[#allocation2 + $0x2d8] sm:$0xff]
        %v1952 = vld [vmem:[#allocation2 + $0x2e0] sm:$0xff]
        %v1953 = vld [vmem:[#allocation2 + $0x2e8] sm:$0xff]
        %v1954 = vld [vmem:[#allocation2 + $0x2f0] sm:$0xff]
        %v1955 = vld [vmem:[#allocation2 + $0x2f8] sm:$0xff]
        %v1956 = vld [vmem:[#allocation2 + $0x300] sm:$0xff]
        %v1957 = vld [vmem:[#allocation2 + $0x308] sm:$0xff]
        %v1958 = vld [vmem:[#allocation2 + $0x310] sm:$0xff]
        %v1959 = vld [vmem:[#allocation2 + $0x318] sm:$0xff]
        %v1960 = vld [vmem:[#allocation2 + $0x320] sm:$0xff]
        %v1961 = vld [vmem:[#allocation2 + $0x328] sm:$0xff]
        %v1962 = vld [vmem:[#allocation2 + $0x330] sm:$0xff]
        %v1963 = vld [vmem:[#allocation2 + $0x338] sm:$0xff]
        %v1964 = vld [vmem:[#allocation2 + $0x340] sm:$0xff]
        %v1965 = vld [vmem:[#allocation2 + $0x348] sm:$0xff]
        %v1966 = vld [vmem:[#allocation2 + $0x350] sm:$0xff]
        %v1967 = vld [vmem:[#allocation2 + $0x358] sm:$0xff]
        %v1968 = vld [vmem:[#allocation2 + $0x360] sm:$0xff]
        %v1969 = vld [vmem:[#allocation2 + $0x368] sm:$0xff]
        %v1970 = vld [vmem:[#allocation2 + $0x370] sm:$0xff]
        %v1971 = vld [vmem:[#allocation2 + $0x378] sm:$0xff]
        %v1972 = vld [vmem:[#allocation2 + $0x380] sm:$0xff]
        %v1973 = vld [vmem:[#allocation2 + $0x388] sm:$0xff]
        %v1974 = vld [vmem:[#allocation2 + $0x390] sm:$0xff]
        %v1975 = vld [vmem:[#allocation2 + $0x398] sm:$0xff]
        %v1976 = vld [vmem:[#allocation2 + $0x3a0] sm:$0xff]
        %v1977 = vld [vmem:[#allocation2 + $0x3a8] sm:$0xff]
        %v1978 = vld [vmem:[#allocation2 + $0x3b0] sm:$0xff]
        %v1979 = vld [vmem:[#allocation2 + $0x3b8] sm:$0xff]
        %v1980 = vld [vmem:[#allocation2 + $0x3c0] sm:$0xff]
        %v1981 = vld [vmem:[#allocation2 + $0x3c8] sm:$0xff]
        %v1982 = vld [vmem:[#allocation2 + $0x3d0] sm:$0xff]
        %v1983 = vld [vmem:[#allocation2 + $0x3d8] sm:$0xff]
        %v1984 = vld [vmem:[#allocation2 + $0x3e0] sm:$0xff]
        %v1985 = vld [vmem:[#allocation2 + $0x3e8] sm:$0xff]
        %v1986 = vld [vmem:[#allocation2 + $0x3f0] sm:$0xff]
        %v1987 = vld [vmem:[#allocation2 + $0x3f8] sm:$0xff]
        %v1988 = vld [vmem:[%s2] sm:$0x1]
        %v1990 = vlaneseq
        %v1991 = vshrl.u32 %v1990, 7
        %v1992 = vsub.s32 0, %v1991
        %v1993 = vrot.slane %v1988, %v1992
        %v1995 = vadd.f32 %v1860, %v1993
        %v1996 = vadd.f32 %v1861, %v1993
        %v1997 = vadd.f32 %v1862, %v1993
        %v1998 = vadd.f32 %v1863, %v1993
        %v1999 = vadd.f32 %v1864, %v1993
        %v2000 = vadd.f32 %v1865, %v1993
        %v2001 = vadd.f32 %v1866, %v1993
        %v2002 = vadd.f32 %v1867, %v1993
        %v2003 = vadd.f32 %v1868, %v1993
        %v2004 = vadd.f32 %v1869, %v1993
        %v2005 = vadd.f32 %v1870, %v1993
        %v2006 = vadd.f32 %v1871, %v1993
        %v2007 = vadd.f32 %v1872, %v1993
        %v2008 = vadd.f32 %v1873, %v1993
        %v2009 = vadd.f32 %v1874, %v1993
        %v2010 = vadd.f32 %v1875, %v1993
        %v2011 = vadd.f32 %v1876, %v1993
        %v2012 = vadd.f32 %v1877, %v1993
        %v2013 = vadd.f32 %v1878, %v1993
        %v2014 = vadd.f32 %v1879, %v1993
        %v2015 = vadd.f32 %v1880, %v1993
        %v2016 = vadd.f32 %v1881, %v1993
        %v2017 = vadd.f32 %v1882, %v1993
        %v2018 = vadd.f32 %v1883, %v1993
        %v2019 = vadd.f32 %v1884, %v1993
        %v2020 = vadd.f32 %v1885, %v1993
        %v2021 = vadd.f32 %v1886, %v1993
        %v2022 = vadd.f32 %v1887, %v1993
        %v2023 = vadd.f32 %v1888, %v1993
        %v2024 = vadd.f32 %v1889, %v1993
        %v2025 = vadd.f32 %v1890, %v1993
        %v2026 = vadd.f32 %v1891, %v1993
        %v2027 = vadd.f32 %v1892, %v1993
        %v2028 = vadd.f32 %v1893, %v1993
        %v2029 = vadd.f32 %v1894, %v1993
        %v2030 = vadd.f32 %v1895, %v1993
        %v2031 = vadd.f32 %v1896, %v1993
        %v2032 = vadd.f32 %v1897, %v1993
        %v2033 = vadd.f32 %v1898, %v1993
        %v2034 = vadd.f32 %v1899, %v1993
        %v2035 = vadd.f32 %v1900, %v1993
        %v2036 = vadd.f32 %v1901, %v1993
        %v2037 = vadd.f32 %v1902, %v1993
        %v2038 = vadd.f32 %v1903, %v1993
        %v2039 = vadd.f32 %v1904, %v1993
        %v2040 = vadd.f32 %v1905, %v1993
        %v2041 = vadd.f32 %v1906, %v1993
        %v2042 = vadd.f32 %v1907, %v1993
        %v2043 = vadd.f32 %v1908, %v1993
        %v2044 = vadd.f32 %v1909, %v1993
        %v2045 = vadd.f32 %v1910, %v1993
        %v2046 = vadd.f32 %v1911, %v1993
        %v2047 = vadd.f32 %v1912, %v1993
        %v2048 = vadd.f32 %v1913, %v1993
        %v2049 = vadd.f32 %v1914, %v1993
        %v2050 = vadd.f32 %v1915, %v1993
        %v2051 = vadd.f32 %v1916, %v1993
        %v2052 = vadd.f32 %v1917, %v1993
        %v2053 = vadd.f32 %v1918, %v1993
        %v2054 = vadd.f32 %v1919, %v1993
        %v2055 = vadd.f32 %v1920, %v1993
        %v2056 = vadd.f32 %v1921, %v1993
        %v2057 = vadd.f32 %v1922, %v1993
        %v2058 = vadd.f32 %v1923, %v1993
        %v2059 = vadd.f32 %v1924, %v1993
        %v2060 = vadd.f32 %v1925, %v1993
        %v2061 = vadd.f32 %v1926, %v1993
        %v2062 = vadd.f32 %v1927, %v1993
        %v2063 = vadd.f32 %v1928, %v1993
        %v2064 = vadd.f32 %v1929, %v1993
        %v2065 = vadd.f32 %v1930, %v1993
        %v2066 = vadd.f32 %v1931, %v1993
        %v2067 = vadd.f32 %v1932, %v1993
        %v2068 = vadd.f32 %v1933, %v1993
        %v2069 = vadd.f32 %v1934, %v1993
        %v2070 = vadd.f32 %v1935, %v1993
        %v2071 = vadd.f32 %v1936, %v1993
        %v2072 = vadd.f32 %v1937, %v1993
        %v2073 = vadd.f32 %v1938, %v1993
        %v2074 = vadd.f32 %v1939, %v1993
        %v2075 = vadd.f32 %v1940, %v1993
        %v2076 = vadd.f32 %v1941, %v1993
        %v2077 = vadd.f32 %v1942, %v1993
        %v2078 = vadd.f32 %v1943, %v1993
        %v2079 = vadd.f32 %v1944, %v1993
        %v2080 = vadd.f32 %v1945, %v1993
        %v2081 = vadd.f32 %v1946, %v1993
        %v2082 = vadd.f32 %v1947, %v1993
        %v2083 = vadd.f32 %v1948, %v1993
        %v2084 = vadd.f32 %v1949, %v1993
        %v2085 = vadd.f32 %v1950, %v1993
        %v2086 = vadd.f32 %v1951, %v1993
        %v2087 = vadd.f32 %v1952, %v1993
        %v2088 = vadd.f32 %v1953, %v1993
        %v2089 = vadd.f32 %v1954, %v1993
        %v2090 = vadd.f32 %v1955, %v1993
        %v2091 = vadd.f32 %v1956, %v1993
        %v2092 = vadd.f32 %v1957, %v1993
        %v2093 = vadd.f32 %v1958, %v1993
        %v2094 = vadd.f32 %v1959, %v1993
        %v2095 = vadd.f32 %v1960, %v1993
        %v2096 = vadd.f32 %v1961, %v1993
        %v2097 = vadd.f32 %v1962, %v1993
        %v2098 = vadd.f32 %v1963, %v1993
        %v2099 = vadd.f32 %v1964, %v1993
        %v2100 = vadd.f32 %v1965, %v1993
        %v2101 = vadd.f32 %v1966, %v1993
        %v2102 = vadd.f32 %v1967, %v1993
        %v2103 = vadd.f32 %v1968, %v1993
        %v2104 = vadd.f32 %v1969, %v1993
        %v2105 = vadd.f32 %v1970, %v1993
        %v2106 = vadd.f32 %v1971, %v1993
        %v2107 = vadd.f32 %v1972, %v1993
        %v2108 = vadd.f32 %v1973, %v1993
        %v2109 = vadd.f32 %v1974, %v1993
        %v2110 = vadd.f32 %v1975, %v1993
        %v2111 = vadd.f32 %v1976, %v1993
        %v2112 = vadd.f32 %v1977, %v1993
        %v2113 = vadd.f32 %v1978, %v1993
        %v2114 = vadd.f32 %v1979, %v1993
        %v2115 = vadd.f32 %v1980, %v1993
        %v2116 = vadd.f32 %v1981, %v1993
        %v2117 = vadd.f32 %v1982, %v1993
        %v2118 = vadd.f32 %v1983, %v1993
        %v2119 = vadd.f32 %v1984, %v1993
        %v2120 = vadd.f32 %v1985, %v1993
        %v2121 = vadd.f32 %v1986, %v1993
        %v2122 = vadd.f32 %v1987, %v1993
        %vm2123 = vcmp.ge.f32.partialorder %v1995, 0.0
        %vm2124 = vcmp.ge.f32.partialorder %v1996, 0.0
        %vm2125 = vcmp.ge.f32.partialorder %v1997, 0.0
        %vm2126 = vcmp.ge.f32.partialorder %v1998, 0.0
        %vm2127 = vcmp.ge.f32.partialorder %v1999, 0.0
        %vm2128 = vcmp.ge.f32.partialorder %v2000, 0.0
        %vm2129 = vcmp.ge.f32.partialorder %v2001, 0.0
        %vm2130 = vcmp.ge.f32.partialorder %v2002, 0.0
        %vm2131 = vcmp.ge.f32.partialorder %v2003, 0.0
        %vm2132 = vcmp.ge.f32.partialorder %v2004, 0.0
        %vm2133 = vcmp.ge.f32.partialorder %v2005, 0.0
        %vm2134 = vcmp.ge.f32.partialorder %v2006, 0.0
        %vm2135 = vcmp.ge.f32.partialorder %v2007, 0.0
        %vm2136 = vcmp.ge.f32.partialorder %v2008, 0.0
        %vm2137 = vcmp.ge.f32.partialorder %v2009, 0.0
        %vm2138 = vcmp.ge.f32.partialorder %v2010, 0.0
        %vm2139 = vcmp.ge.f32.partialorder %v2011, 0.0
        %vm2140 = vcmp.ge.f32.partialorder %v2012, 0.0
        %vm2141 = vcmp.ge.f32.partialorder %v2013, 0.0
        %vm2142 = vcmp.ge.f32.partialorder %v2014, 0.0
        %vm2143 = vcmp.ge.f32.partialorder %v2015, 0.0
        %vm2144 = vcmp.ge.f32.partialorder %v2016, 0.0
        %vm2145 = vcmp.ge.f32.partialorder %v2017, 0.0
        %vm2146 = vcmp.ge.f32.partialorder %v2018, 0.0
        %vm2147 = vcmp.ge.f32.partialorder %v2019, 0.0
        %vm2148 = vcmp.ge.f32.partialorder %v2020, 0.0
        %vm2149 = vcmp.ge.f32.partialorder %v2021, 0.0
        %vm2150 = vcmp.ge.f32.partialorder %v2022, 0.0
        %vm2151 = vcmp.ge.f32.partialorder %v2023, 0.0
        %vm2152 = vcmp.ge.f32.partialorder %v2024, 0.0
        %vm2153 = vcmp.ge.f32.partialorder %v2025, 0.0
        %vm2154 = vcmp.ge.f32.partialorder %v2026, 0.0
        %vm2155 = vcmp.ge.f32.partialorder %v2027, 0.0
        %vm2156 = vcmp.ge.f32.partialorder %v2028, 0.0
        %vm2157 = vcmp.ge.f32.partialorder %v2029, 0.0
        %vm2158 = vcmp.ge.f32.partialorder %v2030, 0.0
        %vm2159 = vcmp.ge.f32.partialorder %v2031, 0.0
        %vm2160 = vcmp.ge.f32.partialorder %v2032, 0.0
        %vm2161 = vcmp.ge.f32.partialorder %v2033, 0.0
        %vm2162 = vcmp.ge.f32.partialorder %v2034, 0.0
        %vm2163 = vcmp.ge.f32.partialorder %v2035, 0.0
        %vm2164 = vcmp.ge.f32.partialorder %v2036, 0.0
        %vm2165 = vcmp.ge.f32.partialorder %v2037, 0.0
        %vm2166 = vcmp.ge.f32.partialorder %v2038, 0.0
        %vm2167 = vcmp.ge.f32.partialorder %v2039, 0.0
        %vm2168 = vcmp.ge.f32.partialorder %v2040, 0.0
        %vm2169 = vcmp.ge.f32.partialorder %v2041, 0.0
        %vm2170 = vcmp.ge.f32.partialorder %v2042, 0.0
        %vm2171 = vcmp.ge.f32.partialorder %v2043, 0.0
        %vm2172 = vcmp.ge.f32.partialorder %v2044, 0.0
        %vm2173 = vcmp.ge.f32.partialorder %v2045, 0.0
        %vm2174 = vcmp.ge.f32.partialorder %v2046, 0.0
        %vm2175 = vcmp.ge.f32.partialorder %v2047, 0.0
        %vm2176 = vcmp.ge.f32.partialorder %v2048, 0.0
        %vm2177 = vcmp.ge.f32.partialorder %v2049, 0.0
        %vm2178 = vcmp.ge.f32.partialorder %v2050, 0.0
        %vm2179 = vcmp.ge.f32.partialorder %v2051, 0.0
        %vm2180 = vcmp.ge.f32.partialorder %v2052, 0.0
        %vm2181 = vcmp.ge.f32.partialorder %v2053, 0.0
        %vm2182 = vcmp.ge.f32.partialorder %v2054, 0.0
        %vm2183 = vcmp.ge.f32.partialorder %v2055, 0.0
        %vm2184 = vcmp.ge.f32.partialorder %v2056, 0.0
        %vm2185 = vcmp.ge.f32.partialorder %v2057, 0.0
        %vm2186 = vcmp.ge.f32.partialorder %v2058, 0.0
        %vm2187 = vcmp.ge.f32.partialorder %v2059, 0.0
        %vm2188 = vcmp.ge.f32.partialorder %v2060, 0.0
        %vm2189 = vcmp.ge.f32.partialorder %v2061, 0.0
        %vm2190 = vcmp.ge.f32.partialorder %v2062, 0.0
        %vm2191 = vcmp.ge.f32.partialorder %v2063, 0.0
        %vm2192 = vcmp.ge.f32.partialorder %v2064, 0.0
        %vm2193 = vcmp.ge.f32.partialorder %v2065, 0.0
        %vm2194 = vcmp.ge.f32.partialorder %v2066, 0.0
        %vm2195 = vcmp.ge.f32.partialorder %v2067, 0.0
        %vm2196 = vcmp.ge.f32.partialorder %v2068, 0.0
        %vm2197 = vcmp.ge.f32.partialorder %v2069, 0.0
        %vm2198 = vcmp.ge.f32.partialorder %v2070, 0.0
        %vm2199 = vcmp.ge.f32.partialorder %v2071, 0.0
        %vm2200 = vcmp.ge.f32.partialorder %v2072, 0.0
        %vm2201 = vcmp.ge.f32.partialorder %v2073, 0.0
        %vm2202 = vcmp.ge.f32.partialorder %v2074, 0.0
        %vm2203 = vcmp.ge.f32.partialorder %v2075, 0.0
        %vm2204 = vcmp.ge.f32.partialorder %v2076, 0.0
        %vm2205 = vcmp.ge.f32.partialorder %v2077, 0.0
        %vm2206 = vcmp.ge.f32.partialorder %v2078, 0.0
        %vm2207 = vcmp.ge.f32.partialorder %v2079, 0.0
        %vm2208 = vcmp.ge.f32.partialorder %v2080, 0.0
        %vm2209 = vcmp.ge.f32.partialorder %v2081, 0.0
        %vm2210 = vcmp.ge.f32.partialorder %v2082, 0.0
        %vm2211 = vcmp.ge.f32.partialorder %v2083, 0.0
        %vm2212 = vcmp.ge.f32.partialorder %v2084, 0.0
        %vm2213 = vcmp.ge.f32.partialorder %v2085, 0.0
        %vm2214 = vcmp.ge.f32.partialorder %v2086, 0.0
        %vm2215 = vcmp.ge.f32.partialorder %v2087, 0.0
        %vm2216 = vcmp.ge.f32.partialorder %v2088, 0.0
        %vm2217 = vcmp.ge.f32.partialorder %v2089, 0.0
        %vm2218 = vcmp.ge.f32.partialorder %v2090, 0.0
        %vm2219 = vcmp.ge.f32.partialorder %v2091, 0.0
        %vm2220 = vcmp.ge.f32.partialorder %v2092, 0.0
        %vm2221 = vcmp.ge.f32.partialorder %v2093, 0.0
        %vm2222 = vcmp.ge.f32.partialorder %v2094, 0.0
        %vm2223 = vcmp.ge.f32.partialorder %v2095, 0.0
        %vm2224 = vcmp.ge.f32.partialorder %v2096, 0.0
        %vm2225 = vcmp.ge.f32.partialorder %v2097, 0.0
        %vm2226 = vcmp.ge.f32.partialorder %v2098, 0.0
        %vm2227 = vcmp.ge.f32.partialorder %v2099, 0.0
        %vm2228 = vcmp.ge.f32.partialorder %v2100, 0.0
        %vm2229 = vcmp.ge.f32.partialorder %v2101, 0.0
        %vm2230 = vcmp.ge.f32.partialorder %v2102, 0.0
        %vm2231 = vcmp.ge.f32.partialorder %v2103, 0.0
        %vm2232 = vcmp.ge.f32.partialorder %v2104, 0.0
        %vm2233 = vcmp.ge.f32.partialorder %v2105, 0.0
        %vm2234 = vcmp.ge.f32.partialorder %v2106, 0.0
        %vm2235 = vcmp.ge.f32.partialorder %v2107, 0.0
        %vm2236 = vcmp.ge.f32.partialorder %v2108, 0.0
        %vm2237 = vcmp.ge.f32.partialorder %v2109, 0.0
        %vm2238 = vcmp.ge.f32.partialorder %v2110, 0.0
        %vm2239 = vcmp.ge.f32.partialorder %v2111, 0.0
        %vm2240 = vcmp.ge.f32.partialorder %v2112, 0.0
        %vm2241 = vcmp.ge.f32.partialorder %v2113, 0.0
        %vm2242 = vcmp.ge.f32.partialorder %v2114, 0.0
        %vm2243 = vcmp.ge.f32.partialorder %v2115, 0.0
        %vm2244 = vcmp.ge.f32.partialorder %v2116, 0.0
        %vm2245 = vcmp.ge.f32.partialorder %v2117, 0.0
        %vm2246 = vcmp.ge.f32.partialorder %v2118, 0.0
        %vm2247 = vcmp.ge.f32.partialorder %v2119, 0.0
        %vm2248 = vcmp.ge.f32.partialorder %v2120, 0.0
        %vm2249 = vcmp.ge.f32.partialorder %v2121, 0.0
        %vm2250 = vcmp.ge.f32.partialorder %v2122, 0.0
        %v2251 = vmul.f32 %v1995, 0.2
        %v2252 = vmul.f32 %v1996, 0.2
        %v2253 = vmul.f32 %v1997, 0.2
        %v2254 = vmul.f32 %v1998, 0.2
        %v2255 = vmul.f32 %v1999, 0.2
        %v2256 = vmul.f32 %v2000, 0.2
        %v2257 = vmul.f32 %v2001, 0.2
        %v2258 = vmul.f32 %v2002, 0.2
        %v2259 = vmul.f32 %v2003, 0.2
        %v2260 = vmul.f32 %v2004, 0.2
        %v2261 = vmul.f32 %v2005, 0.2
        %v2262 = vmul.f32 %v2006, 0.2
        %v2263 = vmul.f32 %v2007, 0.2
        %v2264 = vmul.f32 %v2008, 0.2
        %v2265 = vmul.f32 %v2009, 0.2
        %v2266 = vmul.f32 %v2010, 0.2
        %v2267 = vmul.f32 %v2011, 0.2
        %v2268 = vmul.f32 %v2012, 0.2
        %v2269 = vmul.f32 %v2013, 0.2
        %v2270 = vmul.f32 %v2014, 0.2
        %v2271 = vmul.f32 %v2015, 0.2
        %v2272 = vmul.f32 %v2016, 0.2
        %v2273 = vmul.f32 %v2017, 0.2
        %v2274 = vmul.f32 %v2018, 0.2
        %v2275 = vmul.f32 %v2019, 0.2
        %v2276 = vmul.f32 %v2020, 0.2
        %v2277 = vmul.f32 %v2021, 0.2
        %v2278 = vmul.f32 %v2022, 0.2
        %v2279 = vmul.f32 %v2023, 0.2
        %v2280 = vmul.f32 %v2024, 0.2
        %v2281 = vmul.f32 %v2025, 0.2
        %v2282 = vmul.f32 %v2026, 0.2
        %v2283 = vmul.f32 %v2027, 0.2
        %v2284 = vmul.f32 %v2028, 0.2
        %v2285 = vmul.f32 %v2029, 0.2
        %v2286 = vmul.f32 %v2030, 0.2
        %v2287 = vmul.f32 %v2031, 0.2
        %v2288 = vmul.f32 %v2032, 0.2
        %v2289 = vmul.f32 %v2033, 0.2
        %v2290 = vmul.f32 %v2034, 0.2
        %v2291 = vmul.f32 %v2035, 0.2
        %v2292 = vmul.f32 %v2036, 0.2
        %v2293 = vmul.f32 %v2037, 0.2
        %v2294 = vmul.f32 %v2038, 0.2
        %v2295 = vmul.f32 %v2039, 0.2
        %v2296 = vmul.f32 %v2040, 0.2
        %v2297 = vmul.f32 %v2041, 0.2
        %v2298 = vmul.f32 %v2042, 0.2
        %v2299 = vmul.f32 %v2043, 0.2
        %v2300 = vmul.f32 %v2044, 0.2
        %v2301 = vmul.f32 %v2045, 0.2
        %v2302 = vmul.f32 %v2046, 0.2
        %v2303 = vmul.f32 %v2047, 0.2
        %v2304 = vmul.f32 %v2048, 0.2
        %v2305 = vmul.f32 %v2049, 0.2
        %v2306 = vmul.f32 %v2050, 0.2
        %v2307 = vmul.f32 %v2051, 0.2
        %v2308 = vmul.f32 %v2052, 0.2
        %v2309 = vmul.f32 %v2053, 0.2
        %v2310 = vmul.f32 %v2054, 0.2
        %v2311 = vmul.f32 %v2055, 0.2
        %v2312 = vmul.f32 %v2056, 0.2
        %v2313 = vmul.f32 %v2057, 0.2
        %v2314 = vmul.f32 %v2058, 0.2
        %v2315 = vmul.f32 %v2059, 0.2
        %v2316 = vmul.f32 %v2060, 0.2
        %v2317 = vmul.f32 %v2061, 0.2
        %v2318 = vmul.f32 %v2062, 0.2
        %v2319 = vmul.f32 %v2063, 0.2
        %v2320 = vmul.f32 %v2064, 0.2
        %v2321 = vmul.f32 %v2065, 0.2
        %v2322 = vmul.f32 %v2066, 0.2
        %v2323 = vmul.f32 %v2067, 0.2
        %v2324 = vmul.f32 %v2068, 0.2
        %v2325 = vmul.f32 %v2069, 0.2
        %v2326 = vmul.f32 %v2070, 0.2
        %v2327 = vmul.f32 %v2071, 0.2
        %v2328 = vmul.f32 %v2072, 0.2
        %v2329 = vmul.f32 %v2073, 0.2
        %v2330 = vmul.f32 %v2074, 0.2
        %v2331 = vmul.f32 %v2075, 0.2
        %v2332 = vmul.f32 %v2076, 0.2
        %v2333 = vmul.f32 %v2077, 0.2
        %v2334 = vmul.f32 %v2078, 0.2
        %v2335 = vmul.f32 %v2079, 0.2
        %v2336 = vmul.f32 %v2080, 0.2
        %v2337 = vmul.f32 %v2081, 0.2
        %v2338 = vmul.f32 %v2082, 0.2
        %v2339 = vmul.f32 %v2083, 0.2
        %v2340 = vmul.f32 %v2084, 0.2
        %v2341 = vmul.f32 %v2085, 0.2
        %v2342 = vmul.f32 %v2086, 0.2
        %v2343 = vmul.f32 %v2087, 0.2
        %v2344 = vmul.f32 %v2088, 0.2
        %v2345 = vmul.f32 %v2089, 0.2
        %v2346 = vmul.f32 %v2090, 0.2
        %v2347 = vmul.f32 %v2091, 0.2
        %v2348 = vmul.f32 %v2092, 0.2
        %v2349 = vmul.f32 %v2093, 0.2
        %v2350 = vmul.f32 %v2094, 0.2
        %v2351 = vmul.f32 %v2095, 0.2
        %v2352 = vmul.f32 %v2096, 0.2
        %v2353 = vmul.f32 %v2097, 0.2
        %v2354 = vmul.f32 %v2098, 0.2
        %v2355 = vmul.f32 %v2099, 0.2
        %v2356 = vmul.f32 %v2100, 0.2
        %v2357 = vmul.f32 %v2101, 0.2
        %v2358 = vmul.f32 %v2102, 0.2
        %v2359 = vmul.f32 %v2103, 0.2
        %v2360 = vmul.f32 %v2104, 0.2
        %v2361 = vmul.f32 %v2105, 0.2
        %v2362 = vmul.f32 %v2106, 0.2
        %v2363 = vmul.f32 %v2107, 0.2
        %v2364 = vmul.f32 %v2108, 0.2
        %v2365 = vmul.f32 %v2109, 0.2
        %v2366 = vmul.f32 %v2110, 0.2
        %v2367 = vmul.f32 %v2111, 0.2
        %v2368 = vmul.f32 %v2112, 0.2
        %v2369 = vmul.f32 %v2113, 0.2
        %v2370 = vmul.f32 %v2114, 0.2
        %v2371 = vmul.f32 %v2115, 0.2
        %v2372 = vmul.f32 %v2116, 0.2
        %v2373 = vmul.f32 %v2117, 0.2
        %v2374 = vmul.f32 %v2118, 0.2
        %v2375 = vmul.f32 %v2119, 0.2
        %v2376 = vmul.f32 %v2120, 0.2
        %v2377 = vmul.f32 %v2121, 0.2
        %v2378 = vmul.f32 %v2122, 0.2
        %v2379 = vsel %vm2123, %v1995, %v2251
        %v2380 = vsel %vm2124, %v1996, %v2252
        %v2381 = vsel %vm2125, %v1997, %v2253
        %v2382 = vsel %vm2126, %v1998, %v2254
        %v2383 = vsel %vm2127, %v1999, %v2255
        %v2384 = vsel %vm2128, %v2000, %v2256
        %v2385 = vsel %vm2129, %v2001, %v2257
        %v2386 = vsel %vm2130, %v2002, %v2258
        %v2387 = vsel %vm2131, %v2003, %v2259
        %v2388 = vsel %vm2132, %v2004, %v2260
        %v2389 = vsel %vm2133, %v2005, %v2261
        %v2390 = vsel %vm2134, %v2006, %v2262
        %v2391 = vsel %vm2135, %v2007, %v2263
        %v2392 = vsel %vm2136, %v2008, %v2264
        %v2393 = vsel %vm2137, %v2009, %v2265
        %v2394 = vsel %vm2138, %v2010, %v2266
        %v2395 = vsel %vm2139, %v2011, %v2267
        %v2396 = vsel %vm2140, %v2012, %v2268
        %v2397 = vsel %vm2141, %v2013, %v2269
        %v2398 = vsel %vm2142, %v2014, %v2270
        %v2399 = vsel %vm2143, %v2015, %v2271
        %v2400 = vsel %vm2144, %v2016, %v2272
        %v2401 = vsel %vm2145, %v2017, %v2273
        %v2402 = vsel %vm2146, %v2018, %v2274
        %v2403 = vsel %vm2147, %v2019, %v2275
        %v2404 = vsel %vm2148, %v2020, %v2276
        %v2405 = vsel %vm2149, %v2021, %v2277
        %v2406 = vsel %vm2150, %v2022, %v2278
        %v2407 = vsel %vm2151, %v2023, %v2279
        %v2408 = vsel %vm2152, %v2024, %v2280
        %v2409 = vsel %vm2153, %v2025, %v2281
        %v2410 = vsel %vm2154, %v2026, %v2282
        %v2411 = vsel %vm2155, %v2027, %v2283
        %v2412 = vsel %vm2156, %v2028, %v2284
        %v2413 = vsel %vm2157, %v2029, %v2285
        %v2414 = vsel %vm2158, %v2030, %v2286
        %v2415 = vsel %vm2159, %v2031, %v2287
        %v2416 = vsel %vm2160, %v2032, %v2288
        %v2417 = vsel %vm2161, %v2033, %v2289
        %v2418 = vsel %vm2162, %v2034, %v2290
        %v2419 = vsel %vm2163, %v2035, %v2291
        %v2420 = vsel %vm2164, %v2036, %v2292
        %v2421 = vsel %vm2165, %v2037, %v2293
        %v2422 = vsel %vm2166, %v2038, %v2294
        %v2423 = vsel %vm2167, %v2039, %v2295
        %v2424 = vsel %vm2168, %v2040, %v2296
        %v2425 = vsel %vm2169, %v2041, %v2297
        %v2426 = vsel %vm2170, %v2042, %v2298
        %v2427 = vsel %vm2171, %v2043, %v2299
        %v2428 = vsel %vm2172, %v2044, %v2300
        %v2429 = vsel %vm2173, %v2045, %v2301
        %v2430 = vsel %vm2174, %v2046, %v2302
        %v2431 = vsel %vm2175, %v2047, %v2303
        %v2432 = vsel %vm2176, %v2048, %v2304
        %v2433 = vsel %vm2177, %v2049, %v2305
        %v2434 = vsel %vm2178, %v2050, %v2306
        %v2435 = vsel %vm2179, %v2051, %v2307
        %v2436 = vsel %vm2180, %v2052, %v2308
        %v2437 = vsel %vm2181, %v2053, %v2309
        %v2438 = vsel %vm2182, %v2054, %v2310
        %v2439 = vsel %vm2183, %v2055, %v2311
        %v2440 = vsel %vm2184, %v2056, %v2312
        %v2441 = vsel %vm2185, %v2057, %v2313
        %v2442 = vsel %vm2186, %v2058, %v2314
        %v2443 = vsel %vm2187, %v2059, %v2315
        %v2444 = vsel %vm2188, %v2060, %v2316
        %v2445 = vsel %vm2189, %v2061, %v2317
        %v2446 = vsel %vm2190, %v2062, %v2318
        %v2447 = vsel %vm2191, %v2063, %v2319
        %v2448 = vsel %vm2192, %v2064, %v2320
        %v2449 = vsel %vm2193, %v2065, %v2321
        %v2450 = vsel %vm2194, %v2066, %v2322
        %v2451 = vsel %vm2195, %v2067, %v2323
        %v2452 = vsel %vm2196, %v2068, %v2324
        %v2453 = vsel %vm2197, %v2069, %v2325
        %v2454 = vsel %vm2198, %v2070, %v2326
        %v2455 = vsel %vm2199, %v2071, %v2327
        %v2456 = vsel %vm2200, %v2072, %v2328
        %v2457 = vsel %vm2201, %v2073, %v2329
        %v2458 = vsel %vm2202, %v2074, %v2330
        %v2459 = vsel %vm2203, %v2075, %v2331
        %v2460 = vsel %vm2204, %v2076, %v2332
        %v2461 = vsel %vm2205, %v2077, %v2333
        %v2462 = vsel %vm2206, %v2078, %v2334
        %v2463 = vsel %vm2207, %v2079, %v2335
        %v2464 = vsel %vm2208, %v2080, %v2336
        %v2465 = vsel %vm2209, %v2081, %v2337
        %v2466 = vsel %vm2210, %v2082, %v2338
        %v2467 = vsel %vm2211, %v2083, %v2339
        %v2468 = vsel %vm2212, %v2084, %v2340
        %v2469 = vsel %vm2213, %v2085, %v2341
        %v2470 = vsel %vm2214, %v2086, %v2342
        %v2471 = vsel %vm2215, %v2087, %v2343
        %v2472 = vsel %vm2216, %v2088, %v2344
        %v2473 = vsel %vm2217, %v2089, %v2345
        %v2474 = vsel %vm2218, %v2090, %v2346
        %v2475 = vsel %vm2219, %v2091, %v2347
        %v2476 = vsel %vm2220, %v2092, %v2348
        %v2477 = vsel %vm2221, %v2093, %v2349
        %v2478 = vsel %vm2222, %v2094, %v2350
        %v2479 = vsel %vm2223, %v2095, %v2351
        %v2480 = vsel %vm2224, %v2096, %v2352
        %v2481 = vsel %vm2225, %v2097, %v2353
        %v2482 = vsel %vm2226, %v2098, %v2354
        %v2483 = vsel %vm2227, %v2099, %v2355
        %v2484 = vsel %vm2228, %v2100, %v2356
        %v2485 = vsel %vm2229, %v2101, %v2357
        %v2486 = vsel %vm2230, %v2102, %v2358
        %v2487 = vsel %vm2231, %v2103, %v2359
        %v2488 = vsel %vm2232, %v2104, %v2360
        %v2489 = vsel %vm2233, %v2105, %v2361
        %v2490 = vsel %vm2234, %v2106, %v2362
        %v2491 = vsel %vm2235, %v2107, %v2363
        %v2492 = vsel %vm2236, %v2108, %v2364
        %v2493 = vsel %vm2237, %v2109, %v2365
        %v2494 = vsel %vm2238, %v2110, %v2366
        %v2495 = vsel %vm2239, %v2111, %v2367
        %v2496 = vsel %vm2240, %v2112, %v2368
        %v2497 = vsel %vm2241, %v2113, %v2369
        %v2498 = vsel %vm2242, %v2114, %v2370
        %v2499 = vsel %vm2243, %v2115, %v2371
        %v2500 = vsel %vm2244, %v2116, %v2372
        %v2501 = vsel %vm2245, %v2117, %v2373
        %v2502 = vsel %vm2246, %v2118, %v2374
        %v2503 = vsel %vm2247, %v2119, %v2375
        %v2504 = vsel %vm2248, %v2120, %v2376
        %v2505 = vsel %vm2249, %v2121, %v2377
        %v2506 = vsel %vm2250, %v2122, %v2378
        %v2507 = vpack.c.bf16 %v2380, %v2379
        %v2508 = vpack.c.bf16 %v2382, %v2381
        %v2509 = vpack.c.bf16 %v2384, %v2383
        %v2510 = vpack.c.bf16 %v2386, %v2385
        %v2511 = vpack.c.bf16 %v2388, %v2387
        %v2512 = vpack.c.bf16 %v2390, %v2389
        %v2513 = vpack.c.bf16 %v2392, %v2391
        %v2514 = vpack.c.bf16 %v2394, %v2393
        %v2515 = vpack.c.bf16 %v2396, %v2395
        %v2516 = vpack.c.bf16 %v2398, %v2397
        %v2517 = vpack.c.bf16 %v2400, %v2399
        %v2518 = vpack.c.bf16 %v2402, %v2401
        %v2519 = vpack.c.bf16 %v2404, %v2403
        %v2520 = vpack.c.bf16 %v2406, %v2405
        %v2521 = vpack.c.bf16 %v2408, %v2407
        %v2522 = vpack.c.bf16 %v2410, %v2409
        %v2523 = vpack.c.bf16 %v2412, %v2411
        %v2524 = vpack.c.bf16 %v2414, %v2413
        %v2525 = vpack.c.bf16 %v2416, %v2415
        %v2526 = vpack.c.bf16 %v2418, %v2417
        %v2527 = vpack.c.bf16 %v2420, %v2419
        %v2528 = vpack.c.bf16 %v2422, %v2421
        %v2529 = vpack.c.bf16 %v2424, %v2423
        %v2530 = vpack.c.bf16 %v2426, %v2425
        %v2531 = vpack.c.bf16 %v2428, %v2427
        %v2532 = vpack.c.bf16 %v2430, %v2429
        %v2533 = vpack.c.bf16 %v2432, %v2431
        %v2534 = vpack.c.bf16 %v2434, %v2433
        %v2535 = vpack.c.bf16 %v2436, %v2435
        %v2536 = vpack.c.bf16 %v2438, %v2437
        %v2537 = vpack.c.bf16 %v2440, %v2439
        %v2538 = vpack.c.bf16 %v2442, %v2441
        %v2539 = vpack.c.bf16 %v2444, %v2443
        %v2540 = vpack.c.bf16 %v2446, %v2445
        %v2541 = vpack.c.bf16 %v2448, %v2447
        %v2542 = vpack.c.bf16 %v2450, %v2449
        %v2543 = vpack.c.bf16 %v2452, %v2451
        %v2544 = vpack.c.bf16 %v2454, %v2453
        %v2545 = vpack.c.bf16 %v2456, %v2455
        %v2546 = vpack.c.bf16 %v2458, %v2457
        %v2547 = vpack.c.bf16 %v2460, %v2459
        %v2548 = vpack.c.bf16 %v2462, %v2461
        %v2549 = vpack.c.bf16 %v2464, %v2463
        %v2550 = vpack.c.bf16 %v2466, %v2465
        %v2551 = vpack.c.bf16 %v2468, %v2467
        %v2552 = vpack.c.bf16 %v2470, %v2469
        %v2553 = vpack.c.bf16 %v2472, %v2471
        %v2554 = vpack.c.bf16 %v2474, %v2473
        %v2555 = vpack.c.bf16 %v2476, %v2475
        %v2556 = vpack.c.bf16 %v2478, %v2477
        %v2557 = vpack.c.bf16 %v2480, %v2479
        %v2558 = vpack.c.bf16 %v2482, %v2481
        %v2559 = vpack.c.bf16 %v2484, %v2483
        %v2560 = vpack.c.bf16 %v2486, %v2485
        %v2561 = vpack.c.bf16 %v2488, %v2487
        %v2562 = vpack.c.bf16 %v2490, %v2489
        %v2563 = vpack.c.bf16 %v2492, %v2491
        %v2564 = vpack.c.bf16 %v2494, %v2493
        %v2565 = vpack.c.bf16 %v2496, %v2495
        %v2566 = vpack.c.bf16 %v2498, %v2497
        %v2567 = vpack.c.bf16 %v2500, %v2499
        %v2568 = vpack.c.bf16 %v2502, %v2501
        %v2569 = vpack.c.bf16 %v2504, %v2503
        %v2570 = vpack.c.bf16 %v2506, %v2505
        %v2635 = vunpack.c.l.b16 %v2507
        %v2636 = vunpack.c.h.b16 %v2507
        %v2637 = vunpack.c.l.b16 %v2508
        %v2638 = vunpack.c.h.b16 %v2508
        %v2639 = vunpack.c.l.b16 %v2509
        %v2640 = vunpack.c.h.b16 %v2509
        %v2641 = vunpack.c.l.b16 %v2510
        %v2642 = vunpack.c.h.b16 %v2510
        %v2643 = vunpack.c.l.b16 %v2511
        %v2644 = vunpack.c.h.b16 %v2511
        %v2645 = vunpack.c.l.b16 %v2512
        %v2646 = vunpack.c.h.b16 %v2512
        %v2647 = vunpack.c.l.b16 %v2513
        %v2648 = vunpack.c.h.b16 %v2513
        %v2649 = vunpack.c.l.b16 %v2514
        %v2650 = vunpack.c.h.b16 %v2514
        %v2651 = vunpack.c.l.b16 %v2515
        %v2652 = vunpack.c.h.b16 %v2515
        %v2653 = vunpack.c.l.b16 %v2516
        %v2654 = vunpack.c.h.b16 %v2516
        %v2655 = vunpack.c.l.b16 %v2517
        %v2656 = vunpack.c.h.b16 %v2517
        %v2657 = vunpack.c.l.b16 %v2518
        %v2658 = vunpack.c.h.b16 %v2518
        %v2659 = vunpack.c.l.b16 %v2519
        %v2660 = vunpack.c.h.b16 %v2519
        %v2661 = vunpack.c.l.b16 %v2520
        %v2662 = vunpack.c.h.b16 %v2520
        %v2663 = vunpack.c.l.b16 %v2521
        %v2664 = vunpack.c.h.b16 %v2521
        %v2665 = vunpack.c.l.b16 %v2522
        %v2666 = vunpack.c.h.b16 %v2522
        %v2667 = vunpack.c.l.b16 %v2523
        %v2668 = vunpack.c.h.b16 %v2523
        %v2669 = vunpack.c.l.b16 %v2524
        %v2670 = vunpack.c.h.b16 %v2524
        %v2671 = vunpack.c.l.b16 %v2525
        %v2672 = vunpack.c.h.b16 %v2525
        %v2673 = vunpack.c.l.b16 %v2526
        %v2674 = vunpack.c.h.b16 %v2526
        %v2675 = vunpack.c.l.b16 %v2527
        %v2676 = vunpack.c.h.b16 %v2527
        %v2677 = vunpack.c.l.b16 %v2528
        %v2678 = vunpack.c.h.b16 %v2528
        %v2679 = vunpack.c.l.b16 %v2529
        %v2680 = vunpack.c.h.b16 %v2529
        %v2681 = vunpack.c.l.b16 %v2530
        %v2682 = vunpack.c.h.b16 %v2530
        %v2683 = vunpack.c.l.b16 %v2531
        %v2684 = vunpack.c.h.b16 %v2531
        %v2685 = vunpack.c.l.b16 %v2532
        %v2686 = vunpack.c.h.b16 %v2532
        %v2687 = vunpack.c.l.b16 %v2533
        %v2688 = vunpack.c.h.b16 %v2533
        %v2689 = vunpack.c.l.b16 %v2534
        %v2690 = vunpack.c.h.b16 %v2534
        %v2691 = vunpack.c.l.b16 %v2535
        %v2692 = vunpack.c.h.b16 %v2535
        %v2693 = vunpack.c.l.b16 %v2536
        %v2694 = vunpack.c.h.b16 %v2536
        %v2695 = vunpack.c.l.b16 %v2537
        %v2696 = vunpack.c.h.b16 %v2537
        %v2697 = vunpack.c.l.b16 %v2538
        %v2698 = vunpack.c.h.b16 %v2538
        %v2699 = vunpack.c.l.b16 %v2539
        %v2700 = vunpack.c.h.b16 %v2539
        %v2701 = vunpack.c.l.b16 %v2540
        %v2702 = vunpack.c.h.b16 %v2540
        %v2703 = vunpack.c.l.b16 %v2541
        %v2704 = vunpack.c.h.b16 %v2541
        %v2705 = vunpack.c.l.b16 %v2542
        %v2706 = vunpack.c.h.b16 %v2542
        %v2707 = vunpack.c.l.b16 %v2543
        %v2708 = vunpack.c.h.b16 %v2543
        %v2709 = vunpack.c.l.b16 %v2544
        %v2710 = vunpack.c.h.b16 %v2544
        %v2711 = vunpack.c.l.b16 %v2545
        %v2712 = vunpack.c.h.b16 %v2545
        %v2713 = vunpack.c.l.b16 %v2546
        %v2714 = vunpack.c.h.b16 %v2546
        %v2715 = vunpack.c.l.b16 %v2547
        %v2716 = vunpack.c.h.b16 %v2547
        %v2717 = vunpack.c.l.b16 %v2548
        %v2718 = vunpack.c.h.b16 %v2548
        %v2719 = vunpack.c.l.b16 %v2549
        %v2720 = vunpack.c.h.b16 %v2549
        %v2721 = vunpack.c.l.b16 %v2550
        %v2722 = vunpack.c.h.b16 %v2550
        %v2723 = vunpack.c.l.b16 %v2551
        %v2724 = vunpack.c.h.b16 %v2551
        %v2725 = vunpack.c.l.b16 %v2552
        %v2726 = vunpack.c.h.b16 %v2552
        %v2727 = vunpack.c.l.b16 %v2553
        %v2728 = vunpack.c.h.b16 %v2553
        %v2729 = vunpack.c.l.b16 %v2554
        %v2730 = vunpack.c.h.b16 %v2554
        %v2731 = vunpack.c.l.b16 %v2555
        %v2732 = vunpack.c.h.b16 %v2555
        %v2733 = vunpack.c.l.b16 %v2556
        %v2734 = vunpack.c.h.b16 %v2556
        %v2735 = vunpack.c.l.b16 %v2557
        %v2736 = vunpack.c.h.b16 %v2557
        %v2737 = vunpack.c.l.b16 %v2558
        %v2738 = vunpack.c.h.b16 %v2558
        %v2739 = vunpack.c.l.b16 %v2559
        %v2740 = vunpack.c.h.b16 %v2559
        %v2741 = vunpack.c.l.b16 %v2560
        %v2742 = vunpack.c.h.b16 %v2560
        %v2743 = vunpack.c.l.b16 %v2561
        %v2744 = vunpack.c.h.b16 %v2561
        %v2745 = vunpack.c.l.b16 %v2562
        %v2746 = vunpack.c.h.b16 %v2562
        %v2747 = vunpack.c.l.b16 %v2563
        %v2748 = vunpack.c.h.b16 %v2563
        %v2749 = vunpack.c.l.b16 %v2564
        %v2750 = vunpack.c.h.b16 %v2564
        %v2751 = vunpack.c.l.b16 %v2565
        %v2752 = vunpack.c.h.b16 %v2565
        %v2753 = vunpack.c.l.b16 %v2566
        %v2754 = vunpack.c.h.b16 %v2566
        %v2755 = vunpack.c.l.b16 %v2567
        %v2756 = vunpack.c.h.b16 %v2567
        %v2757 = vunpack.c.l.b16 %v2568
        %v2758 = vunpack.c.h.b16 %v2568
        %v2759 = vunpack.c.l.b16 %v2569
        %v2760 = vunpack.c.h.b16 %v2569
        %v2761 = vunpack.c.l.b16 %v2570
        %v2762 = vunpack.c.h.b16 %v2570
        %v2763 = vpack.c.b16 %v2635, %v2635
        %v2764 = vpack.c.b16 %v2636, %v2636
        %v2765 = vpack.c.b16 %v2637, %v2637
        %v2766 = vpack.c.b16 %v2638, %v2638
        %v2767 = vpack.c.b16 %v2639, %v2639
        %v2768 = vpack.c.b16 %v2640, %v2640
        %v2769 = vpack.c.b16 %v2641, %v2641
        %v2770 = vpack.c.b16 %v2642, %v2642
        %v2771 = vpack.c.b16 %v2643, %v2643
        %v2772 = vpack.c.b16 %v2644, %v2644
        %v2773 = vpack.c.b16 %v2645, %v2645
        %v2774 = vpack.c.b16 %v2646, %v2646
        %v2775 = vpack.c.b16 %v2647, %v2647
        %v2776 = vpack.c.b16 %v2648, %v2648
        %v2777 = vpack.c.b16 %v2649, %v2649
        %v2778 = vpack.c.b16 %v2650, %v2650
        %v2779 = vpack.c.b16 %v2651, %v2651
        %v2780 = vpack.c.b16 %v2652, %v2652
        %v2781 = vpack.c.b16 %v2653, %v2653
        %v2782 = vpack.c.b16 %v2654, %v2654
        %v2783 = vpack.c.b16 %v2655, %v2655
        %v2784 = vpack.c.b16 %v2656, %v2656
        %v2785 = vpack.c.b16 %v2657, %v2657
        %v2786 = vpack.c.b16 %v2658, %v2658
        %v2787 = vpack.c.b16 %v2659, %v2659
        %v2788 = vpack.c.b16 %v2660, %v2660
        %v2789 = vpack.c.b16 %v2661, %v2661
        %v2790 = vpack.c.b16 %v2662, %v2662
        %v2791 = vpack.c.b16 %v2663, %v2663
        %v2792 = vpack.c.b16 %v2664, %v2664
        %v2793 = vpack.c.b16 %v2665, %v2665
        %v2794 = vpack.c.b16 %v2666, %v2666
        %v2795 = vpack.c.b16 %v2667, %v2667
        %v2796 = vpack.c.b16 %v2668, %v2668
        %v2797 = vpack.c.b16 %v2669, %v2669
        %v2798 = vpack.c.b16 %v2670, %v2670
        %v2799 = vpack.c.b16 %v2671, %v2671
        %v2800 = vpack.c.b16 %v2672, %v2672
        %v2801 = vpack.c.b16 %v2673, %v2673
        %v2802 = vpack.c.b16 %v2674, %v2674
        %v2803 = vpack.c.b16 %v2675, %v2675
        %v2804 = vpack.c.b16 %v2676, %v2676
        %v2805 = vpack.c.b16 %v2677, %v2677
        %v2806 = vpack.c.b16 %v2678, %v2678
        %v2807 = vpack.c.b16 %v2679, %v2679
        %v2808 = vpack.c.b16 %v2680, %v2680
        %v2809 = vpack.c.b16 %v2681, %v2681
        %v2810 = vpack.c.b16 %v2682, %v2682
        %v2811 = vpack.c.b16 %v2683, %v2683
        %v2812 = vpack.c.b16 %v2684, %v2684
        %v2813 = vpack.c.b16 %v2685, %v2685
        %v2814 = vpack.c.b16 %v2686, %v2686
        %v2815 = vpack.c.b16 %v2687, %v2687
        %v2816 = vpack.c.b16 %v2688, %v2688
        %v2817 = vpack.c.b16 %v2689, %v2689
        %v2818 = vpack.c.b16 %v2690, %v2690
        %v2819 = vpack.c.b16 %v2691, %v2691
        %v2820 = vpack.c.b16 %v2692, %v2692
        %v2821 = vpack.c.b16 %v2693, %v2693
        %v2822 = vpack.c.b16 %v2694, %v2694
        %v2823 = vpack.c.b16 %v2695, %v2695
        %v2824 = vpack.c.b16 %v2696, %v2696
        %v2825 = vpack.c.b16 %v2697, %v2697
        %v2826 = vpack.c.b16 %v2698, %v2698
        %v2827 = vpack.c.b16 %v2699, %v2699
        %v2828 = vpack.c.b16 %v2700, %v2700
        %v2829 = vpack.c.b16 %v2701, %v2701
        %v2830 = vpack.c.b16 %v2702, %v2702
        %v2831 = vpack.c.b16 %v2703, %v2703
        %v2832 = vpack.c.b16 %v2704, %v2704
        %v2833 = vpack.c.b16 %v2705, %v2705
        %v2834 = vpack.c.b16 %v2706, %v2706
        %v2835 = vpack.c.b16 %v2707, %v2707
        %v2836 = vpack.c.b16 %v2708, %v2708
        %v2837 = vpack.c.b16 %v2709, %v2709
        %v2838 = vpack.c.b16 %v2710, %v2710
        %v2839 = vpack.c.b16 %v2711, %v2711
        %v2840 = vpack.c.b16 %v2712, %v2712
        %v2841 = vpack.c.b16 %v2713, %v2713
        %v2842 = vpack.c.b16 %v2714, %v2714
        %v2843 = vpack.c.b16 %v2715, %v2715
        %v2844 = vpack.c.b16 %v2716, %v2716
        %v2845 = vpack.c.b16 %v2717, %v2717
        %v2846 = vpack.c.b16 %v2718, %v2718
        %v2847 = vpack.c.b16 %v2719, %v2719
        %v2848 = vpack.c.b16 %v2720, %v2720
        %v2849 = vpack.c.b16 %v2721, %v2721
        %v2850 = vpack.c.b16 %v2722, %v2722
        %v2851 = vpack.c.b16 %v2723, %v2723
        %v2852 = vpack.c.b16 %v2724, %v2724
        %v2853 = vpack.c.b16 %v2725, %v2725
        %v2854 = vpack.c.b16 %v2726, %v2726
        %v2855 = vpack.c.b16 %v2727, %v2727
        %v2856 = vpack.c.b16 %v2728, %v2728
        %v2857 = vpack.c.b16 %v2729, %v2729
        %v2858 = vpack.c.b16 %v2730, %v2730
        %v2859 = vpack.c.b16 %v2731, %v2731
        %v2860 = vpack.c.b16 %v2732, %v2732
        %v2861 = vpack.c.b16 %v2733, %v2733
        %v2862 = vpack.c.b16 %v2734, %v2734
        %v2863 = vpack.c.b16 %v2735, %v2735
        %v2864 = vpack.c.b16 %v2736, %v2736
        %v2865 = vpack.c.b16 %v2737, %v2737
        %v2866 = vpack.c.b16 %v2738, %v2738
        %v2867 = vpack.c.b16 %v2739, %v2739
        %v2868 = vpack.c.b16 %v2740, %v2740
        %v2869 = vpack.c.b16 %v2741, %v2741
        %v2870 = vpack.c.b16 %v2742, %v2742
        %v2871 = vpack.c.b16 %v2743, %v2743
        %v2872 = vpack.c.b16 %v2744, %v2744
        %v2873 = vpack.c.b16 %v2745, %v2745
        %v2874 = vpack.c.b16 %v2746, %v2746
        %v2875 = vpack.c.b16 %v2747, %v2747
        %v2876 = vpack.c.b16 %v2748, %v2748
        %v2877 = vpack.c.b16 %v2749, %v2749
        %v2878 = vpack.c.b16 %v2750, %v2750
        %v2879 = vpack.c.b16 %v2751, %v2751
        %v2880 = vpack.c.b16 %v2752, %v2752
        %v2881 = vpack.c.b16 %v2753, %v2753
        %v2882 = vpack.c.b16 %v2754, %v2754
        %v2883 = vpack.c.b16 %v2755, %v2755
        %v2884 = vpack.c.b16 %v2756, %v2756
        %v2885 = vpack.c.b16 %v2757, %v2757
        %v2886 = vpack.c.b16 %v2758, %v2758
        %v2887 = vpack.c.b16 %v2759, %v2759
        %v2888 = vpack.c.b16 %v2760, %v2760
        %v2889 = vpack.c.b16 %v2761, %v2761
        %v2890 = vpack.c.b16 %v2762, %v2762
        %3019 = vst [vmem:[%s217] sm:$0xf] %v2763
        %3020 = vst [vmem:[%s217 + $0x4] sm:$0xf] %v2764
        %3021 = vst [vmem:[%s217 + $0x8] sm:$0xf] %v2765
        %3022 = vst [vmem:[%s217 + $0xc] sm:$0xf] %v2766
        %3023 = vst [vmem:[%s217 + $0x10] sm:$0xf] %v2767
        %3024 = vst [vmem:[%s217 + $0x14] sm:$0xf] %v2768
        %3025 = vst [vmem:[%s217 + $0x18] sm:$0xf] %v2769
        %3026 = vst [vmem:[%s217 + $0x1c] sm:$0xf] %v2770
        %3027 = vst [vmem:[%s217 + $0x20] sm:$0xf] %v2771
        %3028 = vst [vmem:[%s217 + $0x24] sm:$0xf] %v2772
        %3029 = vst [vmem:[%s217 + $0x28] sm:$0xf] %v2773
        %3030 = vst [vmem:[%s217 + $0x2c] sm:$0xf] %v2774
        %3031 = vst [vmem:[%s217 + $0x30] sm:$0xf] %v2775
        %3032 = vst [vmem:[%s217 + $0x34] sm:$0xf] %v2776
        %3033 = vst [vmem:[%s217 + $0x38] sm:$0xf] %v2777
        %3034 = vst [vmem:[%s217 + $0x3c] sm:$0xf] %v2778
        %3035 = vst [vmem:[%s217 + $0x40] sm:$0xf] %v2779
        %3036 = vst [vmem:[%s217 + $0x44] sm:$0xf] %v2780
        %3037 = vst [vmem:[%s217 + $0x48] sm:$0xf] %v2781
        %3038 = vst [vmem:[%s217 + $0x4c] sm:$0xf] %v2782
        %3039 = vst [vmem:[%s217 + $0x50] sm:$0xf] %v2783
        %3040 = vst [vmem:[%s217 + $0x54] sm:$0xf] %v2784
        %3041 = vst [vmem:[%s217 + $0x58] sm:$0xf] %v2785
        %3042 = vst [vmem:[%s217 + $0x5c] sm:$0xf] %v2786
        %3043 = vst [vmem:[%s217 + $0x60] sm:$0xf] %v2787
        %3044 = vst [vmem:[%s217 + $0x64] sm:$0xf] %v2788
        %3045 = vst [vmem:[%s217 + $0x68] sm:$0xf] %v2789
        %3046 = vst [vmem:[%s217 + $0x6c] sm:$0xf] %v2790
        %3047 = vst [vmem:[%s217 + $0x70] sm:$0xf] %v2791
        %3048 = vst [vmem:[%s217 + $0x74] sm:$0xf] %v2792
        %3049 = vst [vmem:[%s217 + $0x78] sm:$0xf] %v2793
        %3050 = vst [vmem:[%s217 + $0x7c] sm:$0xf] %v2794
        %3051 = vst [vmem:[%s217 + $0x80] sm:$0xf] %v2795
        %3052 = vst [vmem:[%s217 + $0x84] sm:$0xf] %v2796
        %3053 = vst [vmem:[%s217 + $0x88] sm:$0xf] %v2797
        %3054 = vst [vmem:[%s217 + $0x8c] sm:$0xf] %v2798
        %3055 = vst [vmem:[%s217 + $0x90] sm:$0xf] %v2799
        %3056 = vst [vmem:[%s217 + $0x94] sm:$0xf] %v2800
        %3057 = vst [vmem:[%s217 + $0x98] sm:$0xf] %v2801
        %3058 = vst [vmem:[%s217 + $0x9c] sm:$0xf] %v2802
        %3059 = vst [vmem:[%s217 + $0xa0] sm:$0xf] %v2803
        %3060 = vst [vmem:[%s217 + $0xa4] sm:$0xf] %v2804
        %3061 = vst [vmem:[%s217 + $0xa8] sm:$0xf] %v2805
        %3062 = vst [vmem:[%s217 + $0xac] sm:$0xf] %v2806
        %3063 = vst [vmem:[%s217 + $0xb0] sm:$0xf] %v2807
        %3064 = vst [vmem:[%s217 + $0xb4] sm:$0xf] %v2808
        %3065 = vst [vmem:[%s217 + $0xb8] sm:$0xf] %v2809
        %3066 = vst [vmem:[%s217 + $0xbc] sm:$0xf] %v2810
        %3067 = vst [vmem:[%s217 + $0xc0] sm:$0xf] %v2811
        %3068 = vst [vmem:[%s217 + $0xc4] sm:$0xf] %v2812
        %3069 = vst [vmem:[%s217 + $0xc8] sm:$0xf] %v2813
        %3070 = vst [vmem:[%s217 + $0xcc] sm:$0xf] %v2814
        %3071 = vst [vmem:[%s217 + $0xd0] sm:$0xf] %v2815
        %3072 = vst [vmem:[%s217 + $0xd4] sm:$0xf] %v2816
        %3073 = vst [vmem:[%s217 + $0xd8] sm:$0xf] %v2817
        %3074 = vst [vmem:[%s217 + $0xdc] sm:$0xf] %v2818
        %3075 = vst [vmem:[%s217 + $0xe0] sm:$0xf] %v2819
        %3076 = vst [vmem:[%s217 + $0xe4] sm:$0xf] %v2820
        %3077 = vst [vmem:[%s217 + $0xe8] sm:$0xf] %v2821
        %3078 = vst [vmem:[%s217 + $0xec] sm:$0xf] %v2822
        %3079 = vst [vmem:[%s217 + $0xf0] sm:$0xf] %v2823
        %3080 = vst [vmem:[%s217 + $0xf4] sm:$0xf] %v2824
        %3081 = vst [vmem:[%s217 + $0xf8] sm:$0xf] %v2825
        %3082 = vst [vmem:[%s217 + $0xfc] sm:$0xf] %v2826
        %3083 = vst [vmem:[%s217 + $0x100] sm:$0xf] %v2827
        %3084 = vst [vmem:[%s217 + $0x104] sm:$0xf] %v2828
        %3085 = vst [vmem:[%s217 + $0x108] sm:$0xf] %v2829
        %3086 = vst [vmem:[%s217 + $0x10c] sm:$0xf] %v2830
        %3087 = vst [vmem:[%s217 + $0x110] sm:$0xf] %v2831
        %3088 = vst [vmem:[%s217 + $0x114] sm:$0xf] %v2832
        %3089 = vst [vmem:[%s217 + $0x118] sm:$0xf] %v2833
        %3090 = vst [vmem:[%s217 + $0x11c] sm:$0xf] %v2834
        %3091 = vst [vmem:[%s217 + $0x120] sm:$0xf] %v2835
        %3092 = vst [vmem:[%s217 + $0x124] sm:$0xf] %v2836
        %3093 = vst [vmem:[%s217 + $0x128] sm:$0xf] %v2837
        %3094 = vst [vmem:[%s217 + $0x12c] sm:$0xf] %v2838
        %3095 = vst [vmem:[%s217 + $0x130] sm:$0xf] %v2839
        %3096 = vst [vmem:[%s217 + $0x134] sm:$0xf] %v2840
        %3097 = vst [vmem:[%s217 + $0x138] sm:$0xf] %v2841
        %3098 = vst [vmem:[%s217 + $0x13c] sm:$0xf] %v2842
        %3099 = vst [vmem:[%s217 + $0x140] sm:$0xf] %v2843
        %3100 = vst [vmem:[%s217 + $0x144] sm:$0xf] %v2844
        %3101 = vst [vmem:[%s217 + $0x148] sm:$0xf] %v2845
        %3102 = vst [vmem:[%s217 + $0x14c] sm:$0xf] %v2846
        %3103 = vst [vmem:[%s217 + $0x150] sm:$0xf] %v2847
        %3104 = vst [vmem:[%s217 + $0x154] sm:$0xf] %v2848
        %3105 = vst [vmem:[%s217 + $0x158] sm:$0xf] %v2849
        %3106 = vst [vmem:[%s217 + $0x15c] sm:$0xf] %v2850
        %3107 = vst [vmem:[%s217 + $0x160] sm:$0xf] %v2851
        %3108 = vst [vmem:[%s217 + $0x164] sm:$0xf] %v2852
        %3109 = vst [vmem:[%s217 + $0x168] sm:$0xf] %v2853
        %3110 = vst [vmem:[%s217 + $0x16c] sm:$0xf] %v2854
        %3111 = vst [vmem:[%s217 + $0x170] sm:$0xf] %v2855
        %3112 = vst [vmem:[%s217 + $0x174] sm:$0xf] %v2856
        %3113 = vst [vmem:[%s217 + $0x178] sm:$0xf] %v2857
        %3114 = vst [vmem:[%s217 + $0x17c] sm:$0xf] %v2858
        %3115 = vst [vmem:[%s217 + $0x180] sm:$0xf] %v2859
        %3116 = vst [vmem:[%s217 + $0x184] sm:$0xf] %v2860
        %3117 = vst [vmem:[%s217 + $0x188] sm:$0xf] %v2861
        %3118 = vst [vmem:[%s217 + $0x18c] sm:$0xf] %v2862
        %3119 = vst [vmem:[%s217 + $0x190] sm:$0xf] %v2863
        %3120 = vst [vmem:[%s217 + $0x194] sm:$0xf] %v2864
        %3121 = vst [vmem:[%s217 + $0x198] sm:$0xf] %v2865
        %3122 = vst [vmem:[%s217 + $0x19c] sm:$0xf] %v2866
        %3123 = vst [vmem:[%s217 + $0x1a0] sm:$0xf] %v2867
        %3124 = vst [vmem:[%s217 + $0x1a4] sm:$0xf] %v2868
        %3125 = vst [vmem:[%s217 + $0x1a8] sm:$0xf] %v2869
        %3126 = vst [vmem:[%s217 + $0x1ac] sm:$0xf] %v2870
        %3127 = vst [vmem:[%s217 + $0x1b0] sm:$0xf] %v2871
        %3128 = vst [vmem:[%s217 + $0x1b4] sm:$0xf] %v2872
        %3129 = vst [vmem:[%s217 + $0x1b8] sm:$0xf] %v2873
        %3130 = vst [vmem:[%s217 + $0x1bc] sm:$0xf] %v2874
        %3131 = vst [vmem:[%s217 + $0x1c0] sm:$0xf] %v2875
        %3132 = vst [vmem:[%s217 + $0x1c4] sm:$0xf] %v2876
        %3133 = vst [vmem:[%s217 + $0x1c8] sm:$0xf] %v2877
        %3134 = vst [vmem:[%s217 + $0x1cc] sm:$0xf] %v2878
        %3135 = vst [vmem:[%s217 + $0x1d0] sm:$0xf] %v2879
        %3136 = vst [vmem:[%s217 + $0x1d4] sm:$0xf] %v2880
        %3137 = vst [vmem:[%s217 + $0x1d8] sm:$0xf] %v2881
        %3138 = vst [vmem:[%s217 + $0x1dc] sm:$0xf] %v2882
        %3139 = vst [vmem:[%s217 + $0x1e0] sm:$0xf] %v2883
        %3140 = vst [vmem:[%s217 + $0x1e4] sm:$0xf] %v2884
        %3141 = vst [vmem:[%s217 + $0x1e8] sm:$0xf] %v2885
        %3142 = vst [vmem:[%s217 + $0x1ec] sm:$0xf] %v2886
        %3143 = vst [vmem:[%s217 + $0x1f0] sm:$0xf] %v2887
        %3144 = vst [vmem:[%s217 + $0x1f4] sm:$0xf] %v2888
        %3145 = vst [vmem:[%s217 + $0x1f8] sm:$0xf] %v2889
        %3146 = vst [vmem:[%s217 + $0x1fc] sm:$0xf] %v2890
      $region40: #{discriminator2_patchs_forward.4} parent=31 // pred_fallthru
        _
      %s3147 = smul.u32 128, %s18
      %p3148 = scmp.lt.s32.totalorder %s3147, 255
      %s3149 = scalar_select %p3148, %s3147, 255
      %s3150 = smul.addr %s3149, 4
      %s3151 = scalar_lea.vmem %s3, %s3150
      // Predicated region
      $region41: #{discriminator2_patchs_forward.4} parent=31 // pred_check
        %p3152 = pneg %p119
      $region42: #{discriminator2_patchs_forward.4} parent=31 // pred_check_branch
        %3154 = sbr.rel (%p3152) target = $region44
      $region43: #{discriminator2_patchs_forward.4} parent=31 // pred_region
        %s3155 = smul.u32 128, %s18
      $region44: #{discriminator2_patchs_forward.4} parent=31 // pred_fallthru
        _
    $region32: #{discriminator2_patchs_forward.4} parent=5 // pred_fallthru
      _
    %p3156 = scmp.le.s32.totalorder 2, %s9
    // Predicated region
    $region45: #{discriminator2_patchs_forward.4} parent=5 // pred_check
      %p3157 = pneg %p3156
    $region46: #{discriminator2_patchs_forward.4} parent=5 // pred_check_branch
      %3159 = sbr.rel (%p3157) target = $region48
    $region47: #{discriminator2_patchs_forward.4} parent=5 // pred_region
      %s3160 = ssub.s32 %s9, 2
      // Predicated region
      $region49: #{discriminator2_patchs_forward.4} parent=47 // pred_check
        %p3161 = pneg %p125
      $region50: #{discriminator2_patchs_forward.4} parent=47 // pred_check_branch
        %3163 = sbr.rel (%p3161) target = $region52
      $region51: #{discriminator2_patchs_forward.4} parent=47 // pred_region
        %s3164 = smul.u32 128, %s20
        %p3165 = scmp.lt.s32.totalorder %s3164, 255
        %s3166 = scalar_select %p3165, %s3164, 255
        %s3167 = smul.addr %s3166, 4
        %s3168 = scalar_lea.vmem %s3, %s3167
      $region52: #{discriminator2_patchs_forward.4} parent=47 // pred_fallthru
        _
    $region48: #{discriminator2_patchs_forward.4} parent=5 // pred_fallthru
      _
  $region6: #{discriminator2_patchs_forward.4} parent=0 // loop_footer
    %s13 = sadd.s32 1, %s9
  $region7: #{discriminator2_patchs_forward.4} parent=0 // loop_footer_branch
    %8 = sbr.rel target = $region3
  $region8: #{discriminator2_patchs_forward.4} parent=0 // loop_exit
    _

// kernel: discriminator2_patchs_forward.6
$region0: #{discriminator2_patchs_forward.6}
  #allocation0 [shape = 'u32[]', space=smem, size = 0x4, offset = 0x4, fixed_abs, tag = 'smem constant byte address 0x4 - core index']
  #allocation1 [shape = 'u32[144,128]{1,0:T(1,128)}', space=vmem, size = 0x12000, scoped, tag = 'internal scratch']
  #allocation2 [shape = 'f32[128,128]{1,0:T(8,128)}', space=vmem, size = 0x10000, scoped, tag = 'scratch operand']
  %s0 = inlined_call_operand.vmem [shape: bf16[128,256], index: 0, kind: input, shape index: {}]
  %s1 = inlined_call_operand.vmem [shape: bf16[256,128], index: 1, kind: input, shape index: {}]
  %s2 = inlined_call_operand.vmem [shape: f32[1,128], index: 2, kind: input, shape index: {}]
  %s3 = inlined_call_operand.vmem [shape: bf16[128,128], index: 3, kind: output, shape index: {}]
  %s4 = sld [smem:[#allocation0]]
  $region30: #{discriminator2_patchs_forward.6} parent=0
    _
  %s6 = ssub.s32 1, %s4
  %s7 = scalar_select 0, %s6, %s4
  // Predicated region
  $region2: #{discriminator2_patchs_forward.6} parent=0 // pred_check
    _
  $region3: #{discriminator2_patchs_forward.6} parent=0 // pred_check_branch
    %9 = sbr.rel (0) target = $region5
  $region4: #{discriminator2_patchs_forward.6} parent=0 // pred_region
    _
  $region5: #{discriminator2_patchs_forward.6} parent=0 // pred_fallthru
    _
  // Predicated region
  $region6: #{discriminator2_patchs_forward.6} parent=0 // pred_check
    _
  $region7: #{discriminator2_patchs_forward.6} parent=0 // pred_check_branch
    %11 = sbr.rel (0) target = $region9
  $region8: #{discriminator2_patchs_forward.6} parent=0 // pred_region
    _
  $region9: #{discriminator2_patchs_forward.6} parent=0 // pred_fallthru
    _
  // Predicated region
  $region10: #{discriminator2_patchs_forward.6} parent=0 // pred_check
    _
  $region11: #{discriminator2_patchs_forward.6} parent=0 // pred_check_branch
    %13 = sbr.rel (0) target = $region13
  $region12: #{discriminator2_patchs_forward.6} parent=0 // pred_region
    _
  $region13: #{discriminator2_patchs_forward.6} parent=0 // pred_fallthru
    _
  %p15 = scmp.eq.s32.totalorder 0, 0
  // Predicated region
  $region14: #{discriminator2_patchs_forward.6} parent=0 // pred_check
    %p16 = pneg %p15
  $region15: #{discriminator2_patchs_forward.6} parent=0 // pred_check_branch
    %18 = sbr.rel (%p16) target = $region17
  $region16: #{discriminator2_patchs_forward.6} parent=0 // pred_region
    %19 = vst [vmem:[#allocation2] sm:$0xff] 0.0
    %20 = vst [vmem:[#allocation2 + $0x8] sm:$0xff] 0.0
    %21 = vst [vmem:[#allocation2 + $0x10] sm:$0xff] 0.0
    %22 = vst [vmem:[#allocation2 + $0x18] sm:$0xff] 0.0
    %23 = vst [vmem:[#allocation2 + $0x20] sm:$0xff] 0.0
    %24 = vst [vmem:[#allocation2 + $0x28] sm:$0xff] 0.0
    %25 = vst [vmem:[#allocation2 + $0x30] sm:$0xff] 0.0
    %26 = vst [vmem:[#allocation2 + $0x38] sm:$0xff] 0.0
    %27 = vst [vmem:[#allocation2 + $0x40] sm:$0xff] 0.0
    %28 = vst [vmem:[#allocation2 + $0x48] sm:$0xff] 0.0
    %29 = vst [vmem:[#allocation2 + $0x50] sm:$0xff] 0.0
    %30 = vst [vmem:[#allocation2 + $0x58] sm:$0xff] 0.0
    %31 = vst [vmem:[#allocation2 + $0x60] sm:$0xff] 0.0
    %32 = vst [vmem:[#allocation2 + $0x68] sm:$0xff] 0.0
    %33 = vst [vmem:[#allocation2 + $0x70] sm:$0xff] 0.0
    %34 = vst [vmem:[#allocation2 + $0x78] sm:$0xff] 0.0
  $region17: #{discriminator2_patchs_forward.6} parent=0 // pred_fallthru
    _
  %v35 = vld [vmem:[#allocation2] sm:$0xff]
  %v36 = vld [vmem:[#allocation2 + $0x8] sm:$0xff]
  %v37 = vld [vmem:[#allocation2 + $0x10] sm:$0xff]
  %v38 = vld [vmem:[#allocation2 + $0x18] sm:$0xff]
  %v39 = vld [vmem:[#allocation2 + $0x20] sm:$0xff]
  %v40 = vld [vmem:[#allocation2 + $0x28] sm:$0xff]
  %v41 = vld [vmem:[#allocation2 + $0x30] sm:$0xff]
  %v42 = vld [vmem:[#allocation2 + $0x38] sm:$0xff]
  %v43 = vld [vmem:[#allocation2 + $0x40] sm:$0xff]
  %v44 = vld [vmem:[#allocation2 + $0x48] sm:$0xff]
  %v45 = vld [vmem:[#allocation2 + $0x50] sm:$0xff]
  %v46 = vld [vmem:[#allocation2 + $0x58] sm:$0xff]
  %v47 = vld [vmem:[#allocation2 + $0x60] sm:$0xff]
  %v48 = vld [vmem:[#allocation2 + $0x68] sm:$0xff]
  %v49 = vld [vmem:[#allocation2 + $0x70] sm:$0xff]
  %v50 = vld [vmem:[#allocation2 + $0x78] sm:$0xff]
  %v51 = vld [vmem:[%s0] sm:$0xff]
  %v52 = vld [vmem:[%s0 + $0x8] sm:$0xff]
  %v53 = vld [vmem:[%s0 + $0x10] sm:$0xff]
  %v54 = vld [vmem:[%s0 + $0x18] sm:$0xff]
  %v55 = vld [vmem:[%s0 + $0x20] sm:$0xff]
  %v56 = vld [vmem:[%s0 + $0x28] sm:$0xff]
  %v57 = vld [vmem:[%s0 + $0x30] sm:$0xff]
  %v58 = vld [vmem:[%s0 + $0x38] sm:$0xff]
  %v59 = vld [vmem:[%s0 + $0x40] sm:$0xff]
  %v60 = vld [vmem:[%s0 + $0x48] sm:$0xff]
  %v61 = vld [vmem:[%s0 + $0x50] sm:$0xff]
  %v62 = vld [vmem:[%s0 + $0x58] sm:$0xff]
  %v63 = vld [vmem:[%s0 + $0x60] sm:$0xff]
  %v64 = vld [vmem:[%s0 + $0x68] sm:$0xff]
  %v65 = vld [vmem:[%s0 + $0x70] sm:$0xff]
  %v66 = vld [vmem:[%s0 + $0x78] sm:$0xff]
  %v67 = vld [vmem:[%s1] sm:$0xf]
  %v68 = vld [vmem:[%s1 + $0x4] sm:$0xf]
  %v69 = vld [vmem:[%s1 + $0x8] sm:$0xf]
  %v70 = vld [vmem:[%s1 + $0xc] sm:$0xf]
  %v71 = vld [vmem:[%s1 + $0x10] sm:$0xf]
  %v72 = vld [vmem:[%s1 + $0x14] sm:$0xf]
  %v73 = vld [vmem:[%s1 + $0x18] sm:$0xf]
  %v74 = vld [vmem:[%s1 + $0x1c] sm:$0xf]
  %v75 = vld [vmem:[%s1 + $0x20] sm:$0xf]
  %v76 = vld [vmem:[%s1 + $0x24] sm:$0xf]
  %v77 = vld [vmem:[%s1 + $0x28] sm:$0xf]
  %v78 = vld [vmem:[%s1 + $0x2c] sm:$0xf]
  %v79 = vld [vmem:[%s1 + $0x30] sm:$0xf]
  %v80 = vld [vmem:[%s1 + $0x34] sm:$0xf]
  %v81 = vld [vmem:[%s1 + $0x38] sm:$0xf]
  %v82 = vld [vmem:[%s1 + $0x3c] sm:$0xf]
  %v83 = vld [vmem:[%s1 + $0x40] sm:$0xf]
  %v84 = vld [vmem:[%s1 + $0x44] sm:$0xf]
  %v85 = vld [vmem:[%s1 + $0x48] sm:$0xf]
  %v86 = vld [vmem:[%s1 + $0x4c] sm:$0xf]
  %v87 = vld [vmem:[%s1 + $0x50] sm:$0xf]
  %v88 = vld [vmem:[%s1 + $0x54] sm:$0xf]
  %v89 = vld [vmem:[%s1 + $0x58] sm:$0xf]
  %v90 = vld [vmem:[%s1 + $0x5c] sm:$0xf]
  %v91 = vld [vmem:[%s1 + $0x60] sm:$0xf]
  %v92 = vld [vmem:[%s1 + $0x64] sm:$0xf]
  %v93 = vld [vmem:[%s1 + $0x68] sm:$0xf]
  %v94 = vld [vmem:[%s1 + $0x6c] sm:$0xf]
  %v95 = vld [vmem:[%s1 + $0x70] sm:$0xf]
  %v96 = vld [vmem:[%s1 + $0x74] sm:$0xf]
  %v97 = vld [vmem:[%s1 + $0x78] sm:$0xf]
  %v98 = vld [vmem:[%s1 + $0x7c] sm:$0xf]
  %v115 = vunpack.c.l.b16 %v51
  %v116 = vunpack.c.h.b16 %v51
  %v117 = vunpack.c.l.b16 %v52
  %v118 = vunpack.c.h.b16 %v52
  %v119 = vunpack.c.l.b16 %v53
  %v120 = vunpack.c.h.b16 %v53
  %v121 = vunpack.c.l.b16 %v54
  %v122 = vunpack.c.h.b16 %v54
  %v123 = vunpack.c.l.b16 %v55
  %v124 = vunpack.c.h.b16 %v55
  %v125 = vunpack.c.l.b16 %v56
  %v126 = vunpack.c.h.b16 %v56
  %v127 = vunpack.c.l.b16 %v57
  %v128 = vunpack.c.h.b16 %v57
  %v129 = vunpack.c.l.b16 %v58
  %v130 = vunpack.c.h.b16 %v58
  %v131 = vunpack.c.l.b16 %v59
  %v132 = vunpack.c.h.b16 %v59
  %v133 = vunpack.c.l.b16 %v60
  %v134 = vunpack.c.h.b16 %v60
  %v135 = vunpack.c.l.b16 %v61
  %v136 = vunpack.c.h.b16 %v61
  %v137 = vunpack.c.l.b16 %v62
  %v138 = vunpack.c.h.b16 %v62
  %v139 = vunpack.c.l.b16 %v63
  %v140 = vunpack.c.h.b16 %v63
  %v141 = vunpack.c.l.b16 %v64
  %v142 = vunpack.c.h.b16 %v64
  %v143 = vunpack.c.l.b16 %v65
  %v144 = vunpack.c.h.b16 %v65
  %v145 = vunpack.c.l.b16 %v66
  %v146 = vunpack.c.h.b16 %v66
  %v147 = vpack.c.b16 %v117, %v115
  %v148 = vpack.c.b16 %v118, %v116
  %v149 = vpack.c.b16 %v121, %v119
  %v150 = vpack.c.b16 %v122, %v120
  %v151 = vpack.c.b16 %v125, %v123
  %v152 = vpack.c.b16 %v126, %v124
  %v153 = vpack.c.b16 %v129, %v127
  %v154 = vpack.c.b16 %v130, %v128
  %v155 = vpack.c.b16 %v133, %v131
  %v156 = vpack.c.b16 %v134, %v132
  %v157 = vpack.c.b16 %v137, %v135
  %v158 = vpack.c.b16 %v138, %v136
  %v159 = vpack.c.b16 %v141, %v139
  %v160 = vpack.c.b16 %v142, %v140
  %v161 = vpack.c.b16 %v145, %v143
  %v162 = vpack.c.b16 %v146, %v144
  %v211 = vunpack.c.l.b16 %v67
  %v212 = vunpack.c.l.b16 %v68
  %v213 = vunpack.c.l.b16 %v69
  %v214 = vunpack.c.l.b16 %v70
  %v215 = vunpack.c.l.b16 %v71
  %v216 = vunpack.c.l.b16 %v72
  %v217 = vunpack.c.l.b16 %v73
  %v218 = vunpack.c.l.b16 %v74
  %v219 = vunpack.c.l.b16 %v75
  %v220 = vunpack.c.l.b16 %v76
  %v221 = vunpack.c.l.b16 %v77
  %v222 = vunpack.c.l.b16 %v78
  %v223 = vunpack.c.l.b16 %v79
  %v224 = vunpack.c.l.b16 %v80
  %v225 = vunpack.c.l.b16 %v81
  %v226 = vunpack.c.l.b16 %v82
  %v227 = vunpack.c.l.b16 %v83
  %v228 = vunpack.c.l.b16 %v84
  %v229 = vunpack.c.l.b16 %v85
  %v230 = vunpack.c.l.b16 %v86
  %v231 = vunpack.c.l.b16 %v87
  %v232 = vunpack.c.l.b16 %v88
  %v233 = vunpack.c.l.b16 %v89
  %v234 = vunpack.c.l.b16 %v90
  %v235 = vunpack.c.l.b16 %v91
  %v236 = vunpack.c.l.b16 %v92
  %v237 = vunpack.c.l.b16 %v93
  %v238 = vunpack.c.l.b16 %v94
  %v239 = vunpack.c.l.b16 %v95
  %v240 = vunpack.c.l.b16 %v96
  %v241 = vunpack.c.l.b16 %v97
  %v242 = vunpack.c.l.b16 %v98
  %v243 = vpack.c.b16 %v212, %v211
  %v244 = vpack.c.b16 %v214, %v213
  %v245 = vpack.c.b16 %v216, %v215
  %v246 = vpack.c.b16 %v218, %v217
  %v247 = vpack.c.b16 %v220, %v219
  %v248 = vpack.c.b16 %v222, %v221
  %v249 = vpack.c.b16 %v224, %v223
  %v250 = vpack.c.b16 %v226, %v225
  %v251 = vpack.c.b16 %v228, %v227
  %v252 = vpack.c.b16 %v230, %v229
  %v253 = vpack.c.b16 %v232, %v231
  %v254 = vpack.c.b16 %v234, %v233
  %v255 = vpack.c.b16 %v236, %v235
  %v256 = vpack.c.b16 %v238, %v237
  %v257 = vpack.c.b16 %v240, %v239
  %v258 = vpack.c.b16 %v242, %v241
  %275 = vmatprep.subr.bf16.mxu0 0
  %276 = vmatpush1.bf16.msra.mxu0 %v250
  %277 = vmatprep.subr.bf16.mxu0 0
  %278 = vmatpush1.bf16.msra.mxu0 %v249
  %279 = vmatprep.subr.bf16.mxu0 0
  %280 = vmatpush1.bf16.msra.mxu0 %v248
  %281 = vmatprep.subr.bf16.mxu0 0
  %282 = vmatpush1.bf16.msra.mxu0 %v247
  %283 = vmatprep.subr.bf16.mxu0 0
  %284 = vmatpush1.bf16.msra.mxu0 %v246
  %285 = vmatprep.subr.bf16.mxu0 0
  %286 = vmatpush1.bf16.msra.mxu0 %v245
  %287 = vmatprep.subr.bf16.mxu0 0
  %288 = vmatpush1.bf16.msra.mxu0 %v244
  %289 = vmatprep.subr.bf16.mxu0 0
  %290 = vmatpush1.bf16.msra.mxu0 %v243
  %291 = vmatprep.subr.bf16.mxu0 0
  %292 = vmatpush2.bf16.msra.mxu0 %v258
  %293 = vmatprep.subr.bf16.mxu0 0
  %294 = vmatpush2.bf16.msra.mxu0 %v257
  %295 = vmatprep.subr.bf16.mxu0 0
  %296 = vmatpush2.bf16.msra.mxu0 %v256
  %297 = vmatprep.subr.bf16.mxu0 0
  %298 = vmatpush2.bf16.msra.mxu0 %v255
  %299 = vmatprep.subr.bf16.mxu0 0
  %300 = vmatpush2.bf16.msra.mxu0 %v254
  %301 = vmatprep.subr.bf16.mxu0 0
  %302 = vmatpush2.bf16.msra.mxu0 %v253
  %303 = vmatprep.subr.bf16.mxu0 0
  %304 = vmatpush2.bf16.msra.mxu0 %v252
  %305 = vmatprep.subr.bf16.mxu0 0
  %306 = vmatpush2.bf16.msra.mxu0 %v251
  %307 = vmatprep.mubr.bf16.mxu0 %v148
  %308 = vmatmul.mubr.bf16.gmra.mxu0 %v147
  %v309 = vpop.f32.mrf.mxu0
  %v310 = vadd.f32 0.0, %v309
  %v311 = vpop.f32.mrf.mxu0
  %v312 = vpop.f32.mrf.mxu0
  %v313 = vadd.f32 0.0, %v312
  %v314 = vpop.f32.mrf.mxu0
  %315 = vmatprep.mubr.bf16.mxu0 %v150
  %316 = vmatmul.mubr.bf16.gmra.mxu0 %v149
  %v317 = vpop.f32.mrf.mxu0
  %v318 = vadd.f32 0.0, %v317
  %v319 = vpop.f32.mrf.mxu0
  %v320 = vpop.f32.mrf.mxu0
  %v321 = vadd.f32 0.0, %v320
  %v322 = vpop.f32.mrf.mxu0
  %323 = vmatprep.mubr.bf16.mxu0 %v152
  %324 = vmatmul.mubr.bf16.gmra.mxu0 %v151
  %v325 = vpop.f32.mrf.mxu0
  %v326 = vadd.f32 0.0, %v325
  %v327 = vpop.f32.mrf.mxu0
  %v328 = vpop.f32.mrf.mxu0
  %v329 = vadd.f32 0.0, %v328
  %v330 = vpop.f32.mrf.mxu0
  %331 = vmatprep.mubr.bf16.mxu0 %v154
  %332 = vmatmul.mubr.bf16.gmra.mxu0 %v153
  %v333 = vpop.f32.mrf.mxu0
  %v334 = vadd.f32 0.0, %v333
  %v335 = vpop.f32.mrf.mxu0
  %v336 = vpop.f32.mrf.mxu0
  %v337 = vadd.f32 0.0, %v336
  %v338 = vpop.f32.mrf.mxu0
  %339 = vmatprep.mubr.bf16.mxu0 %v156
  %340 = vmatmul.mubr.bf16.gmra.mxu0 %v155
  %v341 = vpop.f32.mrf.mxu0
  %v342 = vadd.f32 0.0, %v341
  %v343 = vpop.f32.mrf.mxu0
  %v344 = vpop.f32.mrf.mxu0
  %v345 = vadd.f32 0.0, %v344
  %v346 = vpop.f32.mrf.mxu0
  %347 = vmatprep.mubr.bf16.mxu0 %v158
  %348 = vmatmul.mubr.bf16.gmra.mxu0 %v157
  %v349 = vpop.f32.mrf.mxu0
  %v350 = vadd.f32 0.0, %v349
  %v351 = vpop.f32.mrf.mxu0
  %v352 = vpop.f32.mrf.mxu0
  %v353 = vadd.f32 0.0, %v352
  %v354 = vpop.f32.mrf.mxu0
  %355 = vmatprep.mubr.bf16.mxu0 %v160
  %356 = vmatmul.mubr.bf16.gmra.mxu0 %v159
  %v357 = vpop.f32.mrf.mxu0
  %v358 = vadd.f32 0.0, %v357
  %v359 = vpop.f32.mrf.mxu0
  %v360 = vpop.f32.mrf.mxu0
  %v361 = vadd.f32 0.0, %v360
  %v362 = vpop.f32.mrf.mxu0
  %363 = vmatprep.mubr.bf16.mxu0 %v162
  %364 = vmatmul.mubr.bf16.gmra.mxu0 %v161
  %v365 = vpop.f32.mrf.mxu0
  %v366 = vadd.f32 0.0, %v365
  %v367 = vpop.f32.mrf.mxu0
  %v368 = vpop.f32.mrf.mxu0
  %v369 = vadd.f32 0.0, %v368
  %v370 = vpop.f32.mrf.mxu0
  %371 = vdwg.mxu0
  %v372 = vadd.f32 %v35, %v310
  %v373 = vadd.f32 %v36, %v313
  %v374 = vadd.f32 %v37, %v318
  %v375 = vadd.f32 %v38, %v321
  %v376 = vadd.f32 %v39, %v326
  %v377 = vadd.f32 %v40, %v329
  %v378 = vadd.f32 %v41, %v334
  %v379 = vadd.f32 %v42, %v337
  %v380 = vadd.f32 %v43, %v342
  %v381 = vadd.f32 %v44, %v345
  %v382 = vadd.f32 %v45, %v350
  %v383 = vadd.f32 %v46, %v353
  %v384 = vadd.f32 %v47, %v358
  %v385 = vadd.f32 %v48, %v361
  %v386 = vadd.f32 %v49, %v366
  %v387 = vadd.f32 %v50, %v369
  %388 = vst [vmem:[#allocation2] sm:$0xff] %v372
  %389 = vst [vmem:[#allocation2 + $0x8] sm:$0xff] %v373
  %390 = vst [vmem:[#allocation2 + $0x10] sm:$0xff] %v374
  %391 = vst [vmem:[#allocation2 + $0x18] sm:$0xff] %v375
  %392 = vst [vmem:[#allocation2 + $0x20] sm:$0xff] %v376
  %393 = vst [vmem:[#allocation2 + $0x28] sm:$0xff] %v377
  %394 = vst [vmem:[#allocation2 + $0x30] sm:$0xff] %v378
  %395 = vst [vmem:[#allocation2 + $0x38] sm:$0xff] %v379
  %396 = vst [vmem:[#allocation2 + $0x40] sm:$0xff] %v380
  %397 = vst [vmem:[#allocation2 + $0x48] sm:$0xff] %v381
  %398 = vst [vmem:[#allocation2 + $0x50] sm:$0xff] %v382
  %399 = vst [vmem:[#allocation2 + $0x58] sm:$0xff] %v383
  %400 = vst [vmem:[#allocation2 + $0x60] sm:$0xff] %v384
  %401 = vst [vmem:[#allocation2 + $0x68] sm:$0xff] %v385
  %402 = vst [vmem:[#allocation2 + $0x70] sm:$0xff] %v386
  %403 = vst [vmem:[#allocation2 + $0x78] sm:$0xff] %v387
  // Predicated region
  $region18: #{discriminator2_patchs_forward.6} parent=0 // pred_check
    %p404 = pneg %p15
  $region19: #{discriminator2_patchs_forward.6} parent=0 // pred_check_branch
    %406 = sbr.rel (%p404) target = $region21
  $region20: #{discriminator2_patchs_forward.6} parent=0 // pred_region
    %v407 = vld [vmem:[#allocation2] sm:$0xff]
    %v408 = vld [vmem:[#allocation2 + $0x8] sm:$0xff]
    %v409 = vld [vmem:[#allocation2 + $0x10] sm:$0xff]
    %v410 = vld [vmem:[#allocation2 + $0x18] sm:$0xff]
    %v411 = vld [vmem:[#allocation2 + $0x20] sm:$0xff]
    %v412 = vld [vmem:[#allocation2 + $0x28] sm:$0xff]
    %v413 = vld [vmem:[#allocation2 + $0x30] sm:$0xff]
    %v414 = vld [vmem:[#allocation2 + $0x38] sm:$0xff]
    %v415 = vld [vmem:[#allocation2 + $0x40] sm:$0xff]
    %v416 = vld [vmem:[#allocation2 + $0x48] sm:$0xff]
    %v417 = vld [vmem:[#allocation2 + $0x50] sm:$0xff]
    %v418 = vld [vmem:[#allocation2 + $0x58] sm:$0xff]
    %v419 = vld [vmem:[#allocation2 + $0x60] sm:$0xff]
    %v420 = vld [vmem:[#allocation2 + $0x68] sm:$0xff]
    %v421 = vld [vmem:[#allocation2 + $0x70] sm:$0xff]
    %v422 = vld [vmem:[#allocation2 + $0x78] sm:$0xff]
    %v423 = vld [vmem:[%s2] sm:$0x1]
    %v425 = vlaneseq
    %v426 = vshrl.u32 %v425, 7
    %v427 = vsub.s32 0, %v426
    %v428 = vrot.slane %v423, %v427
    %v430 = vadd.f32 %v407, %v428
    %v431 = vadd.f32 %v408, %v428
    %v432 = vadd.f32 %v409, %v428
    %v433 = vadd.f32 %v410, %v428
    %v434 = vadd.f32 %v411, %v428
    %v435 = vadd.f32 %v412, %v428
    %v436 = vadd.f32 %v413, %v428
    %v437 = vadd.f32 %v414, %v428
    %v438 = vadd.f32 %v415, %v428
    %v439 = vadd.f32 %v416, %v428
    %v440 = vadd.f32 %v417, %v428
    %v441 = vadd.f32 %v418, %v428
    %v442 = vadd.f32 %v419, %v428
    %v443 = vadd.f32 %v420, %v428
    %v444 = vadd.f32 %v421, %v428
    %v445 = vadd.f32 %v422, %v428
    %vm446 = vcmp.ge.f32.partialorder %v430, 0.0
    %vm447 = vcmp.ge.f32.partialorder %v431, 0.0
    %vm448 = vcmp.ge.f32.partialorder %v432, 0.0
    %vm449 = vcmp.ge.f32.partialorder %v433, 0.0
    %vm450 = vcmp.ge.f32.partialorder %v434, 0.0
    %vm451 = vcmp.ge.f32.partialorder %v435, 0.0
    %vm452 = vcmp.ge.f32.partialorder %v436, 0.0
    %vm453 = vcmp.ge.f32.partialorder %v437, 0.0
    %vm454 = vcmp.ge.f32.partialorder %v438, 0.0
    %vm455 = vcmp.ge.f32.partialorder %v439, 0.0
    %vm456 = vcmp.ge.f32.partialorder %v440, 0.0
    %vm457 = vcmp.ge.f32.partialorder %v441, 0.0
    %vm458 = vcmp.ge.f32.partialorder %v442, 0.0
    %vm459 = vcmp.ge.f32.partialorder %v443, 0.0
    %vm460 = vcmp.ge.f32.partialorder %v444, 0.0
    %vm461 = vcmp.ge.f32.partialorder %v445, 0.0
    %v462 = vmul.f32 %v430, 0.2
    %v463 = vmul.f32 %v431, 0.2
    %v464 = vmul.f32 %v432, 0.2
    %v465 = vmul.f32 %v433, 0.2
    %v466 = vmul.f32 %v434, 0.2
    %v467 = vmul.f32 %v435, 0.2
    %v468 = vmul.f32 %v436, 0.2
    %v469 = vmul.f32 %v437, 0.2
    %v470 = vmul.f32 %v438, 0.2
    %v471 = vmul.f32 %v439, 0.2
    %v472 = vmul.f32 %v440, 0.2
    %v473 = vmul.f32 %v441, 0.2
    %v474 = vmul.f32 %v442, 0.2
    %v475 = vmul.f32 %v443, 0.2
    %v476 = vmul.f32 %v444, 0.2
    %v477 = vmul.f32 %v445, 0.2
    %v478 = vsel %vm446, %v430, %v462
    %v479 = vsel %vm447, %v431, %v463
    %v480 = vsel %vm448, %v432, %v464
    %v481 = vsel %vm449, %v433, %v465
    %v482 = vsel %vm450, %v434, %v466
    %v483 = vsel %vm451, %v435, %v467
    %v484 = vsel %vm452, %v436, %v468
    %v485 = vsel %vm453, %v437, %v469
    %v486 = vsel %vm454, %v438, %v470
    %v487 = vsel %vm455, %v439, %v471
    %v488 = vsel %vm456, %v440, %v472
    %v489 = vsel %vm457, %v441, %v473
    %v490 = vsel %vm458, %v442, %v474
    %v491 = vsel %vm459, %v443, %v475
    %v492 = vsel %vm460, %v444, %v476
    %v493 = vsel %vm461, %v445, %v477
    %v494 = vpack.c.bf16 %v479, %v478
    %v495 = vpack.c.bf16 %v481, %v480
    %v496 = vpack.c.bf16 %v483, %v482
    %v497 = vpack.c.bf16 %v485, %v484
    %v498 = vpack.c.bf16 %v487, %v486
    %v499 = vpack.c.bf16 %v489, %v488
    %v500 = vpack.c.bf16 %v491, %v490
    %v501 = vpack.c.bf16 %v493, %v492
    %v510 = vunpack.c.l.b16 %v494
    %v511 = vunpack.c.h.b16 %v494
    %v512 = vunpack.c.l.b16 %v495
    %v513 = vunpack.c.h.b16 %v495
    %v514 = vunpack.c.l.b16 %v496
    %v515 = vunpack.c.h.b16 %v496
    %v516 = vunpack.c.l.b16 %v497
    %v517 = vunpack.c.h.b16 %v497
    %v518 = vunpack.c.l.b16 %v498
    %v519 = vunpack.c.h.b16 %v498
    %v520 = vunpack.c.l.b16 %v499
    %v521 = vunpack.c.h.b16 %v499
    %v522 = vunpack.c.l.b16 %v500
    %v523 = vunpack.c.h.b16 %v500
    %v524 = vunpack.c.l.b16 %v501
    %v525 = vunpack.c.h.b16 %v501
    %v526 = vpack.c.b16 %v510, %v510
    %v527 = vpack.c.b16 %v511, %v511
    %v528 = vpack.c.b16 %v512, %v512
    %v529 = vpack.c.b16 %v513, %v513
    %v530 = vpack.c.b16 %v514, %v514
    %v531 = vpack.c.b16 %v515, %v515
    %v532 = vpack.c.b16 %v516, %v516
    %v533 = vpack.c.b16 %v517, %v517
    %v534 = vpack.c.b16 %v518, %v518
    %v535 = vpack.c.b16 %v519, %v519
    %v536 = vpack.c.b16 %v520, %v520
    %v537 = vpack.c.b16 %v521, %v521
    %v538 = vpack.c.b16 %v522, %v522
    %v539 = vpack.c.b16 %v523, %v523
    %v540 = vpack.c.b16 %v524, %v524
    %v541 = vpack.c.b16 %v525, %v525
    %558 = vst [vmem:[%s3] sm:$0xf] %v526
    %559 = vst [vmem:[%s3 + $0x4] sm:$0xf] %v527
    %560 = vst [vmem:[%s3 + $0x8] sm:$0xf] %v528
    %561 = vst [vmem:[%s3 + $0xc] sm:$0xf] %v529
    %562 = vst [vmem:[%s3 + $0x10] sm:$0xf] %v530
    %563 = vst [vmem:[%s3 + $0x14] sm:$0xf] %v531
    %564 = vst [vmem:[%s3 + $0x18] sm:$0xf] %v532
    %565 = vst [vmem:[%s3 + $0x1c] sm:$0xf] %v533
    %566 = vst [vmem:[%s3 + $0x20] sm:$0xf] %v534
    %567 = vst [vmem:[%s3 + $0x24] sm:$0xf] %v535
    %568 = vst [vmem:[%s3 + $0x28] sm:$0xf] %v536
    %569 = vst [vmem:[%s3 + $0x2c] sm:$0xf] %v537
    %570 = vst [vmem:[%s3 + $0x30] sm:$0xf] %v538
    %571 = vst [vmem:[%s3 + $0x34] sm:$0xf] %v539
    %572 = vst [vmem:[%s3 + $0x38] sm:$0xf] %v540
    %573 = vst [vmem:[%s3 + $0x3c] sm:$0xf] %v541
  $region21: #{discriminator2_patchs_forward.6} parent=0 // pred_fallthru
    _
  // Predicated region
  $region22: #{discriminator2_patchs_forward.6} parent=0 // pred_check
    _
  $region23: #{discriminator2_patchs_forward.6} parent=0 // pred_check_branch
    %575 = sbr.rel (0) target = $region25
  $region24: #{discriminator2_patchs_forward.6} parent=0 // pred_region
    _
  $region25: #{discriminator2_patchs_forward.6} parent=0 // pred_fallthru
    _
  // Predicated region
  $region26: #{discriminator2_patchs_forward.6} parent=0 // pred_check
    _
  $region27: #{discriminator2_patchs_forward.6} parent=0 // pred_check_branch
    %577 = sbr.rel (0) target = $region29
  $region28: #{discriminator2_patchs_forward.6} parent=0 // pred_region
    _
  $region29: #{discriminator2_patchs_forward.6} parent=0 // pred_fallthru
    _

// kernel: discriminator2_patchs_forward.7
$region0: #{discriminator2_patchs_forward.7}
  #allocation0 [shape = 'u32[]', space=smem, size = 0x4, offset = 0x4, fixed_abs, tag = 'smem constant byte address 0x4 - core index']
  #allocation1 [shape = 'u32[144,128]{1,0:T(1,128)}', space=vmem, size = 0x12000, scoped, tag = 'internal scratch']
  #allocation2 [shape = 'f32[32,128]{1,0:T(8,128)}', space=vmem, size = 0x4000, scoped, tag = 'scratch operand']
  %s0 = inlined_call_operand.vmem [shape: bf16[32,512], index: 0, kind: input, shape index: {}]
  %s1 = inlined_call_operand.vmem [shape: bf16[512,128], index: 1, kind: input, shape index: {}]
  %s2 = inlined_call_operand.vmem [shape: f32[1,128], index: 2, kind: input, shape index: {}]
  %s3 = inlined_call_operand.vmem [shape: bf16[32,128], index: 3, kind: output, shape index: {}]
  %s4 = sld [smem:[#allocation0]]
  $region30: #{discriminator2_patchs_forward.7} parent=0
    _
  %s6 = ssub.s32 1, %s4
  %s7 = scalar_select 0, %s6, %s4
  // Predicated region
  $region2: #{discriminator2_patchs_forward.7} parent=0 // pred_check
    _
  $region3: #{discriminator2_patchs_forward.7} parent=0 // pred_check_branch
    %9 = sbr.rel (0) target = $region5
  $region4: #{discriminator2_patchs_forward.7} parent=0 // pred_region
    _
  $region5: #{discriminator2_patchs_forward.7} parent=0 // pred_fallthru
    _
  // Predicated region
  $region6: #{discriminator2_patchs_forward.7} parent=0 // pred_check
    _
  $region7: #{discriminator2_patchs_forward.7} parent=0 // pred_check_branch
    %11 = sbr.rel (0) target = $region9
  $region8: #{discriminator2_patchs_forward.7} parent=0 // pred_region
    _
  $region9: #{discriminator2_patchs_forward.7} parent=0 // pred_fallthru
    _
  // Predicated region
  $region10: #{discriminator2_patchs_forward.7} parent=0 // pred_check
    _
  $region11: #{discriminator2_patchs_forward.7} parent=0 // pred_check_branch
    %13 = sbr.rel (0) target = $region13
  $region12: #{discriminator2_patchs_forward.7} parent=0 // pred_region
    _
  $region13: #{discriminator2_patchs_forward.7} parent=0 // pred_fallthru
    _
  %p15 = scmp.eq.s32.totalorder 0, 0
  // Predicated region
  $region14: #{discriminator2_patchs_forward.7} parent=0 // pred_check
    %p16 = pneg %p15
  $region15: #{discriminator2_patchs_forward.7} parent=0 // pred_check_branch
    %18 = sbr.rel (%p16) target = $region17
  $region16: #{discriminator2_patchs_forward.7} parent=0 // pred_region
    %19 = vst [vmem:[#allocation2] sm:$0xff] 0.0
    %20 = vst [vmem:[#allocation2 + $0x8] sm:$0xff] 0.0
    %21 = vst [vmem:[#allocation2 + $0x10] sm:$0xff] 0.0
    %22 = vst [vmem:[#allocation2 + $0x18] sm:$0xff] 0.0
  $region17: #{discriminator2_patchs_forward.7} parent=0 // pred_fallthru
    _
  %v23 = vld [vmem:[#allocation2] sm:$0xff]
  %v24 = vld [vmem:[#allocation2 + $0x8] sm:$0xff]
  %v25 = vld [vmem:[#allocation2 + $0x10] sm:$0xff]
  %v26 = vld [vmem:[#allocation2 + $0x18] sm:$0xff]
  %v27 = vld [vmem:[%s0] sm:$0xff]
  %v28 = vld [vmem:[%s0 + $0x8] sm:$0xff]
  %v29 = vld [vmem:[%s0 + $0x10] sm:$0xff]
  %v30 = vld [vmem:[%s0 + $0x18] sm:$0xff]
  %v31 = vld [vmem:[%s0 + $0x20] sm:$0xff]
  %v32 = vld [vmem:[%s0 + $0x28] sm:$0xff]
  %v33 = vld [vmem:[%s0 + $0x30] sm:$0xff]
  %v34 = vld [vmem:[%s0 + $0x38] sm:$0xff]
  %v35 = vld [vmem:[%s1] sm:$0xf]
  %v36 = vld [vmem:[%s1 + $0x4] sm:$0xf]
  %v37 = vld [vmem:[%s1 + $0x8] sm:$0xf]
  %v38 = vld [vmem:[%s1 + $0xc] sm:$0xf]
  %v39 = vld [vmem:[%s1 + $0x10] sm:$0xf]
  %v40 = vld [vmem:[%s1 + $0x14] sm:$0xf]
  %v41 = vld [vmem:[%s1 + $0x18] sm:$0xf]
  %v42 = vld [vmem:[%s1 + $0x1c] sm:$0xf]
  %v43 = vld [vmem:[%s1 + $0x20] sm:$0xf]
  %v44 = vld [vmem:[%s1 + $0x24] sm:$0xf]
  %v45 = vld [vmem:[%s1 + $0x28] sm:$0xf]
  %v46 = vld [vmem:[%s1 + $0x2c] sm:$0xf]
  %v47 = vld [vmem:[%s1 + $0x30] sm:$0xf]
  %v48 = vld [vmem:[%s1 + $0x34] sm:$0xf]
  %v49 = vld [vmem:[%s1 + $0x38] sm:$0xf]
  %v50 = vld [vmem:[%s1 + $0x3c] sm:$0xf]
  %v51 = vld [vmem:[%s1 + $0x40] sm:$0xf]
  %v52 = vld [vmem:[%s1 + $0x44] sm:$0xf]
  %v53 = vld [vmem:[%s1 + $0x48] sm:$0xf]
  %v54 = vld [vmem:[%s1 + $0x4c] sm:$0xf]
  %v55 = vld [vmem:[%s1 + $0x50] sm:$0xf]
  %v56 = vld [vmem:[%s1 + $0x54] sm:$0xf]
  %v57 = vld [vmem:[%s1 + $0x58] sm:$0xf]
  %v58 = vld [vmem:[%s1 + $0x5c] sm:$0xf]
  %v59 = vld [vmem:[%s1 + $0x60] sm:$0xf]
  %v60 = vld [vmem:[%s1 + $0x64] sm:$0xf]
  %v61 = vld [vmem:[%s1 + $0x68] sm:$0xf]
  %v62 = vld [vmem:[%s1 + $0x6c] sm:$0xf]
  %v63 = vld [vmem:[%s1 + $0x70] sm:$0xf]
  %v64 = vld [vmem:[%s1 + $0x74] sm:$0xf]
  %v65 = vld [vmem:[%s1 + $0x78] sm:$0xf]
  %v66 = vld [vmem:[%s1 + $0x7c] sm:$0xf]
  %v67 = vld [vmem:[%s1 + $0x80] sm:$0xf]
  %v68 = vld [vmem:[%s1 + $0x84] sm:$0xf]
  %v69 = vld [vmem:[%s1 + $0x88] sm:$0xf]
  %v70 = vld [vmem:[%s1 + $0x8c] sm:$0xf]
  %v71 = vld [vmem:[%s1 + $0x90] sm:$0xf]
  %v72 = vld [vmem:[%s1 + $0x94] sm:$0xf]
  %v73 = vld [vmem:[%s1 + $0x98] sm:$0xf]
  %v74 = vld [vmem:[%s1 + $0x9c] sm:$0xf]
  %v75 = vld [vmem:[%s1 + $0xa0] sm:$0xf]
  %v76 = vld [vmem:[%s1 + $0xa4] sm:$0xf]
  %v77 = vld [vmem:[%s1 + $0xa8] sm:$0xf]
  %v78 = vld [vmem:[%s1 + $0xac] sm:$0xf]
  %v79 = vld [vmem:[%s1 + $0xb0] sm:$0xf]
  %v80 = vld [vmem:[%s1 + $0xb4] sm:$0xf]
  %v81 = vld [vmem:[%s1 + $0xb8] sm:$0xf]
  %v82 = vld [vmem:[%s1 + $0xbc] sm:$0xf]
  %v83 = vld [vmem:[%s1 + $0xc0] sm:$0xf]
  %v84 = vld [vmem:[%s1 + $0xc4] sm:$0xf]
  %v85 = vld [vmem:[%s1 + $0xc8] sm:$0xf]
  %v86 = vld [vmem:[%s1 + $0xcc] sm:$0xf]
  %v87 = vld [vmem:[%s1 + $0xd0] sm:$0xf]
  %v88 = vld [vmem:[%s1 + $0xd4] sm:$0xf]
  %v89 = vld [vmem:[%s1 + $0xd8] sm:$0xf]
  %v90 = vld [vmem:[%s1 + $0xdc] sm:$0xf]
  %v91 = vld [vmem:[%s1 + $0xe0] sm:$0xf]
  %v92 = vld [vmem:[%s1 + $0xe4] sm:$0xf]
  %v93 = vld [vmem:[%s1 + $0xe8] sm:$0xf]
  %v94 = vld [vmem:[%s1 + $0xec] sm:$0xf]
  %v95 = vld [vmem:[%s1 + $0xf0] sm:$0xf]
  %v96 = vld [vmem:[%s1 + $0xf4] sm:$0xf]
  %v97 = vld [vmem:[%s1 + $0xf8] sm:$0xf]
  %v98 = vld [vmem:[%s1 + $0xfc] sm:$0xf]
  %v107 = vunpack.c.l.b16 %v27
  %v108 = vunpack.c.h.b16 %v27
  %v109 = vunpack.c.l.b16 %v28
  %v110 = vunpack.c.h.b16 %v28
  %v111 = vunpack.c.l.b16 %v29
  %v112 = vunpack.c.h.b16 %v29
  %v113 = vunpack.c.l.b16 %v30
  %v114 = vunpack.c.h.b16 %v30
  %v115 = vunpack.c.l.b16 %v31
  %v116 = vunpack.c.h.b16 %v31
  %v117 = vunpack.c.l.b16 %v32
  %v118 = vunpack.c.h.b16 %v32
  %v119 = vunpack.c.l.b16 %v33
  %v120 = vunpack.c.h.b16 %v33
  %v121 = vunpack.c.l.b16 %v34
  %v122 = vunpack.c.h.b16 %v34
  %v123 = vpack.c.b16 %v111, %v107
  %v124 = vpack.c.b16 %v112, %v108
  %v125 = vpack.c.b16 %v113, %v109
  %v126 = vpack.c.b16 %v114, %v110
  %v127 = vpack.c.b16 %v119, %v115
  %v128 = vpack.c.b16 %v120, %v116
  %v129 = vpack.c.b16 %v121, %v117
  %v130 = vpack.c.b16 %v122, %v118
  %v203 = vunpack.c.l.b16 %v35
  %v204 = vunpack.c.l.b16 %v36
  %v205 = vunpack.c.l.b16 %v37
  %v206 = vunpack.c.l.b16 %v38
  %v207 = vunpack.c.l.b16 %v39
  %v208 = vunpack.c.l.b16 %v40
  %v209 = vunpack.c.l.b16 %v41
  %v210 = vunpack.c.l.b16 %v42
  %v211 = vunpack.c.l.b16 %v43
  %v212 = vunpack.c.l.b16 %v44
  %v213 = vunpack.c.l.b16 %v45
  %v214 = vunpack.c.l.b16 %v46
  %v215 = vunpack.c.l.b16 %v47
  %v216 = vunpack.c.l.b16 %v48
  %v217 = vunpack.c.l.b16 %v49
  %v218 = vunpack.c.l.b16 %v50
  %v219 = vunpack.c.l.b16 %v51
  %v220 = vunpack.c.l.b16 %v52
  %v221 = vunpack.c.l.b16 %v53
  %v222 = vunpack.c.l.b16 %v54
  %v223 = vunpack.c.l.b16 %v55
  %v224 = vunpack.c.l.b16 %v56
  %v225 = vunpack.c.l.b16 %v57
  %v226 = vunpack.c.l.b16 %v58
  %v227 = vunpack.c.l.b16 %v59
  %v228 = vunpack.c.l.b16 %v60
  %v229 = vunpack.c.l.b16 %v61
  %v230 = vunpack.c.l.b16 %v62
  %v231 = vunpack.c.l.b16 %v63
  %v232 = vunpack.c.l.b16 %v64
  %v233 = vunpack.c.l.b16 %v65
  %v234 = vunpack.c.l.b16 %v66
  %v235 = vunpack.c.l.b16 %v67
  %v236 = vunpack.c.l.b16 %v68
  %v237 = vunpack.c.l.b16 %v69
  %v238 = vunpack.c.l.b16 %v70
  %v239 = vunpack.c.l.b16 %v71
  %v240 = vunpack.c.l.b16 %v72
  %v241 = vunpack.c.l.b16 %v73
  %v242 = vunpack.c.l.b16 %v74
  %v243 = vunpack.c.l.b16 %v75
  %v244 = vunpack.c.l.b16 %v76
  %v245 = vunpack.c.l.b16 %v77
  %v246 = vunpack.c.l.b16 %v78
  %v247 = vunpack.c.l.b16 %v79
  %v248 = vunpack.c.l.b16 %v80
  %v249 = vunpack.c.l.b16 %v81
  %v250 = vunpack.c.l.b16 %v82
  %v251 = vunpack.c.l.b16 %v83
  %v252 = vunpack.c.l.b16 %v84
  %v253 = vunpack.c.l.b16 %v85
  %v254 = vunpack.c.l.b16 %v86
  %v255 = vunpack.c.l.b16 %v87
  %v256 = vunpack.c.l.b16 %v88
  %v257 = vunpack.c.l.b16 %v89
  %v258 = vunpack.c.l.b16 %v90
  %v259 = vunpack.c.l.b16 %v91
  %v260 = vunpack.c.l.b16 %v92
  %v261 = vunpack.c.l.b16 %v93
  %v262 = vunpack.c.l.b16 %v94
  %v263 = vunpack.c.l.b16 %v95
  %v264 = vunpack.c.l.b16 %v96
  %v265 = vunpack.c.l.b16 %v97
  %v266 = vunpack.c.l.b16 %v98
  %v267 = vpack.c.b16 %v204, %v203
  %v268 = vpack.c.b16 %v206, %v205
  %v269 = vpack.c.b16 %v208, %v207
  %v270 = vpack.c.b16 %v210, %v209
  %v271 = vpack.c.b16 %v212, %v211
  %v272 = vpack.c.b16 %v214, %v213
  %v273 = vpack.c.b16 %v216, %v215
  %v274 = vpack.c.b16 %v218, %v217
  %v275 = vpack.c.b16 %v220, %v219
  %v276 = vpack.c.b16 %v222, %v221
  %v277 = vpack.c.b16 %v224, %v223
  %v278 = vpack.c.b16 %v226, %v225
  %v279 = vpack.c.b16 %v228, %v227
  %v280 = vpack.c.b16 %v230, %v229
  %v281 = vpack.c.b16 %v232, %v231
  %v282 = vpack.c.b16 %v234, %v233
  %v283 = vpack.c.b16 %v236, %v235
  %v284 = vpack.c.b16 %v238, %v237
  %v285 = vpack.c.b16 %v240, %v239
  %v286 = vpack.c.b16 %v242, %v241
  %v287 = vpack.c.b16 %v244, %v243
  %v288 = vpack.c.b16 %v246, %v245
  %v289 = vpack.c.b16 %v248, %v247
  %v290 = vpack.c.b16 %v250, %v249
  %v291 = vpack.c.b16 %v252, %v251
  %v292 = vpack.c.b16 %v254, %v253
  %v293 = vpack.c.b16 %v256, %v255
  %v294 = vpack.c.b16 %v258, %v257
  %v295 = vpack.c.b16 %v260, %v259
  %v296 = vpack.c.b16 %v262, %v261
  %v297 = vpack.c.b16 %v264, %v263
  %v298 = vpack.c.b16 %v266, %v265
  %331 = vmatprep.subr.bf16.mxu0 0
  %332 = vmatpush1.bf16.msra.mxu0 %v274
  %333 = vmatprep.subr.bf16.mxu0 0
  %334 = vmatpush1.bf16.msra.mxu0 %v273
  %335 = vmatprep.subr.bf16.mxu0 0
  %336 = vmatpush1.bf16.msra.mxu0 %v272
  %337 = vmatprep.subr.bf16.mxu0 0
  %338 = vmatpush1.bf16.msra.mxu0 %v271
  %339 = vmatprep.subr.bf16.mxu0 0
  %340 = vmatpush1.bf16.msra.mxu0 %v270
  %341 = vmatprep.subr.bf16.mxu0 0
  %342 = vmatpush1.bf16.msra.mxu0 %v269
  %343 = vmatprep.subr.bf16.mxu0 0
  %344 = vmatpush1.bf16.msra.mxu0 %v268
  %345 = vmatprep.subr.bf16.mxu0 0
  %346 = vmatpush1.bf16.msra.mxu0 %v267
  %347 = vmatprep.subr.bf16.mxu0 0
  %348 = vmatpush2.bf16.msra.mxu0 %v282
  %349 = vmatprep.subr.bf16.mxu0 0
  %350 = vmatpush2.bf16.msra.mxu0 %v281
  %351 = vmatprep.subr.bf16.mxu0 0
  %352 = vmatpush2.bf16.msra.mxu0 %v280
  %353 = vmatprep.subr.bf16.mxu0 0
  %354 = vmatpush2.bf16.msra.mxu0 %v279
  %355 = vmatprep.subr.bf16.mxu0 0
  %356 = vmatpush2.bf16.msra.mxu0 %v278
  %357 = vmatprep.subr.bf16.mxu0 0
  %358 = vmatpush2.bf16.msra.mxu0 %v277
  %359 = vmatprep.subr.bf16.mxu0 0
  %360 = vmatpush2.bf16.msra.mxu0 %v276
  %361 = vmatprep.subr.bf16.mxu0 0
  %362 = vmatpush2.bf16.msra.mxu0 %v275
  %363 = vmatprep.mubr.bf16.mxu0 %v124
  %364 = vmatmul.mubr.bf16.gmra.mxu0 %v123
  %v365 = vpop.f32.mrf.mxu0
  %v366 = vadd.f32 0.0, %v365
  %v367 = vpop.f32.mrf.mxu0
  %v368 = vpop.f32.mrf.mxu0
  %v369 = vadd.f32 0.0, %v368
  %v370 = vpop.f32.mrf.mxu0
  %371 = vmatprep.mubr.bf16.mxu0 %v128
  %372 = vmatmul.mubr.bf16.gmra.mxu0 %v127
  %v373 = vpop.f32.mrf.mxu0
  %v374 = vadd.f32 0.0, %v373
  %v375 = vpop.f32.mrf.mxu0
  %v376 = vpop.f32.mrf.mxu0
  %v377 = vadd.f32 0.0, %v376
  %v378 = vpop.f32.mrf.mxu0
  %379 = vdwg.mxu0
  %380 = vmatprep.subr.bf16.mxu0 0
  %381 = vmatpush1.bf16.msra.mxu0 %v290
  %382 = vmatprep.subr.bf16.mxu0 0
  %383 = vmatpush1.bf16.msra.mxu0 %v289
  %384 = vmatprep.subr.bf16.mxu0 0
  %385 = vmatpush1.bf16.msra.mxu0 %v288
  %386 = vmatprep.subr.bf16.mxu0 0
  %387 = vmatpush1.bf16.msra.mxu0 %v287
  %388 = vmatprep.subr.bf16.mxu0 0
  %389 = vmatpush1.bf16.msra.mxu0 %v286
  %390 = vmatprep.subr.bf16.mxu0 0
  %391 = vmatpush1.bf16.msra.mxu0 %v285
  %392 = vmatprep.subr.bf16.mxu0 0
  %393 = vmatpush1.bf16.msra.mxu0 %v284
  %394 = vmatprep.subr.bf16.mxu0 0
  %395 = vmatpush1.bf16.msra.mxu0 %v283
  %396 = vmatprep.subr.bf16.mxu0 0
  %397 = vmatpush2.bf16.msra.mxu0 %v298
  %398 = vmatprep.subr.bf16.mxu0 0
  %399 = vmatpush2.bf16.msra.mxu0 %v297
  %400 = vmatprep.subr.bf16.mxu0 0
  %401 = vmatpush2.bf16.msra.mxu0 %v296
  %402 = vmatprep.subr.bf16.mxu0 0
  %403 = vmatpush2.bf16.msra.mxu0 %v295
  %404 = vmatprep.subr.bf16.mxu0 0
  %405 = vmatpush2.bf16.msra.mxu0 %v294
  %406 = vmatprep.subr.bf16.mxu0 0
  %407 = vmatpush2.bf16.msra.mxu0 %v293
  %408 = vmatprep.subr.bf16.mxu0 0
  %409 = vmatpush2.bf16.msra.mxu0 %v292
  %410 = vmatprep.subr.bf16.mxu0 0
  %411 = vmatpush2.bf16.msra.mxu0 %v291
  %412 = vmatprep.mubr.bf16.mxu0 %v126
  %413 = vmatmul.mubr.bf16.gmra.mxu0 %v125
  %v414 = vpop.f32.mrf.mxu0
  %v415 = vadd.f32 %v366, %v414
  %v416 = vpop.f32.mrf.mxu0
  %v417 = vpop.f32.mrf.mxu0
  %v418 = vadd.f32 %v369, %v417
  %v419 = vpop.f32.mrf.mxu0
  %420 = vmatprep.mubr.bf16.mxu0 %v130
  %421 = vmatmul.mubr.bf16.gmra.mxu0 %v129
  %v422 = vpop.f32.mrf.mxu0
  %v423 = vadd.f32 %v374, %v422
  %v424 = vpop.f32.mrf.mxu0
  %v425 = vpop.f32.mrf.mxu0
  %v426 = vadd.f32 %v377, %v425
  %v427 = vpop.f32.mrf.mxu0
  %428 = vdwg.mxu0
  %v429 = vadd.f32 %v23, %v415
  %v430 = vadd.f32 %v24, %v418
  %v431 = vadd.f32 %v25, %v423
  %v432 = vadd.f32 %v26, %v426
  %433 = vst [vmem:[#allocation2] sm:$0xff] %v429
  %434 = vst [vmem:[#allocation2 + $0x8] sm:$0xff] %v430
  %435 = vst [vmem:[#allocation2 + $0x10] sm:$0xff] %v431
  %436 = vst [vmem:[#allocation2 + $0x18] sm:$0xff] %v432
  // Predicated region
  $region18: #{discriminator2_patchs_forward.7} parent=0 // pred_check
    %p437 = pneg %p15
  $region19: #{discriminator2_patchs_forward.7} parent=0 // pred_check_branch
    %439 = sbr.rel (%p437) target = $region21
  $region20: #{discriminator2_patchs_forward.7} parent=0 // pred_region
    %v440 = vld [vmem:[#allocation2] sm:$0xff]
    %v441 = vld [vmem:[#allocation2 + $0x8] sm:$0xff]
    %v442 = vld [vmem:[#allocation2 + $0x10] sm:$0xff]
    %v443 = vld [vmem:[#allocation2 + $0x18] sm:$0xff]
    %v444 = vld [vmem:[%s2] sm:$0x1]
    %v446 = vlaneseq
    %v447 = vshrl.u32 %v446, 7
    %v448 = vsub.s32 0, %v447
    %v449 = vrot.slane %v444, %v448
    %v451 = vadd.f32 %v440, %v449
    %v452 = vadd.f32 %v441, %v449
    %v453 = vadd.f32 %v442, %v449
    %v454 = vadd.f32 %v443, %v449
    %vm455 = vcmp.ge.f32.partialorder %v451, 0.0
    %vm456 = vcmp.ge.f32.partialorder %v452, 0.0
    %vm457 = vcmp.ge.f32.partialorder %v453, 0.0
    %vm458 = vcmp.ge.f32.partialorder %v454, 0.0
    %v459 = vmul.f32 %v451, 0.2
    %v460 = vmul.f32 %v452, 0.2
    %v461 = vmul.f32 %v453, 0.2
    %v462 = vmul.f32 %v454, 0.2
    %v463 = vsel %vm455, %v451, %v459
    %v464 = vsel %vm456, %v452, %v460
    %v465 = vsel %vm457, %v453, %v461
    %v466 = vsel %vm458, %v454, %v462
    %v467 = vpack.c.bf16 %v464, %v463
    %v468 = vpack.c.bf16 %v466, %v465
    %v471 = vunpack.c.l.b16 %v467
    %v472 = vunpack.c.h.b16 %v467
    %v473 = vunpack.c.l.b16 %v468
    %v474 = vunpack.c.h.b16 %v468
    %v475 = vpack.c.b16 %v471, %v471
    %v476 = vpack.c.b16 %v472, %v472
    %v477 = vpack.c.b16 %v473, %v473
    %v478 = vpack.c.b16 %v474, %v474
    %483 = vst [vmem:[%s3] sm:$0xf] %v475
    %484 = vst [vmem:[%s3 + $0x4] sm:$0xf] %v476
    %485 = vst [vmem:[%s3 + $0x8] sm:$0xf] %v477
    %486 = vst [vmem:[%s3 + $0xc] sm:$0xf] %v478
  $region21: #{discriminator2_patchs_forward.7} parent=0 // pred_fallthru
    _
  // Predicated region
  $region22: #{discriminator2_patchs_forward.7} parent=0 // pred_check
    _
  $region23: #{discriminator2_patchs_forward.7} parent=0 // pred_check_branch
    %488 = sbr.rel (0) target = $region25
  $region24: #{discriminator2_patchs_forward.7} parent=0 // pred_region
    _
  $region25: #{discriminator2_patchs_forward.7} parent=0 // pred_fallthru
    _
  // Predicated region
  $region26: #{discriminator2_patchs_forward.7} parent=0 // pred_check
    _
  $region27: #{discriminator2_patchs_forward.7} parent=0 // pred_check_branch
    %490 = sbr.rel (0) target = $region29
  $region28: #{discriminator2_patchs_forward.7} parent=0 // pred_region
    _
  $region29: #{discriminator2_patchs_forward.7} parent=0 // pred_fallthru
    _

</llo_original>
